<compile_context>
chip_gen: v5e
topology: v5e:2x2
jax: 0.10.0
libtpu: 0.0.40
codegen_flags: <defaults>
</compile_context>

<pallas_src>
import math
import numpy as np
import jax
import jax.numpy as jnp
from jax.experimental import pallas as pl
from jax.experimental.pallas import tpu as pltpu


# -----------------------------------------------------------------------------
# Kernel factory: one invocation computes every layer / branch / batch / head.
# -----------------------------------------------------------------------------
def _make_dac_encoder_kernel(*, NL, B, C, H, D, Lp, Ln, ser_off, pri_off):
    E = D // H
    scale = 1.0 / math.sqrt(E)
    CLs = C * Lp
    CLn = C * Ln

    def kernel(x_ref, wq_ref, bq_ref, wk_ref, bk_ref,
               mask_s_ref, pm_s_ref, pg_s_ref, f_s_ref,
               mask_p_ref, pm_p_ref, pg_p_ref, f_p_ref,
               ser_ref, pri_ref):
        # One projection matmul per Q/K for ALL layers, branches and batches.
        x = x_ref[...]                                    # (R, D)
        q = jnp.dot(x, wq_ref[...], preferred_element_type=jnp.float32) + bq_ref[...]
        k = jnp.dot(x, wk_ref[...], preferred_element_type=jnp.float32) + bk_ref[...]

        # Hoist operator loads out of the unrolled loops.
        branches = (
            (ser_off, CLs, mask_s_ref[...], pm_s_ref[...], pg_s_ref[...],
             f_s_ref[...], ser_ref),
            (pri_off, CLn, mask_p_ref[...], pm_p_ref[...], pg_p_ref[...],
             f_p_ref[...], pri_ref),
        )

        for l in range(NL):                               # static unroll
            for h in range(H):
                c0 = l * D + h * E
                for off0, CL, mask, pm, pg, f, o_ref in branches:
                    for b in range(B):
                        r0 = off0 + b * CL
                        qh = q[r0:r0 + CL, c0:c0 + E]     # (CL, E)
                        kh = k[r0:r0 + CL, c0:c0 + E]     # (CL, E)
                        # Full channel-stacked score matrix; off-channel blocks
                        # are masked to -1e30 so softmax is per-channel exact.
                        s = scale * jax.lax.dot_general(
                            qh, kh, (((1,), (1,)), ((), ())),
                            preferred_element_type=jnp.float32) + mask   # (CL, CL)
                        mx = jnp.max(s, axis=-1, keepdims=True)
                        p = jnp.exp(s - mx)
                        a = p / jnp.sum(p, axis=-1, keepdims=True)       # exact
                        # Channel mean (PM already carries 1/C) ...
                        am = jnp.dot(pm, a, preferred_element_type=jnp.float32)   # (L, CL)
                        # ... and column-upsample + flatten via one-hot operator.
                        up = jnp.dot(am, pg, preferred_element_type=jnp.float32)  # (L, M)
                        # Row-select with F: lane-dense (1, M) result, stored
                        # directly into the output block for this head.
                        row = jnp.sum(f * up, axis=0, keepdims=True)              # (1, M)
                        o_ref[l, b, h:h + 1, :] = row

    return kernel


# -----------------------------------------------------------------------------
# Precomputed one-hot operators for one branch.
#   mask : (C*L, C*L) additive, 0 on the same-channel block, -1e30 elsewhere
#   pm   : (L, C*L)   channel-mean left operator (carries the 1/C factor)
#   pg   : (C*L, M)   column upsample selector, replicated per channel
#   f    : (L, M)     row upsample selector
# mode='repeat': out[i,j] = A[i//p, j//p]   (einops repeat, series branch)
# mode='tile'  : out[i,j] = A[i% L, j% L]   (torch .repeat,  prior  branch)
# -----------------------------------------------------------------------------
def _branch_operators(L, C, win, mode):
    M = win * win
    m = np.arange(M)
    row, col = m // win, m % win
    if mode == 'repeat':
        p = win // L
        ridx, cidx = row // p, col // p
    else:
        ridx, cidx = row % L, col % L
    CL = C * L
    blk = np.arange(CL) // L
    mask = np.where(blk[:, None] == blk[None, :], 0.0, -1e30).astype(np.float32)
    pm = np.zeros((L, CL), np.float32)
    pm[np.arange(CL) % L, np.arange(CL)] = 1.0 / C
    pg = (np.arange(CL)[:, None] % L == cidx[None, :]).astype(np.float32)
    f = (np.arange(L)[:, None] == ridx[None, :]).astype(np.float32)
    return mask, pm, pg, f


# -----------------------------------------------------------------------------
# Encoder forward: ONE pallas_call, single grid point, for all layers/branches.
# -----------------------------------------------------------------------------
def encoder_forward(x_patch_size, x_patch_num, x_ori, patch_index, layer_params,
                    *, n_heads, channel, patch_sizes, win_size):
    del x_ori  # only feeds the (unused) value projection in the reference model
    patch = patch_sizes[patch_index]
    BC, Lp, D = x_patch_size.shape
    _, Ln, _ = x_patch_num.shape
    B = BC // channel
    C = channel
    H = n_heads
    E = D // H
    NL = len(layer_params)
    Wn = win_size
    M = Wn * Wn
    assert D % H == 0 and Lp * patch == Wn and Ln == patch and BC == B * C

    # ---- weights stacked along the lane (output) dim, zero-padded to 128 ----
    NLD = NL * D
    Npad = ((NLD + 127) // 128) * 128
    wq_all = jnp.concatenate([lp["wq_t"] for lp in layer_params], axis=1)   # (D, NL*D)
    wk_all = jnp.concatenate([lp["wk_t"] for lp in layer_params], axis=1)
    bq_all = jnp.concatenate([lp["bq"] for lp in layer_params]).reshape(1, NLD)
    bk_all = jnp.concatenate([lp["bk"] for lp in layer_params]).reshape(1, NLD)
    pad = Npad - NLD
    if pad:
        wq_all = jnp.pad(wq_all, ((0, 0), (0, pad)))
        wk_all = jnp.pad(wk_all, ((0, 0), (0, pad)))
        bq_all = jnp.pad(bq_all, ((0, 0), (0, pad)))
        bk_all = jnp.pad(bk_all, ((0, 0), (0, pad)))

    # ---- rows: [series batches | prior batches], channel-major inside batch ----
    x_s = x_patch_size.reshape(B * C * Lp, D)     # metadata-only reshapes
    x_p = x_patch_num.reshape(B * C * Ln, D)
    xall = jnp.concatenate([x_s, x_p], axis=0)    # (R, D)
    Rtot = B * C * (Lp + Ln)
    ser_off, pri_off = 0, B * C * Lp

    # ---- precomputed one-hot masks / upsample-flatten operators ----
    mask_s, pm_s, pg_s, f_s = (jnp.asarray(a) for a in
                               _branch_operators(Lp, C, Wn, 'repeat'))
    mask_p, pm_p, pg_p, f_p = (jnp.asarray(a) for a in
                               _branch_operators(Ln, C, Wn, 'tile'))

    kernel = _make_dac_encoder_kernel(NL=NL, B=B, C=C, H=H, D=D, Lp=Lp, Ln=Ln,
                                      ser_off=ser_off, pri_off=pri_off)

    inputs = (xall, wq_all, bq_all, wk_all, bk_all,
              mask_s, pm_s, pg_s, f_s, mask_p, pm_p, pg_p, f_p)

    # Advisory cost estimate (tiny kernel; keeps the scheduler honest).
    flops = 2 * 2 * Rtot * D * Npad
    per_lhb = 0
    for CL, L in ((C * Lp, Lp), (C * Ln, Ln)):
        per_lhb += 2 * CL * CL * E + 2 * L * CL * CL + 2 * L * CL * M + 3 * L * M
    flops += NL * H * B * per_lhb
    transcendentals = NL * H * B * ((C * Lp) ** 2 + (C * Ln) ** 2)
    bytes_accessed = sum(int(np.prod(a.shape)) * 4 for a in inputs) \
        + 2 * NL * B * H * M * 4
    cost = pl.CostEstimate(flops=flops, transcendentals=transcendentals,
                           bytes_accessed=bytes_accessed)

    full = lambda a: pl.BlockSpec(a.shape, lambda i: (0,) * a.ndim)
    out_shape = (jax.ShapeDtypeStruct((NL, B, H, M), jnp.float32),
                 jax.ShapeDtypeStruct((NL, B, H, M), jnp.float32))

    series_all, prior_all = pl.pallas_call(
        kernel,
        out_shape=out_shape,
        grid=(1,),
        in_specs=[full(a) for a in inputs],
        out_specs=(pl.BlockSpec((NL, B, H, M), lambda i: (0, 0, 0, 0)),
                   pl.BlockSpec((NL, B, H, M), lambda i: (0, 0, 0, 0))),
        compiler_params=pltpu.CompilerParams(
            dimension_semantics=("arbitrary",)),
        cost_estimate=cost,
    )(*inputs)

    # Metadata-only reshapes back to the PyTorch output layout [B, H, W, W].
    series_all = series_all.reshape(NL, B, H, Wn, Wn)
    prior_all = prior_all.reshape(NL, B, H, Wn, Wn)
    series_list = [series_all[i] for i in range(NL)]
    prior_list = [prior_all[i] for i in range(NL)]
    return series_list, prior_list


# -----------------------------------------------------------------------------
# Pure-JAX reference mirroring the PyTorch op order exactly (for validation)
# -----------------------------------------------------------------------------
def _ref_layer(x_ps, x_pn, lp, *, n_heads, channel, patch, win_size):
    prec = jax.lax.Precision.HIGHEST

    def attn(x):
        BC, L, D = x.shape
        H, E = n_heads, D // n_heads
        q = (jnp.dot(x, lp["wq_t"], precision=prec) + lp["bq"]).reshape(BC, L, H, E)
        k = (jnp.dot(x, lp["wk_t"], precision=prec) + lp["bk"]).reshape(BC, L, H, E)
        scores = jnp.einsum("blhe,bshe->bhls", q, k, precision=prec) * (1.0 / math.sqrt(E))
        return jax.nn.softmax(scores, axis=-1)

    s, pr = attn(x_ps), attn(x_pn)
    s = jnp.repeat(jnp.repeat(s, patch, axis=2), patch, axis=3)      # einops repeat
    reps = win_size // x_pn.shape[1]
    pr = jnp.tile(pr, (1, 1, reps, reps))                            # torch .repeat
    B = x_ps.shape[0] // channel
    s = s.reshape(B, channel, *s.shape[1:]).mean(axis=1)
    pr = pr.reshape(B, channel, *pr.shape[1:]).mean(axis=1)
    return s, pr


if __name__ == "__main__":
    # Small config consistent with DCdetector's Model/Encoder usage
    # (Model hardcodes n_heads=1 and e_layers=3).
    B = 2
    channel = 4
    d_model = 32
    n_heads = 1
    e_layers = 3
    win_size = 16
    patch_sizes = [4]
    patch_index = 0
    patch = patch_sizes[patch_index]
    patch_num = win_size // patch

    key = jax.random.PRNGKey(0)
    k_xps, k_xpn, k_xo, k_w = jax.random.split(key, 4)

    # Inputs (already patch-embedded, as the Encoder receives them).
    x_patch_size = jax.random.normal(k_xps, (B * channel, patch_num, d_model), jnp.float32)
    x_patch_num = jax.random.normal(k_xpn, (B * channel, patch, d_model), jnp.float32)
    x_ori = jax.random.normal(k_xo, (B, win_size, d_model), jnp.float32)

    # Deterministic per-layer parameters (PyTorch Linear: W [out,in], b [out]).
    layer_params = []
    wkeys = jax.random.split(k_w, e_layers * 4)
    for li in range(e_layers):
        wq = jax.random.normal(wkeys[4 * li + 0], (d_model, d_model), jnp.float32) / math.sqrt(d_model)
        bq = jax.random.normal(wkeys[4 * li + 1], (d_model,), jnp.float32) * 0.02
        wk = jax.random.normal(wkeys[4 * li + 2], (d_model, d_model), jnp.float32) / math.sqrt(d_model)
        bk = jax.random.normal(wkeys[4 * li + 3], (d_model,), jnp.float32) * 0.02
        layer_params.append({"wq_t": wq.T, "bq": bq, "wk_t": wk.T, "bk": bk})

    series_list, prior_list = encoder_forward(
        x_patch_size, x_patch_num, x_ori, patch_index, layer_params,
        n_heads=n_heads, channel=channel, patch_sizes=patch_sizes, win_size=win_size)
    jax.block_until_ready(series_list)
    jax.block_until_ready(prior_list)

    # Validate against a pure-JAX reference following the PyTorch op order.
    # Exact softmax divide in the kernel -> tolerance tightened to 1e-3
    # (observed error is ~1e-6; headroom only covers MXU pass-count choices).
    ok = True
    for li, lp in enumerate(layer_params):
        s_ref, p_ref = _ref_layer(x_patch_size, x_patch_num, lp,
                                  n_heads=n_heads, channel=channel,
                                  patch=patch, win_size=win_size)
        ok &= bool(jnp.allclose(series_list[li], s_ref, atol=1e-3, rtol=1e-3))
        ok &= bool(jnp.allclose(prior_list[li], p_ref, atol=1e-3, rtol=1e-3))
        ok &= series_list[li].shape == (B, n_heads, win_size, win_size)
        ok &= prior_list[li].shape == (B, n_heads, win_size, win_size)

    if not ok:
        raise SystemExit("mismatch vs reference")
    print("KERNEL_OK")
</pallas_src>

<mosaic_0001>
module attributes {stable_mosaic.version = 11 : i64} {
  func.func @kernel(%arg0: i32, %arg1: memref<64x32xf32, #tpu.memory_space<vmem>>, %arg2: memref<32x128xf32, #tpu.memory_space<vmem>>, %arg3: memref<1x128xf32, #tpu.memory_space<vmem>>, %arg4: memref<32x128xf32, #tpu.memory_space<vmem>>, %arg5: memref<1x128xf32, #tpu.memory_space<vmem>>, %arg6: memref<16x16xf32, #tpu.memory_space<vmem>>, %arg7: memref<4x16xf32, #tpu.memory_space<vmem>>, %arg8: memref<16x256xf32, #tpu.memory_space<vmem>>, %arg9: memref<4x256xf32, #tpu.memory_space<vmem>>, %arg10: memref<16x16xf32, #tpu.memory_space<vmem>>, %arg11: memref<4x16xf32, #tpu.memory_space<vmem>>, %arg12: memref<16x256xf32, #tpu.memory_space<vmem>>, %arg13: memref<4x256xf32, #tpu.memory_space<vmem>>, %arg14: memref<3x2x1x256xf32, #tpu.memory_space<vmem>>, %arg15: memref<3x2x1x256xf32, #tpu.memory_space<vmem>>) attributes {dimension_semantics = [#tpu.dimension_semantics<arbitrary>], iteration_bounds = array<i64: 1>, scalar_prefetch = 0 : i64, scratch_operands = 0 : i64, tpu.core_type = #tpu.core_type<tc>, window_params = [{pipeline_mode = #tpu.pipeline_mode<synchronous>, transform_indices = @transform_0, window_bounds = array<i64: 64, 32>}, {pipeline_mode = #tpu.pipeline_mode<synchronous>, transform_indices = @transform_1, window_bounds = array<i64: 32, 128>}, {pipeline_mode = #tpu.pipeline_mode<synchronous>, transform_indices = @transform_2, window_bounds = array<i64: 1, 128>}, {pipeline_mode = #tpu.pipeline_mode<synchronous>, transform_indices = @transform_3, window_bounds = array<i64: 32, 128>}, {pipeline_mode = #tpu.pipeline_mode<synchronous>, transform_indices = @transform_4, window_bounds = array<i64: 1, 128>}, {pipeline_mode = #tpu.pipeline_mode<synchronous>, transform_indices = @transform_5, window_bounds = array<i64: 16, 16>}, {pipeline_mode = #tpu.pipeline_mode<synchronous>, transform_indices = @transform_6, window_bounds = array<i64: 4, 16>}, {pipeline_mode = #tpu.pipeline_mode<synchronous>, transform_indices = @transform_7, window_bounds = array<i64: 16, 256>}, {pipeline_mode = #tpu.pipeline_mode<synchronous>, transform_indices = @transform_8, window_bounds = array<i64: 4, 256>}, {pipeline_mode = #tpu.pipeline_mode<synchronous>, transform_indices = @transform_9, window_bounds = array<i64: 16, 16>}, {pipeline_mode = #tpu.pipeline_mode<synchronous>, transform_indices = @transform_10, window_bounds = array<i64: 4, 16>}, {pipeline_mode = #tpu.pipeline_mode<synchronous>, transform_indices = @transform_11, window_bounds = array<i64: 16, 256>}, {pipeline_mode = #tpu.pipeline_mode<synchronous>, transform_indices = @transform_12, window_bounds = array<i64: 4, 256>}, {pipeline_mode = #tpu.pipeline_mode<synchronous>, transform_indices = @transform_13, window_bounds = array<i64: 3, 2, 1, 256>}, {pipeline_mode = #tpu.pipeline_mode<synchronous>, transform_indices = @transform_14, window_bounds = array<i64: 3, 2, 1, 256>}]} {
    %c0 = arith.constant 0 : index
    %c0_0 = arith.constant 0 : index
    %0 = vector.load %arg1[%c0, %c0_0] : memref<64x32xf32, #tpu.memory_space<vmem>>, vector<64x32xf32>
    %c0_1 = arith.constant 0 : index
    %c0_2 = arith.constant 0 : index
    %1 = vector.load %arg2[%c0_1, %c0_2] : memref<32x128xf32, #tpu.memory_space<vmem>>, vector<32x128xf32>
    %cst = arith.constant dense<0.000000e+00> : vector<64x128xf32>
    %2 = tpu.matmul %0, %1, %cst {dimension_numbers = #tpu.dot_dimension_numbers<[1], [0], [0], [1], [0, 0, 1, 1], [], []>} : vector<64x32xf32>, vector<32x128xf32>, vector<64x128xf32> -> vector<64x128xf32>
    %c0_3 = arith.constant 0 : index
    %c0_4 = arith.constant 0 : index
    %3 = vector.load %arg3[%c0_3, %c0_4] : memref<1x128xf32, #tpu.memory_space<vmem>>, vector<1x128xf32>
    %4 = vector.broadcast %3 : vector<1x128xf32> to vector<64x128xf32>
    %5 = arith.addf %2, %4 : vector<64x128xf32>
    %c0_5 = arith.constant 0 : index
    %c0_6 = arith.constant 0 : index
    %6 = vector.load %arg4[%c0_5, %c0_6] : memref<32x128xf32, #tpu.memory_space<vmem>>, vector<32x128xf32>
    %cst_7 = arith.constant dense<0.000000e+00> : vector<64x128xf32>
    %7 = tpu.matmul %0, %6, %cst_7 {dimension_numbers = #tpu.dot_dimension_numbers<[1], [0], [0], [1], [0, 0, 1, 1], [], []>} : vector<64x32xf32>, vector<32x128xf32>, vector<64x128xf32> -> vector<64x128xf32>
    %c0_8 = arith.constant 0 : index
    %c0_9 = arith.constant 0 : index
    %8 = vector.load %arg5[%c0_8, %c0_9] : memref<1x128xf32, #tpu.memory_space<vmem>>, vector<1x128xf32>
    %9 = vector.broadcast %8 : vector<1x128xf32> to vector<64x128xf32>
    %10 = arith.addf %7, %9 : vector<64x128xf32>
    %c0_10 = arith.constant 0 : index
    %c0_11 = arith.constant 0 : index
    %11 = vector.load %arg6[%c0_10, %c0_11] : memref<16x16xf32, #tpu.memory_space<vmem>>, vector<16x16xf32>
    %c0_12 = arith.constant 0 : index
    %c0_13 = arith.constant 0 : index
    %12 = vector.load %arg7[%c0_12, %c0_13] : memref<4x16xf32, #tpu.memory_space<vmem>>, vector<4x16xf32>
    %c0_14 = arith.constant 0 : index
    %c0_15 = arith.constant 0 : index
    %13 = vector.load %arg8[%c0_14, %c0_15] : memref<16x256xf32, #tpu.memory_space<vmem>>, vector<16x256xf32>
    %c0_16 = arith.constant 0 : index
    %c0_17 = arith.constant 0 : index
    %14 = vector.load %arg9[%c0_16, %c0_17] : memref<4x256xf32, #tpu.memory_space<vmem>>, vector<4x256xf32>
    %c0_18 = arith.constant 0 : index
    %c0_19 = arith.constant 0 : index
    %15 = vector.load %arg10[%c0_18, %c0_19] : memref<16x16xf32, #tpu.memory_space<vmem>>, vector<16x16xf32>
    %c0_20 = arith.constant 0 : index
    %c0_21 = arith.constant 0 : index
    %16 = vector.load %arg11[%c0_20, %c0_21] : memref<4x16xf32, #tpu.memory_space<vmem>>, vector<4x16xf32>
    %c0_22 = arith.constant 0 : index
    %c0_23 = arith.constant 0 : index
    %17 = vector.load %arg12[%c0_22, %c0_23] : memref<16x256xf32, #tpu.memory_space<vmem>>, vector<16x256xf32>
    %c0_24 = arith.constant 0 : index
    %c0_25 = arith.constant 0 : index
    %18 = vector.load %arg13[%c0_24, %c0_25] : memref<4x256xf32, #tpu.memory_space<vmem>>, vector<4x256xf32>
    %19 = vector.extract_strided_slice %5 {offsets = [0, 0], sizes = [16, 32], strides = [1, 1]} : vector<64x128xf32> to vector<16x32xf32>
    %20 = vector.extract_strided_slice %10 {offsets = [0, 0], sizes = [16, 32], strides = [1, 1]} : vector<64x128xf32> to vector<16x32xf32>
    %cst_26 = arith.constant dense<0.000000e+00> : vector<16x16xf32>
    %21 = tpu.matmul %19, %20, %cst_26 {dimension_numbers = #tpu.dot_dimension_numbers<[1], [1], [0], [0], [0, 0, 1, 0], [], []>} : vector<16x32xf32>, vector<16x32xf32>, vector<16x16xf32> -> vector<16x16xf32>
    %cst_27 = arith.constant 0.176776692 : f32
    %22 = vector.broadcast %cst_27 : f32 to vector<16x16xf32>
    %23 = arith.mulf %22, %21 : vector<16x16xf32>
    %24 = arith.addf %23, %11 : vector<16x16xf32>
    %cst_28 = arith.constant dense<0xFF800000> : vector<16xf32>
    %25 = vector.multi_reduction <maximumf>, %24, %cst_28 [1] : vector<16x16xf32> to vector<16xf32>
    %26 = vector.shape_cast %25 : vector<16xf32> to vector<16x1xf32>
    %27 = vector.broadcast %26 : vector<16x1xf32> to vector<16x16xf32>
    %28 = arith.subf %24, %27 : vector<16x16xf32>
    %29 = math.exp %28 : vector<16x16xf32>
    %cst_29 = arith.constant dense<0.000000e+00> : vector<16xf32>
    %30 = vector.multi_reduction <add>, %29, %cst_29 [1] : vector<16x16xf32> to vector<16xf32>
    %31 = vector.shape_cast %30 : vector<16xf32> to vector<16x1xf32>
    %32 = vector.broadcast %31 : vector<16x1xf32> to vector<16x16xf32>
    %33 = arith.divf %29, %32 : vector<16x16xf32>
    %cst_30 = arith.constant dense<0.000000e+00> : vector<4x16xf32>
    %34 = tpu.matmul %12, %33, %cst_30 {dimension_numbers = #tpu.dot_dimension_numbers<[1], [0], [0], [1], [0, 0, 1, 1], [], []>} : vector<4x16xf32>, vector<16x16xf32>, vector<4x16xf32> -> vector<4x16xf32>
    %cst_31 = arith.constant dense<0.000000e+00> : vector<4x256xf32>
    %35 = tpu.matmul %34, %13, %cst_31 {dimension_numbers = #tpu.dot_dimension_numbers<[1], [0], [0], [1], [0, 0, 1, 1], [], []>} : vector<4x16xf32>, vector<16x256xf32>, vector<4x256xf32> -> vector<4x256xf32>
    %36 = arith.mulf %14, %35 : vector<4x256xf32>
    %cst_32 = arith.constant dense<0.000000e+00> : vector<256xf32>
    %37 = vector.multi_reduction <add>, %36, %cst_32 [0] : vector<4x256xf32> to vector<256xf32>
    %38 = vector.shape_cast %37 : vector<256xf32> to vector<1x256xf32>
    %c0_33 = arith.constant 0 : index
    %c0_34 = arith.constant 0 : index
    %c0_35 = arith.constant 0 : index
    %c0_36 = arith.constant 0 : index
    %39 = vector.load %arg14[%c0_33, %c0_34, %c0_35, %c0_36] : memref<3x2x1x256xf32, #tpu.memory_space<vmem>>, vector<1x1x1x256xf32>
    %40 = vector.shape_cast %39 : vector<1x1x1x256xf32> to vector<1x256xf32>
    %41 = vector.shape_cast %38 : vector<1x256xf32> to vector<1x1x1x256xf32>
    tpu.vector_store %arg14[%c0_33, %c0_34, %c0_35, %c0_36], %41 {strides = array<i32>} : memref<3x2x1x256xf32, #tpu.memory_space<vmem>>, vector<1x1x1x256xf32>,
    %42 = vector.extract_strided_slice %5 {offsets = [16, 0], sizes = [16, 32], strides = [1, 1]} : vector<64x128xf32> to vector<16x32xf32>
    %43 = vector.extract_strided_slice %10 {offsets = [16, 0], sizes = [16, 32], strides = [1, 1]} : vector<64x128xf32> to vector<16x32xf32>
    %cst_37 = arith.constant dense<0.000000e+00> : vector<16x16xf32>
    %44 = tpu.matmul %42, %43, %cst_37 {dimension_numbers = #tpu.dot_dimension_numbers<[1], [1], [0], [0], [0, 0, 1, 0], [], []>} : vector<16x32xf32>, vector<16x32xf32>, vector<16x16xf32> -> vector<16x16xf32>
    %cst_38 = arith.constant 0.176776692 : f32
    %45 = vector.broadcast %cst_38 : f32 to vector<16x16xf32>
    %46 = arith.mulf %45, %44 : vector<16x16xf32>
    %47 = arith.addf %46, %11 : vector<16x16xf32>
    %cst_39 = arith.constant dense<0xFF800000> : vector<16xf32>
    %48 = vector.multi_reduction <maximumf>, %47, %cst_39 [1] : vector<16x16xf32> to vector<16xf32>
    %49 = vector.shape_cast %48 : vector<16xf32> to vector<16x1xf32>
    %50 = vector.broadcast %49 : vector<16x1xf32> to vector<16x16xf32>
    %51 = arith.subf %47, %50 : vector<16x16xf32>
    %52 = math.exp %51 : vector<16x16xf32>
    %cst_40 = arith.constant dense<0.000000e+00> : vector<16xf32>
    %53 = vector.multi_reduction <add>, %52, %cst_40 [1] : vector<16x16xf32> to vector<16xf32>
    %54 = vector.shape_cast %53 : vector<16xf32> to vector<16x1xf32>
    %55 = vector.broadcast %54 : vector<16x1xf32> to vector<16x16xf32>
    %56 = arith.divf %52, %55 : vector<16x16xf32>
    %cst_41 = arith.constant dense<0.000000e+00> : vector<4x16xf32>
    %57 = tpu.matmul %12, %56, %cst_41 {dimension_numbers = #tpu.dot_dimension_numbers<[1], [0], [0], [1], [0, 0, 1, 1], [], []>} : vector<4x16xf32>, vector<16x16xf32>, vector<4x16xf32> -> vector<4x16xf32>
    %cst_42 = arith.constant dense<0.000000e+00> : vector<4x256xf32>
    %58 = tpu.matmul %57, %13, %cst_42 {dimension_numbers = #tpu.dot_dimension_numbers<[1], [0], [0], [1], [0, 0, 1, 1], [], []>} : vector<4x16xf32>, vector<16x256xf32>, vector<4x256xf32> -> vector<4x256xf32>
    %59 = arith.mulf %14, %58 : vector<4x256xf32>
    %cst_43 = arith.constant dense<0.000000e+00> : vector<256xf32>
    %60 = vector.multi_reduction <add>, %59, %cst_43 [0] : vector<4x256xf32> to vector<256xf32>
    %61 = vector.shape_cast %60 : vector<256xf32> to vector<1x256xf32>
    %c0_44 = arith.constant 0 : index
    %c1 = arith.constant 1 : index
    %c0_45 = arith.constant 0 : index
    %c0_46 = arith.constant 0 : index
    %62 = vector.load %arg14[%c0_44, %c1, %c0_45, %c0_46] : memref<3x2x1x256xf32, #tpu.memory_space<vmem>>, vector<1x1x1x256xf32>
    %63 = vector.shape_cast %62 : vector<1x1x1x256xf32> to vector<1x256xf32>
    %64 = vector.shape_cast %61 : vector<1x256xf32> to vector<1x1x1x256xf32>
    tpu.vector_store %arg14[%c0_44, %c1, %c0_45, %c0_46], %64 {strides = array<i32>} : memref<3x2x1x256xf32, #tpu.memory_space<vmem>>, vector<1x1x1x256xf32>,
    %65 = vector.extract_strided_slice %5 {offsets = [32, 0], sizes = [16, 32], strides = [1, 1]} : vector<64x128xf32> to vector<16x32xf32>
    %66 = vector.extract_strided_slice %10 {offsets = [32, 0], sizes = [16, 32], strides = [1, 1]} : vector<64x128xf32> to vector<16x32xf32>
    %cst_47 = arith.constant dense<0.000000e+00> : vector<16x16xf32>
    %67 = tpu.matmul %65, %66, %cst_47 {dimension_numbers = #tpu.dot_dimension_numbers<[1], [1], [0], [0], [0, 0, 1, 0], [], []>} : vector<16x32xf32>, vector<16x32xf32>, vector<16x16xf32> -> vector<16x16xf32>
    %cst_48 = arith.constant 0.176776692 : f32
    %68 = vector.broadcast %cst_48 : f32 to vector<16x16xf32>
    %69 = arith.mulf %68, %67 : vector<16x16xf32>
    %70 = arith.addf %69, %15 : vector<16x16xf32>
    %cst_49 = arith.constant dense<0xFF800000> : vector<16xf32>
    %71 = vector.multi_reduction <maximumf>, %70, %cst_49 [1] : vector<16x16xf32> to vector<16xf32>
    %72 = vector.shape_cast %71 : vector<16xf32> to vector<16x1xf32>
    %73 = vector.broadcast %72 : vector<16x1xf32> to vector<16x16xf32>
    %74 = arith.subf %70, %73 : vector<16x16xf32>
    %75 = math.exp %74 : vector<16x16xf32>
    %cst_50 = arith.constant dense<0.000000e+00> : vector<16xf32>
    %76 = vector.multi_reduction <add>, %75, %cst_50 [1] : vector<16x16xf32> to vector<16xf32>
    %77 = vector.shape_cast %76 : vector<16xf32> to vector<16x1xf32>
    %78 = vector.broadcast %77 : vector<16x1xf32> to vector<16x16xf32>
    %79 = arith.divf %75, %78 : vector<16x16xf32>
    %cst_51 = arith.constant dense<0.000000e+00> : vector<4x16xf32>
    %80 = tpu.matmul %16, %79, %cst_51 {dimension_numbers = #tpu.dot_dimension_numbers<[1], [0], [0], [1], [0, 0, 1, 1], [], []>} : vector<4x16xf32>, vector<16x16xf32>, vector<4x16xf32> -> vector<4x16xf32>
    %cst_52 = arith.constant dense<0.000000e+00> : vector<4x256xf32>
    %81 = tpu.matmul %80, %17, %cst_52 {dimension_numbers = #tpu.dot_dimension_numbers<[1], [0], [0], [1], [0, 0, 1, 1], [], []>} : vector<4x16xf32>, vector<16x256xf32>, vector<4x256xf32> -> vector<4x256xf32>
    %82 = arith.mulf %18, %81 : vector<4x256xf32>
    %cst_53 = arith.constant dense<0.000000e+00> : vector<256xf32>
    %83 = vector.multi_reduction <add>, %82, %cst_53 [0] : vector<4x256xf32> to vector<256xf32>
    %84 = vector.shape_cast %83 : vector<256xf32> to vector<1x256xf32>
    %c0_54 = arith.constant 0 : index
    %c0_55 = arith.constant 0 : index
    %c0_56 = arith.constant 0 : index
    %c0_57 = arith.constant 0 : index
    %85 = vector.load %arg15[%c0_54, %c0_55, %c0_56, %c0_57] : memref<3x2x1x256xf32, #tpu.memory_space<vmem>>, vector<1x1x1x256xf32>
    %86 = vector.shape_cast %85 : vector<1x1x1x256xf32> to vector<1x256xf32>
    %87 = vector.shape_cast %84 : vector<1x256xf32> to vector<1x1x1x256xf32>
    tpu.vector_store %arg15[%c0_54, %c0_55, %c0_56, %c0_57], %87 {strides = array<i32>} : memref<3x2x1x256xf32, #tpu.memory_space<vmem>>, vector<1x1x1x256xf32>,
    %88 = vector.extract_strided_slice %5 {offsets = [48, 0], sizes = [16, 32], strides = [1, 1]} : vector<64x128xf32> to vector<16x32xf32>
    %89 = vector.extract_strided_slice %10 {offsets = [48, 0], sizes = [16, 32], strides = [1, 1]} : vector<64x128xf32> to vector<16x32xf32>
    %cst_58 = arith.constant dense<0.000000e+00> : vector<16x16xf32>
    %90 = tpu.matmul %88, %89, %cst_58 {dimension_numbers = #tpu.dot_dimension_numbers<[1], [1], [0], [0], [0, 0, 1, 0], [], []>} : vector<16x32xf32>, vector<16x32xf32>, vector<16x16xf32> -> vector<16x16xf32>
    %cst_59 = arith.constant 0.176776692 : f32
    %91 = vector.broadcast %cst_59 : f32 to vector<16x16xf32>
    %92 = arith.mulf %91, %90 : vector<16x16xf32>
    %93 = arith.addf %92, %15 : vector<16x16xf32>
    %cst_60 = arith.constant dense<0xFF800000> : vector<16xf32>
    %94 = vector.multi_reduction <maximumf>, %93, %cst_60 [1] : vector<16x16xf32> to vector<16xf32>
    %95 = vector.shape_cast %94 : vector<16xf32> to vector<16x1xf32>
    %96 = vector.broadcast %95 : vector<16x1xf32> to vector<16x16xf32>
    %97 = arith.subf %93, %96 : vector<16x16xf32>
    %98 = math.exp %97 : vector<16x16xf32>
    %cst_61 = arith.constant dense<0.000000e+00> : vector<16xf32>
    %99 = vector.multi_reduction <add>, %98, %cst_61 [1] : vector<16x16xf32> to vector<16xf32>
    %100 = vector.shape_cast %99 : vector<16xf32> to vector<16x1xf32>
    %101 = vector.broadcast %100 : vector<16x1xf32> to vector<16x16xf32>
    %102 = arith.divf %98, %101 : vector<16x16xf32>
    %cst_62 = arith.constant dense<0.000000e+00> : vector<4x16xf32>
    %103 = tpu.matmul %16, %102, %cst_62 {dimension_numbers = #tpu.dot_dimension_numbers<[1], [0], [0], [1], [0, 0, 1, 1], [], []>} : vector<4x16xf32>, vector<16x16xf32>, vector<4x16xf32> -> vector<4x16xf32>
    %cst_63 = arith.constant dense<0.000000e+00> : vector<4x256xf32>
    %104 = tpu.matmul %103, %17, %cst_63 {dimension_numbers = #tpu.dot_dimension_numbers<[1], [0], [0], [1], [0, 0, 1, 1], [], []>} : vector<4x16xf32>, vector<16x256xf32>, vector<4x256xf32> -> vector<4x256xf32>
    %105 = arith.mulf %18, %104 : vector<4x256xf32>
    %cst_64 = arith.constant dense<0.000000e+00> : vector<256xf32>
    %106 = vector.multi_reduction <add>, %105, %cst_64 [0] : vector<4x256xf32> to vector<256xf32>
    %107 = vector.shape_cast %106 : vector<256xf32> to vector<1x256xf32>
    %c0_65 = arith.constant 0 : index
    %c1_66 = arith.constant 1 : index
    %c0_67 = arith.constant 0 : index
    %c0_68 = arith.constant 0 : index
    %108 = vector.load %arg15[%c0_65, %c1_66, %c0_67, %c0_68] : memref<3x2x1x256xf32, #tpu.memory_space<vmem>>, vector<1x1x1x256xf32>
    %109 = vector.shape_cast %108 : vector<1x1x1x256xf32> to vector<1x256xf32>
    %110 = vector.shape_cast %107 : vector<1x256xf32> to vector<1x1x1x256xf32>
    tpu.vector_store %arg15[%c0_65, %c1_66, %c0_67, %c0_68], %110 {strides = array<i32>} : memref<3x2x1x256xf32, #tpu.memory_space<vmem>>, vector<1x1x1x256xf32>,
    %111 = vector.extract_strided_slice %5 {offsets = [0, 32], sizes = [16, 32], strides = [1, 1]} : vector<64x128xf32> to vector<16x32xf32>
    %112 = vector.extract_strided_slice %10 {offsets = [0, 32], sizes = [16, 32], strides = [1, 1]} : vector<64x128xf32> to vector<16x32xf32>
    %cst_69 = arith.constant dense<0.000000e+00> : vector<16x16xf32>
    %113 = tpu.matmul %111, %112, %cst_69 {dimension_numbers = #tpu.dot_dimension_numbers<[1], [1], [0], [0], [0, 0, 1, 0], [], []>} : vector<16x32xf32>, vector<16x32xf32>, vector<16x16xf32> -> vector<16x16xf32>
    %cst_70 = arith.constant 0.176776692 : f32
    %114 = vector.broadcast %cst_70 : f32 to vector<16x16xf32>
    %115 = arith.mulf %114, %113 : vector<16x16xf32>
    %116 = arith.addf %115, %11 : vector<16x16xf32>
    %cst_71 = arith.constant dense<0xFF800000> : vector<16xf32>
    %117 = vector.multi_reduction <maximumf>, %116, %cst_71 [1] : vector<16x16xf32> to vector<16xf32>
    %118 = vector.shape_cast %117 : vector<16xf32> to vector<16x1xf32>
    %119 = vector.broadcast %118 : vector<16x1xf32> to vector<16x16xf32>
    %120 = arith.subf %116, %119 : vector<16x16xf32>
    %121 = math.exp %120 : vector<16x16xf32>
    %cst_72 = arith.constant dense<0.000000e+00> : vector<16xf32>
    %122 = vector.multi_reduction <add>, %121, %cst_72 [1] : vector<16x16xf32> to vector<16xf32>
    %123 = vector.shape_cast %122 : vector<16xf32> to vector<16x1xf32>
    %124 = vector.broadcast %123 : vector<16x1xf32> to vector<16x16xf32>
    %125 = arith.divf %121, %124 : vector<16x16xf32>
    %cst_73 = arith.constant dense<0.000000e+00> : vector<4x16xf32>
    %126 = tpu.matmul %12, %125, %cst_73 {dimension_numbers = #tpu.dot_dimension_numbers<[1], [0], [0], [1], [0, 0, 1, 1], [], []>} : vector<4x16xf32>, vector<16x16xf32>, vector<4x16xf32> -> vector<4x16xf32>
    %cst_74 = arith.constant dense<0.000000e+00> : vector<4x256xf32>
    %127 = tpu.matmul %126, %13, %cst_74 {dimension_numbers = #tpu.dot_dimension_numbers<[1], [0], [0], [1], [0, 0, 1, 1], [], []>} : vector<4x16xf32>, vector<16x256xf32>, vector<4x256xf32> -> vector<4x256xf32>
    %128 = arith.mulf %14, %127 : vector<4x256xf32>
    %cst_75 = arith.constant dense<0.000000e+00> : vector<256xf32>
    %129 = vector.multi_reduction <add>, %128, %cst_75 [0] : vector<4x256xf32> to vector<256xf32>
    %130 = vector.shape_cast %129 : vector<256xf32> to vector<1x256xf32>
    %c1_76 = arith.constant 1 : index
    %c0_77 = arith.constant 0 : index
    %c0_78 = arith.constant 0 : index
    %c0_79 = arith.constant 0 : index
    %131 = vector.load %arg14[%c1_76, %c0_77, %c0_78, %c0_79] : memref<3x2x1x256xf32, #tpu.memory_space<vmem>>, vector<1x1x1x256xf32>
    %132 = vector.shape_cast %131 : vector<1x1x1x256xf32> to vector<1x256xf32>
    %133 = vector.shape_cast %130 : vector<1x256xf32> to vector<1x1x1x256xf32>
    tpu.vector_store %arg14[%c1_76, %c0_77, %c0_78, %c0_79], %133 {strides = array<i32>} : memref<3x2x1x256xf32, #tpu.memory_space<vmem>>, vector<1x1x1x256xf32>,
    %134 = vector.extract_strided_slice %5 {offsets = [16, 32], sizes = [16, 32], strides = [1, 1]} : vector<64x128xf32> to vector<16x32xf32>
    %135 = vector.extract_strided_slice %10 {offsets = [16, 32], sizes = [16, 32], strides = [1, 1]} : vector<64x128xf32> to vector<16x32xf32>
    %cst_80 = arith.constant dense<0.000000e+00> : vector<16x16xf32>
    %136 = tpu.matmul %134, %135, %cst_80 {dimension_numbers = #tpu.dot_dimension_numbers<[1], [1], [0], [0], [0, 0, 1, 0], [], []>} : vector<16x32xf32>, vector<16x32xf32>, vector<16x16xf32> -> vector<16x16xf32>
    %cst_81 = arith.constant 0.176776692 : f32
    %137 = vector.broadcast %cst_81 : f32 to vector<16x16xf32>
    %138 = arith.mulf %137, %136 : vector<16x16xf32>
    %139 = arith.addf %138, %11 : vector<16x16xf32>
    %cst_82 = arith.constant dense<0xFF800000> : vector<16xf32>
    %140 = vector.multi_reduction <maximumf>, %139, %cst_82 [1] : vector<16x16xf32> to vector<16xf32>
    %141 = vector.shape_cast %140 : vector<16xf32> to vector<16x1xf32>
    %142 = vector.broadcast %141 : vector<16x1xf32> to vector<16x16xf32>
    %143 = arith.subf %139, %142 : vector<16x16xf32>
    %144 = math.exp %143 : vector<16x16xf32>
    %cst_83 = arith.constant dense<0.000000e+00> : vector<16xf32>
    %145 = vector.multi_reduction <add>, %144, %cst_83 [1] : vector<16x16xf32> to vector<16xf32>
    %146 = vector.shape_cast %145 : vector<16xf32> to vector<16x1xf32>
    %147 = vector.broadcast %146 : vector<16x1xf32> to vector<16x16xf32>
    %148 = arith.divf %144, %147 : vector<16x16xf32>
    %cst_84 = arith.constant dense<0.000000e+00> : vector<4x16xf32>
    %149 = tpu.matmul %12, %148, %cst_84 {dimension_numbers = #tpu.dot_dimension_numbers<[1], [0], [0], [1], [0, 0, 1, 1], [], []>} : vector<4x16xf32>, vector<16x16xf32>, vector<4x16xf32> -> vector<4x16xf32>
    %cst_85 = arith.constant dense<0.000000e+00> : vector<4x256xf32>
    %150 = tpu.matmul %149, %13, %cst_85 {dimension_numbers = #tpu.dot_dimension_numbers<[1], [0], [0], [1], [0, 0, 1, 1], [], []>} : vector<4x16xf32>, vector<16x256xf32>, vector<4x256xf32> -> vector<4x256xf32>
    %151 = arith.mulf %14, %150 : vector<4x256xf32>
    %cst_86 = arith.constant dense<0.000000e+00> : vector<256xf32>
    %152 = vector.multi_reduction <add>, %151, %cst_86 [0] : vector<4x256xf32> to vector<256xf32>
    %153 = vector.shape_cast %152 : vector<256xf32> to vector<1x256xf32>
    %c1_87 = arith.constant 1 : index
    %c1_88 = arith.constant 1 : index
    %c0_89 = arith.constant 0 : index
    %c0_90 = arith.constant 0 : index
    %154 = vector.load %arg14[%c1_87, %c1_88, %c0_89, %c0_90] : memref<3x2x1x256xf32, #tpu.memory_space<vmem>>, vector<1x1x1x256xf32>
    %155 = vector.shape_cast %154 : vector<1x1x1x256xf32> to vector<1x256xf32>
    %156 = vector.shape_cast %153 : vector<1x256xf32> to vector<1x1x1x256xf32>
    tpu.vector_store %arg14[%c1_87, %c1_88, %c0_89, %c0_90], %156 {strides = array<i32>} : memref<3x2x1x256xf32, #tpu.memory_space<vmem>>, vector<1x1x1x256xf32>,
    %157 = vector.extract_strided_slice %5 {offsets = [32, 32], sizes = [16, 32], strides = [1, 1]} : vector<64x128xf32> to vector<16x32xf32>
    %158 = vector.extract_strided_slice %10 {offsets = [32, 32], sizes = [16, 32], strides = [1, 1]} : vector<64x128xf32> to vector<16x32xf32>
    %cst_91 = arith.constant dense<0.000000e+00> : vector<16x16xf32>
    %159 = tpu.matmul %157, %158, %cst_91 {dimension_numbers = #tpu.dot_dimension_numbers<[1], [1], [0], [0], [0, 0, 1, 0], [], []>} : vector<16x32xf32>, vector<16x32xf32>, vector<16x16xf32> -> vector<16x16xf32>
    %cst_92 = arith.constant 0.176776692 : f32
    %160 = vector.broadcast %cst_92 : f32 to vector<16x16xf32>
    %161 = arith.mulf %160, %159 : vector<16x16xf32>
    %162 = arith.addf %161, %15 : vector<16x16xf32>
    %cst_93 = arith.constant dense<0xFF800000> : vector<16xf32>
    %163 = vector.multi_reduction <maximumf>, %162, %cst_93 [1] : vector<16x16xf32> to vector<16xf32>
    %164 = vector.shape_cast %163 : vector<16xf32> to vector<16x1xf32>
    %165 = vector.broadcast %164 : vector<16x1xf32> to vector<16x16xf32>
    %166 = arith.subf %162, %165 : vector<16x16xf32>
    %167 = math.exp %166 : vector<16x16xf32>
    %cst_94 = arith.constant dense<0.000000e+00> : vector<16xf32>
    %168 = vector.multi_reduction <add>, %167, %cst_94 [1] : vector<16x16xf32> to vector<16xf32>
    %169 = vector.shape_cast %168 : vector<16xf32> to vector<16x1xf32>
    %170 = vector.broadcast %169 : vector<16x1xf32> to vector<16x16xf32>
    %171 = arith.divf %167, %170 : vector<16x16xf32>
    %cst_95 = arith.constant dense<0.000000e+00> : vector<4x16xf32>
    %172 = tpu.matmul %16, %171, %cst_95 {dimension_numbers = #tpu.dot_dimension_numbers<[1], [0], [0], [1], [0, 0, 1, 1], [], []>} : vector<4x16xf32>, vector<16x16xf32>, vector<4x16xf32> -> vector<4x16xf32>
    %cst_96 = arith.constant dense<0.000000e+00> : vector<4x256xf32>
    %173 = tpu.matmul %172, %17, %cst_96 {dimension_numbers = #tpu.dot_dimension_numbers<[1], [0], [0], [1], [0, 0, 1, 1], [], []>} : vector<4x16xf32>, vector<16x256xf32>, vector<4x256xf32> -> vector<4x256xf32>
    %174 = arith.mulf %18, %173 : vector<4x256xf32>
    %cst_97 = arith.constant dense<0.000000e+00> : vector<256xf32>
    %175 = vector.multi_reduction <add>, %174, %cst_97 [0] : vector<4x256xf32> to vector<256xf32>
    %176 = vector.shape_cast %175 : vector<256xf32> to vector<1x256xf32>
    %c1_98 = arith.constant 1 : index
    %c0_99 = arith.constant 0 : index
    %c0_100 = arith.constant 0 : index
    %c0_101 = arith.constant 0 : index
    %177 = vector.load %arg15[%c1_98, %c0_99, %c0_100, %c0_101] : memref<3x2x1x256xf32, #tpu.memory_space<vmem>>, vector<1x1x1x256xf32>
    %178 = vector.shape_cast %177 : vector<1x1x1x256xf32> to vector<1x256xf32>
    %179 = vector.shape_cast %176 : vector<1x256xf32> to vector<1x1x1x256xf32>
    tpu.vector_store %arg15[%c1_98, %c0_99, %c0_100, %c0_101], %179 {strides = array<i32>} : memref<3x2x1x256xf32, #tpu.memory_space<vmem>>, vector<1x1x1x256xf32>,
    %180 = vector.extract_strided_slice %5 {offsets = [48, 32], sizes = [16, 32], strides = [1, 1]} : vector<64x128xf32> to vector<16x32xf32>
    %181 = vector.extract_strided_slice %10 {offsets = [48, 32], sizes = [16, 32], strides = [1, 1]} : vector<64x128xf32> to vector<16x32xf32>
    %cst_102 = arith.constant dense<0.000000e+00> : vector<16x16xf32>
    %182 = tpu.matmul %180, %181, %cst_102 {dimension_numbers = #tpu.dot_dimension_numbers<[1], [1], [0], [0], [0, 0, 1, 0], [], []>} : vector<16x32xf32>, vector<16x32xf32>, vector<16x16xf32> -> vector<16x16xf32>
    %cst_103 = arith.constant 0.176776692 : f32
    %183 = vector.broadcast %cst_103 : f32 to vector<16x16xf32>
    %184 = arith.mulf %183, %182 : vector<16x16xf32>
    %185 = arith.addf %184, %15 : vector<16x16xf32>
    %cst_104 = arith.constant dense<0xFF800000> : vector<16xf32>
    %186 = vector.multi_reduction <maximumf>, %185, %cst_104 [1] : vector<16x16xf32> to vector<16xf32>
    %187 = vector.shape_cast %186 : vector<16xf32> to vector<16x1xf32>
    %188 = vector.broadcast %187 : vector<16x1xf32> to vector<16x16xf32>
    %189 = arith.subf %185, %188 : vector<16x16xf32>
    %190 = math.exp %189 : vector<16x16xf32>
    %cst_105 = arith.constant dense<0.000000e+00> : vector<16xf32>
    %191 = vector.multi_reduction <add>, %190, %cst_105 [1] : vector<16x16xf32> to vector<16xf32>
    %192 = vector.shape_cast %191 : vector<16xf32> to vector<16x1xf32>
    %193 = vector.broadcast %192 : vector<16x1xf32> to vector<16x16xf32>
    %194 = arith.divf %190, %193 : vector<16x16xf32>
    %cst_106 = arith.constant dense<0.000000e+00> : vector<4x16xf32>
    %195 = tpu.matmul %16, %194, %cst_106 {dimension_numbers = #tpu.dot_dimension_numbers<[1], [0], [0], [1], [0, 0, 1, 1], [], []>} : vector<4x16xf32>, vector<16x16xf32>, vector<4x16xf32> -> vector<4x16xf32>
    %cst_107 = arith.constant dense<0.000000e+00> : vector<4x256xf32>
    %196 = tpu.matmul %195, %17, %cst_107 {dimension_numbers = #tpu.dot_dimension_numbers<[1], [0], [0], [1], [0, 0, 1, 1], [], []>} : vector<4x16xf32>, vector<16x256xf32>, vector<4x256xf32> -> vector<4x256xf32>
    %197 = arith.mulf %18, %196 : vector<4x256xf32>
    %cst_108 = arith.constant dense<0.000000e+00> : vector<256xf32>
    %198 = vector.multi_reduction <add>, %197, %cst_108 [0] : vector<4x256xf32> to vector<256xf32>
    %199 = vector.shape_cast %198 : vector<256xf32> to vector<1x256xf32>
    %c1_109 = arith.constant 1 : index
    %c1_110 = arith.constant 1 : index
    %c0_111 = arith.constant 0 : index
    %c0_112 = arith.constant 0 : index
    %200 = vector.load %arg15[%c1_109, %c1_110, %c0_111, %c0_112] : memref<3x2x1x256xf32, #tpu.memory_space<vmem>>, vector<1x1x1x256xf32>
    %201 = vector.shape_cast %200 : vector<1x1x1x256xf32> to vector<1x256xf32>
    %202 = vector.shape_cast %199 : vector<1x256xf32> to vector<1x1x1x256xf32>
    tpu.vector_store %arg15[%c1_109, %c1_110, %c0_111, %c0_112], %202 {strides = array<i32>} : memref<3x2x1x256xf32, #tpu.memory_space<vmem>>, vector<1x1x1x256xf32>,
    %203 = vector.extract_strided_slice %5 {offsets = [0, 64], sizes = [16, 32], strides = [1, 1]} : vector<64x128xf32> to vector<16x32xf32>
    %204 = vector.extract_strided_slice %10 {offsets = [0, 64], sizes = [16, 32], strides = [1, 1]} : vector<64x128xf32> to vector<16x32xf32>
    %cst_113 = arith.constant dense<0.000000e+00> : vector<16x16xf32>
    %205 = tpu.matmul %203, %204, %cst_113 {dimension_numbers = #tpu.dot_dimension_numbers<[1], [1], [0], [0], [0, 0, 1, 0], [], []>} : vector<16x32xf32>, vector<16x32xf32>, vector<16x16xf32> -> vector<16x16xf32>
    %cst_114 = arith.constant 0.176776692 : f32
    %206 = vector.broadcast %cst_114 : f32 to vector<16x16xf32>
    %207 = arith.mulf %206, %205 : vector<16x16xf32>
    %208 = arith.addf %207, %11 : vector<16x16xf32>
    %cst_115 = arith.constant dense<0xFF800000> : vector<16xf32>
    %209 = vector.multi_reduction <maximumf>, %208, %cst_115 [1] : vector<16x16xf32> to vector<16xf32>
    %210 = vector.shape_cast %209 : vector<16xf32> to vector<16x1xf32>
    %211 = vector.broadcast %210 : vector<16x1xf32> to vector<16x16xf32>
    %212 = arith.subf %208, %211 : vector<16x16xf32>
    %213 = math.exp %212 : vector<16x16xf32>
    %cst_116 = arith.constant dense<0.000000e+00> : vector<16xf32>
    %214 = vector.multi_reduction <add>, %213, %cst_116 [1] : vector<16x16xf32> to vector<16xf32>
    %215 = vector.shape_cast %214 : vector<16xf32> to vector<16x1xf32>
    %216 = vector.broadcast %215 : vector<16x1xf32> to vector<16x16xf32>
    %217 = arith.divf %213, %216 : vector<16x16xf32>
    %cst_117 = arith.constant dense<0.000000e+00> : vector<4x16xf32>
    %218 = tpu.matmul %12, %217, %cst_117 {dimension_numbers = #tpu.dot_dimension_numbers<[1], [0], [0], [1], [0, 0, 1, 1], [], []>} : vector<4x16xf32>, vector<16x16xf32>, vector<4x16xf32> -> vector<4x16xf32>
    %cst_118 = arith.constant dense<0.000000e+00> : vector<4x256xf32>
    %219 = tpu.matmul %218, %13, %cst_118 {dimension_numbers = #tpu.dot_dimension_numbers<[1], [0], [0], [1], [0, 0, 1, 1], [], []>} : vector<4x16xf32>, vector<16x256xf32>, vector<4x256xf32> -> vector<4x256xf32>
    %220 = arith.mulf %14, %219 : vector<4x256xf32>
    %cst_119 = arith.constant dense<0.000000e+00> : vector<256xf32>
    %221 = vector.multi_reduction <add>, %220, %cst_119 [0] : vector<4x256xf32> to vector<256xf32>
    %222 = vector.shape_cast %221 : vector<256xf32> to vector<1x256xf32>
    %c2 = arith.constant 2 : index
    %c0_120 = arith.constant 0 : index
    %c0_121 = arith.constant 0 : index
    %c0_122 = arith.constant 0 : index
    %223 = vector.load %arg14[%c2, %c0_120, %c0_121, %c0_122] : memref<3x2x1x256xf32, #tpu.memory_space<vmem>>, vector<1x1x1x256xf32>
    %224 = vector.shape_cast %223 : vector<1x1x1x256xf32> to vector<1x256xf32>
    %225 = vector.shape_cast %222 : vector<1x256xf32> to vector<1x1x1x256xf32>
    tpu.vector_store %arg14[%c2, %c0_120, %c0_121, %c0_122], %225 {strides = array<i32>} : memref<3x2x1x256xf32, #tpu.memory_space<vmem>>, vector<1x1x1x256xf32>,
    %226 = vector.extract_strided_slice %5 {offsets = [16, 64], sizes = [16, 32], strides = [1, 1]} : vector<64x128xf32> to vector<16x32xf32>
    %227 = vector.extract_strided_slice %10 {offsets = [16, 64], sizes = [16, 32], strides = [1, 1]} : vector<64x128xf32> to vector<16x32xf32>
    %cst_123 = arith.constant dense<0.000000e+00> : vector<16x16xf32>
    %228 = tpu.matmul %226, %227, %cst_123 {dimension_numbers = #tpu.dot_dimension_numbers<[1], [1], [0], [0], [0, 0, 1, 0], [], []>} : vector<16x32xf32>, vector<16x32xf32>, vector<16x16xf32> -> vector<16x16xf32>
    %cst_124 = arith.constant 0.176776692 : f32
    %229 = vector.broadcast %cst_124 : f32 to vector<16x16xf32>
    %230 = arith.mulf %229, %228 : vector<16x16xf32>
    %231 = arith.addf %230, %11 : vector<16x16xf32>
    %cst_125 = arith.constant dense<0xFF800000> : vector<16xf32>
    %232 = vector.multi_reduction <maximumf>, %231, %cst_125 [1] : vector<16x16xf32> to vector<16xf32>
    %233 = vector.shape_cast %232 : vector<16xf32> to vector<16x1xf32>
    %234 = vector.broadcast %233 : vector<16x1xf32> to vector<16x16xf32>
    %235 = arith.subf %231, %234 : vector<16x16xf32>
    %236 = math.exp %235 : vector<16x16xf32>
    %cst_126 = arith.constant dense<0.000000e+00> : vector<16xf32>
    %237 = vector.multi_reduction <add>, %236, %cst_126 [1] : vector<16x16xf32> to vector<16xf32>
    %238 = vector.shape_cast %237 : vector<16xf32> to vector<16x1xf32>
    %239 = vector.broadcast %238 : vector<16x1xf32> to vector<16x16xf32>
    %240 = arith.divf %236, %239 : vector<16x16xf32>
    %cst_127 = arith.constant dense<0.000000e+00> : vector<4x16xf32>
    %241 = tpu.matmul %12, %240, %cst_127 {dimension_numbers = #tpu.dot_dimension_numbers<[1], [0], [0], [1], [0, 0, 1, 1], [], []>} : vector<4x16xf32>, vector<16x16xf32>, vector<4x16xf32> -> vector<4x16xf32>
    %cst_128 = arith.constant dense<0.000000e+00> : vector<4x256xf32>
    %242 = tpu.matmul %241, %13, %cst_128 {dimension_numbers = #tpu.dot_dimension_numbers<[1], [0], [0], [1], [0, 0, 1, 1], [], []>} : vector<4x16xf32>, vector<16x256xf32>, vector<4x256xf32> -> vector<4x256xf32>
    %243 = arith.mulf %14, %242 : vector<4x256xf32>
    %cst_129 = arith.constant dense<0.000000e+00> : vector<256xf32>
    %244 = vector.multi_reduction <add>, %243, %cst_129 [0] : vector<4x256xf32> to vector<256xf32>
    %245 = vector.shape_cast %244 : vector<256xf32> to vector<1x256xf32>
    %c2_130 = arith.constant 2 : index
    %c1_131 = arith.constant 1 : index
    %c0_132 = arith.constant 0 : index
    %c0_133 = arith.constant 0 : index
    %246 = vector.load %arg14[%c2_130, %c1_131, %c0_132, %c0_133] : memref<3x2x1x256xf32, #tpu.memory_space<vmem>>, vector<1x1x1x256xf32>
    %247 = vector.shape_cast %246 : vector<1x1x1x256xf32> to vector<1x256xf32>
    %248 = vector.shape_cast %245 : vector<1x256xf32> to vector<1x1x1x256xf32>
    tpu.vector_store %arg14[%c2_130, %c1_131, %c0_132, %c0_133], %248 {strides = array<i32>} : memref<3x2x1x256xf32, #tpu.memory_space<vmem>>, vector<1x1x1x256xf32>,
    %249 = vector.extract_strided_slice %5 {offsets = [32, 64], sizes = [16, 32], strides = [1, 1]} : vector<64x128xf32> to vector<16x32xf32>
    %250 = vector.extract_strided_slice %10 {offsets = [32, 64], sizes = [16, 32], strides = [1, 1]} : vector<64x128xf32> to vector<16x32xf32>
    %cst_134 = arith.constant dense<0.000000e+00> : vector<16x16xf32>
    %251 = tpu.matmul %249, %250, %cst_134 {dimension_numbers = #tpu.dot_dimension_numbers<[1], [1], [0], [0], [0, 0, 1, 0], [], []>} : vector<16x32xf32>, vector<16x32xf32>, vector<16x16xf32> -> vector<16x16xf32>
    %cst_135 = arith.constant 0.176776692 : f32
    %252 = vector.broadcast %cst_135 : f32 to vector<16x16xf32>
    %253 = arith.mulf %252, %251 : vector<16x16xf32>
    %254 = arith.addf %253, %15 : vector<16x16xf32>
    %cst_136 = arith.constant dense<0xFF800000> : vector<16xf32>
    %255 = vector.multi_reduction <maximumf>, %254, %cst_136 [1] : vector<16x16xf32> to vector<16xf32>
    %256 = vector.shape_cast %255 : vector<16xf32> to vector<16x1xf32>
    %257 = vector.broadcast %256 : vector<16x1xf32> to vector<16x16xf32>
    %258 = arith.subf %254, %257 : vector<16x16xf32>
    %259 = math.exp %258 : vector<16x16xf32>
    %cst_137 = arith.constant dense<0.000000e+00> : vector<16xf32>
    %260 = vector.multi_reduction <add>, %259, %cst_137 [1] : vector<16x16xf32> to vector<16xf32>
    %261 = vector.shape_cast %260 : vector<16xf32> to vector<16x1xf32>
    %262 = vector.broadcast %261 : vector<16x1xf32> to vector<16x16xf32>
    %263 = arith.divf %259, %262 : vector<16x16xf32>
    %cst_138 = arith.constant dense<0.000000e+00> : vector<4x16xf32>
    %264 = tpu.matmul %16, %263, %cst_138 {dimension_numbers = #tpu.dot_dimension_numbers<[1], [0], [0], [1], [0, 0, 1, 1], [], []>} : vector<4x16xf32>, vector<16x16xf32>, vector<4x16xf32> -> vector<4x16xf32>
    %cst_139 = arith.constant dense<0.000000e+00> : vector<4x256xf32>
    %265 = tpu.matmul %264, %17, %cst_139 {dimension_numbers = #tpu.dot_dimension_numbers<[1], [0], [0], [1], [0, 0, 1, 1], [], []>} : vector<4x16xf32>, vector<16x256xf32>, vector<4x256xf32> -> vector<4x256xf32>
    %266 = arith.mulf %18, %265 : vector<4x256xf32>
    %cst_140 = arith.constant dense<0.000000e+00> : vector<256xf32>
    %267 = vector.multi_reduction <add>, %266, %cst_140 [0] : vector<4x256xf32> to vector<256xf32>
    %268 = vector.shape_cast %267 : vector<256xf32> to vector<1x256xf32>
    %c2_141 = arith.constant 2 : index
    %c0_142 = arith.constant 0 : index
    %c0_143 = arith.constant 0 : index
    %c0_144 = arith.constant 0 : index
    %269 = vector.load %arg15[%c2_141, %c0_142, %c0_143, %c0_144] : memref<3x2x1x256xf32, #tpu.memory_space<vmem>>, vector<1x1x1x256xf32>
    %270 = vector.shape_cast %269 : vector<1x1x1x256xf32> to vector<1x256xf32>
    %271 = vector.shape_cast %268 : vector<1x256xf32> to vector<1x1x1x256xf32>
    tpu.vector_store %arg15[%c2_141, %c0_142, %c0_143, %c0_144], %271 {strides = array<i32>} : memref<3x2x1x256xf32, #tpu.memory_space<vmem>>, vector<1x1x1x256xf32>,
    %272 = vector.extract_strided_slice %5 {offsets = [48, 64], sizes = [16, 32], strides = [1, 1]} : vector<64x128xf32> to vector<16x32xf32>
    %273 = vector.extract_strided_slice %10 {offsets = [48, 64], sizes = [16, 32], strides = [1, 1]} : vector<64x128xf32> to vector<16x32xf32>
    %cst_145 = arith.constant dense<0.000000e+00> : vector<16x16xf32>
    %274 = tpu.matmul %272, %273, %cst_145 {dimension_numbers = #tpu.dot_dimension_numbers<[1], [1], [0], [0], [0, 0, 1, 0], [], []>} : vector<16x32xf32>, vector<16x32xf32>, vector<16x16xf32> -> vector<16x16xf32>
    %cst_146 = arith.constant 0.176776692 : f32
    %275 = vector.broadcast %cst_146 : f32 to vector<16x16xf32>
    %276 = arith.mulf %275, %274 : vector<16x16xf32>
    %277 = arith.addf %276, %15 : vector<16x16xf32>
    %cst_147 = arith.constant dense<0xFF800000> : vector<16xf32>
    %278 = vector.multi_reduction <maximumf>, %277, %cst_147 [1] : vector<16x16xf32> to vector<16xf32>
    %279 = vector.shape_cast %278 : vector<16xf32> to vector<16x1xf32>
    %280 = vector.broadcast %279 : vector<16x1xf32> to vector<16x16xf32>
    %281 = arith.subf %277, %280 : vector<16x16xf32>
    %282 = math.exp %281 : vector<16x16xf32>
    %cst_148 = arith.constant dense<0.000000e+00> : vector<16xf32>
    %283 = vector.multi_reduction <add>, %282, %cst_148 [1] : vector<16x16xf32> to vector<16xf32>
    %284 = vector.shape_cast %283 : vector<16xf32> to vector<16x1xf32>
    %285 = vector.broadcast %284 : vector<16x1xf32> to vector<16x16xf32>
    %286 = arith.divf %282, %285 : vector<16x16xf32>
    %cst_149 = arith.constant dense<0.000000e+00> : vector<4x16xf32>
    %287 = tpu.matmul %16, %286, %cst_149 {dimension_numbers = #tpu.dot_dimension_numbers<[1], [0], [0], [1], [0, 0, 1, 1], [], []>} : vector<4x16xf32>, vector<16x16xf32>, vector<4x16xf32> -> vector<4x16xf32>
    %cst_150 = arith.constant dense<0.000000e+00> : vector<4x256xf32>
    %288 = tpu.matmul %287, %17, %cst_150 {dimension_numbers = #tpu.dot_dimension_numbers<[1], [0], [0], [1], [0, 0, 1, 1], [], []>} : vector<4x16xf32>, vector<16x256xf32>, vector<4x256xf32> -> vector<4x256xf32>
    %289 = arith.mulf %18, %288 : vector<4x256xf32>
    %cst_151 = arith.constant dense<0.000000e+00> : vector<256xf32>
    %290 = vector.multi_reduction <add>, %289, %cst_151 [0] : vector<4x256xf32> to vector<256xf32>
    %291 = vector.shape_cast %290 : vector<256xf32> to vector<1x256xf32>
    %c2_152 = arith.constant 2 : index
    %c1_153 = arith.constant 1 : index
    %c0_154 = arith.constant 0 : index
    %c0_155 = arith.constant 0 : index
    %292 = vector.load %arg15[%c2_152, %c1_153, %c0_154, %c0_155] : memref<3x2x1x256xf32, #tpu.memory_space<vmem>>, vector<1x1x1x256xf32>
    %293 = vector.shape_cast %292 : vector<1x1x1x256xf32> to vector<1x256xf32>
    %294 = vector.shape_cast %291 : vector<1x256xf32> to vector<1x1x1x256xf32>
    tpu.vector_store %arg15[%c2_152, %c1_153, %c0_154, %c0_155], %294 {strides = array<i32>} : memref<3x2x1x256xf32, #tpu.memory_space<vmem>>, vector<1x1x1x256xf32>,
    return
  }
  func.func @transform_0(%arg0: i32) -> (i32, i32) {
    %c0_i32 = arith.constant 0 : i32
    %c0_i32_0 = arith.constant 0 : i32
    %c0_i32_1 = arith.constant 0 : i32
    return %c0_i32, %c0_i32_0 : i32, i32
  }
  func.func @transform_1(%arg0: i32) -> (i32, i32) {
    %c0_i32 = arith.constant 0 : i32
    %c0_i32_0 = arith.constant 0 : i32
    %c0_i32_1 = arith.constant 0 : i32
    return %c0_i32, %c0_i32_0 : i32, i32
  }
  func.func @transform_2(%arg0: i32) -> (i32, i32) {
    %c0_i32 = arith.constant 0 : i32
    %c0_i32_0 = arith.constant 0 : i32
    %c0_i32_1 = arith.constant 0 : i32
    return %c0_i32, %c0_i32_0 : i32, i32
  }
  func.func @transform_3(%arg0: i32) -> (i32, i32) {
    %c0_i32 = arith.constant 0 : i32
    %c0_i32_0 = arith.constant 0 : i32
    %c0_i32_1 = arith.constant 0 : i32
    return %c0_i32, %c0_i32_0 : i32, i32
  }
  func.func @transform_4(%arg0: i32) -> (i32, i32) {
    %c0_i32 = arith.constant 0 : i32
    %c0_i32_0 = arith.constant 0 : i32
    %c0_i32_1 = arith.constant 0 : i32
    return %c0_i32, %c0_i32_0 : i32, i32
  }
  func.func @transform_5(%arg0: i32) -> (i32, i32) {
    %c0_i32 = arith.constant 0 : i32
    %c0_i32_0 = arith.constant 0 : i32
    %c0_i32_1 = arith.constant 0 : i32
    return %c0_i32, %c0_i32_0 : i32, i32
  }
  func.func @transform_6(%arg0: i32) -> (i32, i32) {
    %c0_i32 = arith.constant 0 : i32
    %c0_i32_0 = arith.constant 0 : i32
    %c0_i32_1 = arith.constant 0 : i32
    return %c0_i32, %c0_i32_0 : i32, i32
  }
  func.func @transform_7(%arg0: i32) -> (i32, i32) {
    %c0_i32 = arith.constant 0 : i32
    %c0_i32_0 = arith.constant 0 : i32
    %c0_i32_1 = arith.constant 0 : i32
    return %c0_i32, %c0_i32_0 : i32, i32
  }
  func.func @transform_8(%arg0: i32) -> (i32, i32) {
    %c0_i32 = arith.constant 0 : i32
    %c0_i32_0 = arith.constant 0 : i32
    %c0_i32_1 = arith.constant 0 : i32
    return %c0_i32, %c0_i32_0 : i32, i32
  }
  func.func @transform_9(%arg0: i32) -> (i32, i32) {
    %c0_i32 = arith.constant 0 : i32
    %c0_i32_0 = arith.constant 0 : i32
    %c0_i32_1 = arith.constant 0 : i32
    return %c0_i32, %c0_i32_0 : i32, i32
  }
  func.func @transform_10(%arg0: i32) -> (i32, i32) {
    %c0_i32 = arith.constant 0 : i32
    %c0_i32_0 = arith.constant 0 : i32
    %c0_i32_1 = arith.constant 0 : i32
    return %c0_i32, %c0_i32_0 : i32, i32
  }
  func.func @transform_11(%arg0: i32) -> (i32, i32) {
    %c0_i32 = arith.constant 0 : i32
    %c0_i32_0 = arith.constant 0 : i32
    %c0_i32_1 = arith.constant 0 : i32
    return %c0_i32, %c0_i32_0 : i32, i32
  }
  func.func @transform_12(%arg0: i32) -> (i32, i32) {
    %c0_i32 = arith.constant 0 : i32
    %c0_i32_0 = arith.constant 0 : i32
    %c0_i32_1 = arith.constant 0 : i32
    return %c0_i32, %c0_i32_0 : i32, i32
  }
  func.func @transform_13(%arg0: i32) -> (i32, i32, i32, i32) {
    %c0_i32 = arith.constant 0 : i32
    %c0_i32_0 = arith.constant 0 : i32
    %c0_i32_1 = arith.constant 0 : i32
    %c0_i32_2 = arith.constant 0 : i32
    %c0_i32_3 = arith.constant 0 : i32
    return %c0_i32, %c0_i32_0, %c0_i32_1, %c0_i32_2 : i32, i32, i32, i32
  }
  func.func @transform_14(%arg0: i32) -> (i32, i32, i32, i32) {
    %c0_i32 = arith.constant 0 : i32
    %c0_i32_0 = arith.constant 0 : i32
    %c0_i32_1 = arith.constant 0 : i32
    %c0_i32_2 = arith.constant 0 : i32
    %c0_i32_3 = arith.constant 0 : i32
    return %c0_i32, %c0_i32_0, %c0_i32_1, %c0_i32_2 : i32, i32, i32, i32
  }
}

</mosaic_0001>

<llo_original>
// kernel: tpu_custom_call.1
$region0: #{tpu_custom_call.1}
  #allocation0 [shape = 'u32[]', space=smem, size = 0x4, offset = 0x4, fixed_abs, tag = 'smem constant byte address 0x4 - core index']
  #allocation1 [shape = 'u32[72,128]{1,0:T(1,128)}', space=vmem, size = 0x9000, scoped, tag = 'internal scratch']
  %s0 = inlined_call_operand.vmem [shape: f32[64,32], index: 0, kind: input, shape index: {}]
  %s1 = inlined_call_operand.vmem [shape: f32[32,128], index: 1, kind: input, shape index: {}]
  %s2 = inlined_call_operand.vmem [shape: f32[1,128], index: 2, kind: input, shape index: {}]
  %s3 = inlined_call_operand.vmem [shape: f32[32,128], index: 3, kind: input, shape index: {}]
  %s4 = inlined_call_operand.hbm [shape: f32[1,128], index: 4, kind: input, shape index: {}]
  %s5 = inlined_call_operand.hbm [shape: f32[16,16], index: 5, kind: input, shape index: {}]
  %s6 = inlined_call_operand.hbm [shape: f32[4,16], index: 6, kind: input, shape index: {}]
  %s7 = inlined_call_operand.vmem [shape: f32[16,256], index: 7, kind: input, shape index: {}]
  %s8 = inlined_call_operand.hbm [shape: f32[4,256], index: 8, kind: input, shape index: {}]
  %s9 = inlined_call_operand.hbm [shape: f32[16,16], index: 9, kind: input, shape index: {}]
  %s10 = inlined_call_operand.hbm [shape: f32[4,16], index: 10, kind: input, shape index: {}]
  %s11 = inlined_call_operand.hbm [shape: f32[16,256], index: 11, kind: input, shape index: {}]
  %s12 = inlined_call_operand.vmem [shape: f32[4,256], index: 12, kind: input, shape index: {}]
  %s13 = inlined_call_operand.hbm [shape: f32[3,2,1,256], index: 13, kind: output, shape index: {0}]
  %s14 = inlined_call_operand.hbm [shape: f32[3,2,1,256], index: 14, kind: output, shape index: {1}]
  %15 = xla_tuple %s13, %s14
  %s16 = sld [smem:[#allocation0]]
  $region98: #{tpu_custom_call.1} parent=0
    _
  %s18 = ssub.s32 1, %s16
  %s19 = scalar_select 0, %s18, %s16
  $region1: #{tpu_custom_call.1} parent=0
    #allocation2 [shape = 'u8[512]{0}', space=vmem, size = 0x400, scoped, tag = 'input window, operand 4, single buffered']
    #allocation3 [shape = 's32[1]{0}', space=sflag, size = 0x4, scoped, tag = 'scoped memory for tpu_custom_call.1']
    #allocation4 [shape = 's32[1]{0}', space=sflag, size = 0x4, scoped, tag = 'scoped memory for tpu_custom_call.1']
    #allocation5 [shape = 'u8[8192]{0}', space=vmem, size = 0x2000, scoped, tag = 'input window, operand 5, single buffered']
    #allocation6 [shape = 's32[1]{0}', space=sflag, size = 0x4, scoped, tag = 'scoped memory for tpu_custom_call.1']
    #allocation7 [shape = 'u8[2048]{0}', space=vmem, size = 0x800, scoped, tag = 'input window, operand 6, single buffered']
    #allocation8 [shape = 'u8[4096]{0}', space=vmem, size = 0x1000, scoped, tag = 'input window, operand 8, single buffered']
    #allocation9 [shape = 's32[1]{0}', space=sflag, size = 0x4, scoped, tag = 'scoped memory for tpu_custom_call.1']
    #allocation10 [shape = 'u8[8192]{0}', space=vmem, size = 0x2000, scoped, tag = 'input window, operand 9, single buffered']
    #allocation11 [shape = 'u8[2048]{0}', space=vmem, size = 0x800, scoped, tag = 'input window, operand 10, single buffered']
    #allocation12 [shape = 's32[1]{0}', space=sflag, size = 0x4, scoped, tag = 'scoped memory for tpu_custom_call.1']
    #allocation13 [shape = 'u8[16384]{0}', space=vmem, size = 0x4000, scoped, tag = 'input window, operand 11, single buffered']
    #allocation14 [shape = 'u8[6144]{0}', space=vmem, size = 0x1800, scoped, tag = 'output window, operand 0, single buffered']
    #allocation15 [shape = 'u8[6144]{0}', space=vmem, size = 0x1800, scoped, tag = 'output window, operand 1, single buffered']
    #allocation16 [shape = 's32[1]{0}', space=sflag, size = 0x4, scoped, tag = 'scoped memory for tpu_custom_call.1']
    %20 = vsyncpa [#allocation3], 0
    %21 = vsyncpa [#allocation6], 0
    %22 = vsyncpa [#allocation9], 0
    %23 = vsyncpa [#allocation12], 0
    %24 = vsyncpa [#allocation4], 0
    %25 = vsyncpa [#allocation16], 0
    // Predicated region
    $region2: #{tpu_custom_call.1} parent=1 // pred_check
      _
    $region3: #{tpu_custom_call.1} parent=1 // pred_check_branch
      %27 = sbr.rel (0) target = $region5
    $region4: #{tpu_custom_call.1} parent=1 // pred_region
      _
    $region5: #{tpu_custom_call.1} parent=1 // pred_fallthru
      _
    // Predicated region
    $region6: #{tpu_custom_call.1} parent=1 // pred_check
      _
    $region7: #{tpu_custom_call.1} parent=1 // pred_check_branch
      %29 = sbr.rel (0) target = $region9
    $region8: #{tpu_custom_call.1} parent=1 // pred_region
      _
    $region9: #{tpu_custom_call.1} parent=1 // pred_fallthru
      _
    // Predicated region
    $region10: #{tpu_custom_call.1} parent=1 // pred_check
      _
    $region11: #{tpu_custom_call.1} parent=1 // pred_check_branch
      %31 = sbr.rel (0) target = $region13
    $region12: #{tpu_custom_call.1} parent=1 // pred_region
      _
    $region13: #{tpu_custom_call.1} parent=1 // pred_fallthru
      _
    // Predicated region
    $region14: #{tpu_custom_call.1} parent=1 // pred_check
      _
    $region15: #{tpu_custom_call.1} parent=1 // pred_check_branch
      %33 = sbr.rel (0) target = $region17
    $region16: #{tpu_custom_call.1} parent=1 // pred_region
      _
    $region17: #{tpu_custom_call.1} parent=1 // pred_fallthru
      _
    // Predicated region
    $region18: #{tpu_custom_call.1} parent=1 // pred_check
      _
    $region19: #{tpu_custom_call.1} parent=1 // pred_check_branch
      %35 = sbr.rel (0) target = $region21
    $region20: #{tpu_custom_call.1} parent=1 // pred_region
      %37 = vsyncadd [#allocation3], 0
      %s39 = sshll.u32 %s4, 4
      %s40 = int_to_ptr.hbm [resolvable:$true] %s39
      %s41 = sshll.u32 [#allocation2], 4
      %s42 = int_to_ptr.vmem [resolvable:$true] %s41
      %44 = dma.hbm_to_vmem [thread:$0]  %s40, 16, %s42, [#allocation3]
    $region21: #{tpu_custom_call.1} parent=1 // pred_fallthru
      _
    // Predicated region
    $region22: #{tpu_custom_call.1} parent=1 // pred_check
      _
    $region23: #{tpu_custom_call.1} parent=1 // pred_check_branch
      %46 = sbr.rel (0) target = $region25
    $region24: #{tpu_custom_call.1} parent=1 // pred_region
      %48 = vsyncadd [#allocation6], 0
      %s49 = sshll.u32 %s5, 4
      %s50 = int_to_ptr.hbm [resolvable:$true] %s49
      %s51 = sshll.u32 [#allocation5], 4
      %s52 = int_to_ptr.vmem [resolvable:$true] %s51
      %57 = dma.hbm_to_vmem [thread:$0]  %s50, 256, %s52, [#allocation6], 128, 128, 8
    $region25: #{tpu_custom_call.1} parent=1 // pred_fallthru
      _
    // Predicated region
    $region26: #{tpu_custom_call.1} parent=1 // pred_check
      _
    $region27: #{tpu_custom_call.1} parent=1 // pred_check_branch
      %59 = sbr.rel (0) target = $region29
    $region28: #{tpu_custom_call.1} parent=1 // pred_region
      %61 = vsyncadd [#allocation6], 0
      %s63 = sshll.u32 %s6, 4
      %s64 = int_to_ptr.hbm [resolvable:$true] %s63
      %s65 = sshll.u32 [#allocation7], 4
      %s66 = int_to_ptr.vmem [resolvable:$true] %s65
      %68 = dma.hbm_to_vmem [thread:$0]  %s64, 64, %s66, [#allocation6]
    $region29: #{tpu_custom_call.1} parent=1 // pred_fallthru
      _
    // Predicated region
    $region30: #{tpu_custom_call.1} parent=1 // pred_check
      _
    $region31: #{tpu_custom_call.1} parent=1 // pred_check_branch
      %70 = sbr.rel (0) target = $region33
    $region32: #{tpu_custom_call.1} parent=1 // pred_region
      _
    $region33: #{tpu_custom_call.1} parent=1 // pred_fallthru
      _
    // Predicated region
    $region34: #{tpu_custom_call.1} parent=1 // pred_check
      _
    $region35: #{tpu_custom_call.1} parent=1 // pred_check_branch
      %72 = sbr.rel (0) target = $region37
    $region36: #{tpu_custom_call.1} parent=1 // pred_region
      %74 = vsyncadd [#allocation9], 0
      %s76 = sshll.u32 %s8, 4
      %s77 = int_to_ptr.hbm [resolvable:$true] %s76
      %s78 = sshll.u32 [#allocation8], 4
      %s79 = int_to_ptr.vmem [resolvable:$true] %s78
      %81 = dma.hbm_to_vmem [thread:$0]  %s77, 128, %s79, [#allocation9]
    $region37: #{tpu_custom_call.1} parent=1 // pred_fallthru
      _
    // Predicated region
    $region38: #{tpu_custom_call.1} parent=1 // pred_check
      _
    $region39: #{tpu_custom_call.1} parent=1 // pred_check_branch
      %83 = sbr.rel (0) target = $region41
    $region40: #{tpu_custom_call.1} parent=1 // pred_region
      %85 = vsyncadd [#allocation9], 0
      %s86 = sshll.u32 %s9, 4
      %s87 = int_to_ptr.hbm [resolvable:$true] %s86
      %s88 = sshll.u32 [#allocation10], 4
      %s89 = int_to_ptr.vmem [resolvable:$true] %s88
      %94 = dma.hbm_to_vmem [thread:$0]  %s87, 256, %s89, [#allocation9], 128, 128, 8
    $region41: #{tpu_custom_call.1} parent=1 // pred_fallthru
      _
    // Predicated region
    $region42: #{tpu_custom_call.1} parent=1 // pred_check
      _
    $region43: #{tpu_custom_call.1} parent=1 // pred_check_branch
      %96 = sbr.rel (0) target = $region45
    $region44: #{tpu_custom_call.1} parent=1 // pred_region
      %98 = vsyncadd [#allocation12], 0
      %s100 = sshll.u32 %s10, 4
      %s101 = int_to_ptr.hbm [resolvable:$true] %s100
      %s102 = sshll.u32 [#allocation11], 4
      %s103 = int_to_ptr.vmem [resolvable:$true] %s102
      %105 = dma.hbm_to_vmem [thread:$0]  %s101, 64, %s103, [#allocation12]
    $region45: #{tpu_custom_call.1} parent=1 // pred_fallthru
      _
    // Predicated region
    $region46: #{tpu_custom_call.1} parent=1 // pred_check
      _
    $region47: #{tpu_custom_call.1} parent=1 // pred_check_branch
      %107 = sbr.rel (0) target = $region49
    $region48: #{tpu_custom_call.1} parent=1 // pred_region
      %109 = vsyncadd [#allocation12], 0
      %s110 = sshll.u32 %s11, 4
      %s111 = int_to_ptr.hbm [resolvable:$true] %s110
      %s112 = sshll.u32 [#allocation13], 4
      %s113 = int_to_ptr.vmem [resolvable:$true] %s112
      %118 = dma.hbm_to_vmem [thread:$0]  %s111, 512, %s113, [#allocation12], 256, 256, 16
    $region49: #{tpu_custom_call.1} parent=1 // pred_fallthru
      _
    // Predicated region
    $region50: #{tpu_custom_call.1} parent=1 // pred_check
      _
    $region51: #{tpu_custom_call.1} parent=1 // pred_check_branch
      %120 = sbr.rel (0) target = $region53
    $region52: #{tpu_custom_call.1} parent=1 // pred_region
      _
    $region53: #{tpu_custom_call.1} parent=1 // pred_fallthru
      _
    // Predicated region
    $region54: #{tpu_custom_call.1} parent=1 // pred_check
      _
    $region55: #{tpu_custom_call.1} parent=1 // pred_check_branch
      %122 = sbr.rel (0) target = $region57
    $region56: #{tpu_custom_call.1} parent=1 // pred_region
      %124 = dma.done [#allocation3], 16
    $region57: #{tpu_custom_call.1} parent=1 // pred_fallthru
      _
    // Predicated region
    $region58: #{tpu_custom_call.1} parent=1 // pred_check
      _
    $region59: #{tpu_custom_call.1} parent=1 // pred_check_branch
      %126 = sbr.rel (0) target = $region61
    $region60: #{tpu_custom_call.1} parent=1 // pred_region
      %128 = dma.done [#allocation6], 256
    $region61: #{tpu_custom_call.1} parent=1 // pred_fallthru
      _
    // Predicated region
    $region62: #{tpu_custom_call.1} parent=1 // pred_check
      _
    $region63: #{tpu_custom_call.1} parent=1 // pred_check_branch
      %130 = sbr.rel (0) target = $region65
    $region64: #{tpu_custom_call.1} parent=1 // pred_region
      %132 = dma.done [#allocation6], 64
    $region65: #{tpu_custom_call.1} parent=1 // pred_fallthru
      _
    // Predicated region
    $region66: #{tpu_custom_call.1} parent=1 // pred_check
      _
    $region67: #{tpu_custom_call.1} parent=1 // pred_check_branch
      %134 = sbr.rel (0) target = $region69
    $region68: #{tpu_custom_call.1} parent=1 // pred_region
      %136 = dma.done [#allocation9], 128
    $region69: #{tpu_custom_call.1} parent=1 // pred_fallthru
      _
    // Predicated region
    $region70: #{tpu_custom_call.1} parent=1 // pred_check
      _
    $region71: #{tpu_custom_call.1} parent=1 // pred_check_branch
      %138 = sbr.rel (0) target = $region73
    $region72: #{tpu_custom_call.1} parent=1 // pred_region
      %140 = dma.done [#allocation9], 256
    $region73: #{tpu_custom_call.1} parent=1 // pred_fallthru
      _
    // Predicated region
    $region74: #{tpu_custom_call.1} parent=1 // pred_check
      _
    $region75: #{tpu_custom_call.1} parent=1 // pred_check_branch
      %142 = sbr.rel (0) target = $region77
    $region76: #{tpu_custom_call.1} parent=1 // pred_region
      %144 = dma.done [#allocation12], 64
    $region77: #{tpu_custom_call.1} parent=1 // pred_fallthru
      _
    // Predicated region
    $region78: #{tpu_custom_call.1} parent=1 // pred_check
      _
    $region79: #{tpu_custom_call.1} parent=1 // pred_check_branch
      %146 = sbr.rel (0) target = $region81
    $region80: #{tpu_custom_call.1} parent=1 // pred_region
      %148 = dma.done [#allocation12], 512
    $region81: #{tpu_custom_call.1} parent=1 // pred_fallthru
      _
    %v149 = vld [vmem:[%s0] sm:$0xff]
    %v150 = vld [vmem:[%s0 + $0x8] sm:$0xff]
    %v151 = vld [vmem:[%s0 + $0x10] sm:$0xff]
    %v152 = vld [vmem:[%s0 + $0x18] sm:$0xff]
    %v153 = vld [vmem:[%s0 + $0x20] sm:$0xff]
    %v154 = vld [vmem:[%s0 + $0x28] sm:$0xff]
    %v155 = vld [vmem:[%s0 + $0x30] sm:$0xff]
    %v156 = vld [vmem:[%s0 + $0x38] sm:$0xff]
    %v157 = vld [vmem:[%s1] sm:$0xff]
    %v158 = vld [vmem:[%s1 + $0x8] sm:$0xff]
    %v159 = vld [vmem:[%s1 + $0x10] sm:$0xff]
    %v160 = vld [vmem:[%s1 + $0x18] sm:$0xff]
    %v161 = vld [vmem:[%s2] sm:$0x1]
    %v163 = vperm.slane %v161, 0
    %vm165 = vcmask 261120
    %v167 = vsel %vm165, %v149, 0
    %v170 = vsel %vm165, %v150, 0
    %v173 = vsel %vm165, %v151, 0
    %v176 = vsel %vm165, %v152, 0
    %v179 = vsel %vm165, %v153, 0
    %v182 = vsel %vm165, %v154, 0
    %v185 = vsel %vm165, %v155, 0
    %v188 = vsel %vm165, %v156, 0
    %190 = vmatpush.msra.mxu0 0.0
    %191 = vmatpush.msra.mxu0 0.0
    %192 = vmatpush.msra.mxu0 0.0
    %193 = vmatpush.msra.mxu0 0.0
    %194 = vmatpush.msra.mxu0 0.0
    %195 = vmatpush.msra.mxu0 0.0
    %196 = vmatpush.msra.mxu0 0.0
    %197 = vmatpush.msra.mxu0 0.0
    %198 = vmatpush.msra.mxu0 0.0
    %199 = vmatpush.msra.mxu0 0.0
    %200 = vmatpush.msra.mxu0 0.0
    %201 = vmatpush.msra.mxu0 0.0
    %202 = vmatpush.msra.mxu0 %v160
    %203 = vmatpush.msra.mxu0 %v159
    %204 = vmatpush.msra.mxu0 %v158
    %205 = vmatpush.msra.mxu0 %v157
    %206 = vmatmul.f32.gmra.mxu0 %v167
    %v207 = vpop.f32.mrf.mxu0
    %v208 = vadd.f32 %v163, %v207
    %209 = vmatmul.f32.gmra.mxu0 %v170
    %v210 = vpop.f32.mrf.mxu0
    %v211 = vadd.f32 %v163, %v210
    %212 = vmatmul.f32.gmra.mxu0 %v173
    %v213 = vpop.f32.mrf.mxu0
    %v214 = vadd.f32 %v163, %v213
    %215 = vmatmul.f32.gmra.mxu0 %v176
    %v216 = vpop.f32.mrf.mxu0
    %v217 = vadd.f32 %v163, %v216
    %218 = vmatmul.f32.gmra.mxu0 %v179
    %v219 = vpop.f32.mrf.mxu0
    %v220 = vadd.f32 %v163, %v219
    %221 = vmatmul.f32.gmra.mxu0 %v182
    %v222 = vpop.f32.mrf.mxu0
    %v223 = vadd.f32 %v163, %v222
    %224 = vmatmul.f32.gmra.mxu0 %v185
    %v225 = vpop.f32.mrf.mxu0
    %v226 = vadd.f32 %v163, %v225
    %227 = vmatmul.f32.gmra.mxu0 %v188
    %v228 = vpop.f32.mrf.mxu0
    %v229 = vadd.f32 %v163, %v228
    %230 = vdwg.mxu0
    %v231 = vld [vmem:[%s3] sm:$0xff]
    %v232 = vld [vmem:[%s3 + $0x8] sm:$0xff]
    %v233 = vld [vmem:[%s3 + $0x10] sm:$0xff]
    %v234 = vld [vmem:[%s3 + $0x18] sm:$0xff]
    %v235 = vld [vmem:[#allocation2] sm:$0x1]
    %v237 = vperm.slane %v235, 0
    %239 = vmatpush.msra.mxu0 0.0
    %240 = vmatpush.msra.mxu0 0.0
    %241 = vmatpush.msra.mxu0 0.0
    %242 = vmatpush.msra.mxu0 0.0
    %243 = vmatpush.msra.mxu0 0.0
    %244 = vmatpush.msra.mxu0 0.0
    %245 = vmatpush.msra.mxu0 0.0
    %246 = vmatpush.msra.mxu0 0.0
    %247 = vmatpush.msra.mxu0 0.0
    %248 = vmatpush.msra.mxu0 0.0
    %249 = vmatpush.msra.mxu0 0.0
    %250 = vmatpush.msra.mxu0 0.0
    %251 = vmatpush.msra.mxu0 %v234
    %252 = vmatpush.msra.mxu0 %v233
    %253 = vmatpush.msra.mxu0 %v232
    %254 = vmatpush.msra.mxu0 %v231
    %255 = vmatmul.f32.gmra.mxu0 %v167
    %v256 = vpop.f32.mrf.mxu0
    %v257 = vadd.f32 %v237, %v256
    %258 = vmatmul.f32.gmra.mxu0 %v170
    %v259 = vpop.f32.mrf.mxu0
    %v260 = vadd.f32 %v237, %v259
    %261 = vmatmul.f32.gmra.mxu0 %v173
    %v262 = vpop.f32.mrf.mxu0
    %v263 = vadd.f32 %v237, %v262
    %264 = vmatmul.f32.gmra.mxu0 %v176
    %v265 = vpop.f32.mrf.mxu0
    %v266 = vadd.f32 %v237, %v265
    %267 = vmatmul.f32.gmra.mxu0 %v179
    %v268 = vpop.f32.mrf.mxu0
    %v269 = vadd.f32 %v237, %v268
    %270 = vmatmul.f32.gmra.mxu0 %v182
    %v271 = vpop.f32.mrf.mxu0
    %v272 = vadd.f32 %v237, %v271
    %273 = vmatmul.f32.gmra.mxu0 %v185
    %v274 = vpop.f32.mrf.mxu0
    %v275 = vadd.f32 %v237, %v274
    %276 = vmatmul.f32.gmra.mxu0 %v188
    %v277 = vpop.f32.mrf.mxu0
    %v278 = vadd.f32 %v237, %v277
    %279 = vdwg.mxu0
    %v280 = vld [vmem:[#allocation5] sm:$0xff]
    %v281 = vld [vmem:[#allocation5 + $0x8] sm:$0xff]
    %v282 = vld [vmem:[#allocation7] sm:$0xf]
    %v283 = vld [vmem:[%s7] sm:$0xff]
    %v284 = vld [vmem:[%s7 + $0x8] sm:$0xff]
    %v285 = vld [vmem:[%s7 + $0x10] sm:$0xff]
    %v286 = vld [vmem:[%s7 + $0x18] sm:$0xff]
    %v287 = vld [vmem:[#allocation8] sm:$0xff]
    %v288 = vld [vmem:[#allocation10] sm:$0xff]
    %v289 = vld [vmem:[#allocation10 + $0x8] sm:$0xff]
    %v290 = vld [vmem:[#allocation11] sm:$0xf]
    %v291 = vld [vmem:[#allocation13] sm:$0xff]
    %v292 = vld [vmem:[#allocation13 + $0x8] sm:$0xff]
    %v293 = vld [vmem:[#allocation13 + $0x10] sm:$0xff]
    %v294 = vld [vmem:[#allocation13 + $0x18] sm:$0xff]
    %v295 = vld [vmem:[%s12] sm:$0xff]
    %v297 = vsel %vm165, %v208, 0
    %v300 = vsel %vm165, %v211, 0
    %v303 = vsel %vm165, %v257, 0
    %v306 = vsel %vm165, %v260, 0
    %308 = vmatpush.xpose.msra.mxu0 0.0
    %309 = vmatpush.xpose.msra.mxu0 0.0
    %310 = vmatpush.xpose.msra.mxu0 0.0
    %311 = vmatpush.xpose.msra.mxu0 0.0
    %312 = vmatpush.xpose.msra.mxu0 0.0
    %313 = vmatpush.xpose.msra.mxu0 0.0
    %314 = vmatpush.xpose.msra.mxu0 0.0
    %315 = vmatpush.xpose.msra.mxu0 0.0
    %316 = vmatpush.xpose.msra.mxu0 0.0
    %317 = vmatpush.xpose.msra.mxu0 0.0
    %318 = vmatpush.xpose.msra.mxu0 0.0
    %319 = vmatpush.xpose.msra.mxu0 0.0
    %320 = vmatpush.xpose.msra.mxu0 0.0
    %321 = vmatpush.xpose.msra.mxu0 0.0
    %322 = vmatpush.xpose.msra.mxu0 %v306
    %323 = vmatpush.xpose.msra.mxu0 %v303
    %324 = vmatmul.f32.gmra.mxu0 %v297
    %v325 = vpop.f32.mrf.mxu0
    %v326 = vadd.f32 0.0, %v325
    %327 = vmatmul.f32.gmra.mxu0 %v300
    %v328 = vpop.f32.mrf.mxu0
    %v329 = vadd.f32 0.0, %v328
    %330 = vdwg.mxu0
    %v331 = vmul.f32 %v326, 0.17677669
    %v332 = vmul.f32 %v329, 0.17677669
    %v333 = vadd.f32 %v331, %v280
    %v334 = vadd.f32 %v332, %v281
    %vm335 = vcmask 130048
    %v336 = vsel %vm335, %v333, -inf
    %337 = vmax.xlane.f32.xlu0 %v336
    %v338 = vpop.xlane.xlu0 %337
    %v339 = vsel %vm335, %v334, -inf
    %340 = vmax.xlane.f32.xlu0 %v339
    %v341 = vpop.xlane.xlu0 %340
    %v342 = vsub.f32 %v333, %v338
    %v343 = vsub.f32 %v334, %v341
    %v344 = vmul.f32 %v342, 1.442695
    %v345 = vpow.pop %v344
    %v346 = vmul.f32 %v343, 1.442695
    %v347 = vpow.pop %v346
    %v348 = vsel %vm335, %v345, 0.0
    %349 = vadd.xlane.f32.xlu0 %v348
    %v350 = vpop.xlane.xlu0 %349
    %v351 = vsel %vm335, %v347, 0.0
    %352 = vadd.xlane.f32.xlu0 %v351
    %v353 = vpop.xlane.xlu0 %352
    %v354 = vrcp.pop %v350
    %v355 = vmul.f32 %v350, %v354
    %v356 = vsub.f32 1.0, %v355
    %v357 = vmul.f32 %v354, %v356
    %v358 = vadd.f32 %v354, %v357
    %vm359 = vweird.f32 %v350
    %vm360 = vweird.f32 %v354
    %vm361 = vmor %vm359, %vm360
    %v362 = vsel %vm361, %v354, %v358
    %v363 = vand.u32 2147483647, %v350
    %vm364 = vcmp.eq.f32.partialorder %v363, 8.507059e+37
    %v365 = vand.u32 %v350, 2147483648
    %v366 = vor.u32 1.1754944e-38, %v365
    %v367 = vsel %vm364, %v366, %v362
    %v368 = vmul.f32 %v345, %v367
    %v369 = vrcp.pop %v353
    %v370 = vmul.f32 %v353, %v369
    %v371 = vsub.f32 1.0, %v370
    %v372 = vmul.f32 %v369, %v371
    %v373 = vadd.f32 %v369, %v372
    %vm374 = vweird.f32 %v353
    %vm375 = vweird.f32 %v369
    %vm376 = vmor %vm374, %vm375
    %v377 = vsel %vm376, %v369, %v373
    %v378 = vand.u32 2147483647, %v353
    %vm379 = vcmp.eq.f32.partialorder %v378, 8.507059e+37
    %v380 = vand.u32 %v353, 2147483648
    %v381 = vor.u32 1.1754944e-38, %v380
    %v382 = vsel %vm379, %v381, %v377
    %v383 = vmul.f32 %v347, %v382
    %v385 = vsel %vm335, %v282, 0
    %387 = vmatpush.msra.mxu0 0.0
    %388 = vmatpush.msra.mxu0 0.0
    %389 = vmatpush.msra.mxu0 0.0
    %390 = vmatpush.msra.mxu0 0.0
    %391 = vmatpush.msra.mxu0 0.0
    %392 = vmatpush.msra.mxu0 0.0
    %393 = vmatpush.msra.mxu0 0.0
    %394 = vmatpush.msra.mxu0 0.0
    %395 = vmatpush.msra.mxu0 0.0
    %396 = vmatpush.msra.mxu0 0.0
    %397 = vmatpush.msra.mxu0 0.0
    %398 = vmatpush.msra.mxu0 0.0
    %399 = vmatpush.msra.mxu0 0.0
    %400 = vmatpush.msra.mxu0 0.0
    %401 = vmatpush.msra.mxu0 %v383
    %402 = vmatpush.msra.mxu0 %v368
    %403 = vmatmul.f32.gmra.mxu0 %v385
    %v404 = vpop.f32.mrf.mxu0
    %v405 = vadd.f32 0.0, %v404
    %406 = vdwg.mxu0
    %v408 = vsel %vm335, %v405, 0
    %410 = vmatpush.msra.mxu0 0.0
    %411 = vmatpush.msra.mxu0 0.0
    %412 = vmatpush.msra.mxu0 0.0
    %413 = vmatpush.msra.mxu0 0.0
    %414 = vmatpush.msra.mxu0 0.0
    %415 = vmatpush.msra.mxu0 0.0
    %416 = vmatpush.msra.mxu0 0.0
    %417 = vmatpush.msra.mxu0 0.0
    %418 = vmatpush.msra.mxu0 0.0
    %419 = vmatpush.msra.mxu0 0.0
    %420 = vmatpush.msra.mxu0 0.0
    %421 = vmatpush.msra.mxu0 0.0
    %422 = vmatpush.msra.mxu0 0.0
    %423 = vmatpush.msra.mxu0 0.0
    %424 = vmatpush.msra.mxu0 %v285
    %425 = vmatpush.msra.mxu0 %v283
    %426 = vmatmul.f32.gmra.mxu0 %v408
    %v427 = vpop.f32.mrf.mxu0
    %v428 = vadd.f32 0.0, %v427
    %429 = vdwg.mxu0
    %430 = vmatpush.msra.mxu0 0.0
    %431 = vmatpush.msra.mxu0 0.0
    %432 = vmatpush.msra.mxu0 0.0
    %433 = vmatpush.msra.mxu0 0.0
    %434 = vmatpush.msra.mxu0 0.0
    %435 = vmatpush.msra.mxu0 0.0
    %436 = vmatpush.msra.mxu0 0.0
    %437 = vmatpush.msra.mxu0 0.0
    %438 = vmatpush.msra.mxu0 0.0
    %439 = vmatpush.msra.mxu0 0.0
    %440 = vmatpush.msra.mxu0 0.0
    %441 = vmatpush.msra.mxu0 0.0
    %442 = vmatpush.msra.mxu0 0.0
    %443 = vmatpush.msra.mxu0 0.0
    %444 = vmatpush.msra.mxu0 %v286
    %445 = vmatpush.msra.mxu0 %v284
    %446 = vmatmul.f32.gmra.mxu0 %v408
    %v447 = vpop.f32.mrf.mxu0
    %v448 = vadd.f32 0.0, %v447
    %449 = vdwg.mxu0
    %v452 = vrot.slane %v448, 4
    %vm453 = vcmask 1043456
    %v454 = vsel %vm453, %v428, %v452
    %v456 = vmul.f32 %v287, %v454
    %458 = vst [vmem:[#allocation1] ss:$2 sm:$0xff] %v456
    %v459 = vld.sshfl [vmem:[#allocation1] sm:$0xff pattern:$0x75316420]
    %v460 = vld.sshfl [vmem:[#allocation1 + $0x8] sm:$0xff pattern:$0x75316420]
    %v463 = vsel %vm453, %v459, 0.0
    %v464 = vrot.slane %v463, 4
    %v465 = vadd.f32 %v463, %v464
    %v466 = vrot.slane %v465, 2
    %v467 = vadd.f32 %v465, %v466
    %v468 = vrot.slane %v467, 1
    %v469 = vadd.f32 %v467, %v468
    %v470 = vsel %vm453, %v460, 0.0
    %v471 = vrot.slane %v470, 4
    %v472 = vadd.f32 %v470, %v471
    %v473 = vrot.slane %v472, 2
    %v474 = vadd.f32 %v472, %v473
    %v475 = vrot.slane %v474, 1
    %v476 = vadd.f32 %v474, %v475
    %v479 = vrot.slane %v476, 7
    %vm480 = vcmask 1040384
    %v481 = vsel %vm480, %v469, %v479
    %v483 = vlaneseq
    %vm484 = vcmp.ge.s32.totalorder %v483, 0
    %vm485 = vcmp.lt.s32.totalorder %v483, 256
    %vm486 = vmand %vm484, %vm485
    %487 = vst.msk [vmem:[#allocation14] sm:$0x3] %vm486, %v481
    %v489 = vsel %vm165, %v214, 0
    %v492 = vsel %vm165, %v217, 0
    %v495 = vsel %vm165, %v263, 0
    %v498 = vsel %vm165, %v266, 0
    %500 = vmatpush.xpose.msra.mxu0 0.0
    %501 = vmatpush.xpose.msra.mxu0 0.0
    %502 = vmatpush.xpose.msra.mxu0 0.0
    %503 = vmatpush.xpose.msra.mxu0 0.0
    %504 = vmatpush.xpose.msra.mxu0 0.0
    %505 = vmatpush.xpose.msra.mxu0 0.0
    %506 = vmatpush.xpose.msra.mxu0 0.0
    %507 = vmatpush.xpose.msra.mxu0 0.0
    %508 = vmatpush.xpose.msra.mxu0 0.0
    %509 = vmatpush.xpose.msra.mxu0 0.0
    %510 = vmatpush.xpose.msra.mxu0 0.0
    %511 = vmatpush.xpose.msra.mxu0 0.0
    %512 = vmatpush.xpose.msra.mxu0 0.0
    %513 = vmatpush.xpose.msra.mxu0 0.0
    %514 = vmatpush.xpose.msra.mxu0 %v498
    %515 = vmatpush.xpose.msra.mxu0 %v495
    %516 = vmatmul.f32.gmra.mxu0 %v489
    %v517 = vpop.f32.mrf.mxu0
    %v518 = vadd.f32 0.0, %v517
    %519 = vmatmul.f32.gmra.mxu0 %v492
    %v520 = vpop.f32.mrf.mxu0
    %v521 = vadd.f32 0.0, %v520
    %522 = vdwg.mxu0
    %v523 = vmul.f32 %v518, 0.17677669
    %v524 = vmul.f32 %v521, 0.17677669
    %v525 = vadd.f32 %v523, %v280
    %v526 = vadd.f32 %v524, %v281
    %v527 = vsel %vm335, %v525, -inf
    %528 = vmax.xlane.f32.xlu0 %v527
    %v529 = vpop.xlane.xlu0 %528
    %v530 = vsel %vm335, %v526, -inf
    %531 = vmax.xlane.f32.xlu0 %v530
    %v532 = vpop.xlane.xlu0 %531
    %v533 = vsub.f32 %v525, %v529
    %v534 = vsub.f32 %v526, %v532
    %v535 = vmul.f32 %v533, 1.442695
    %v536 = vpow.pop %v535
    %v537 = vmul.f32 %v534, 1.442695
    %v538 = vpow.pop %v537
    %v539 = vsel %vm335, %v536, 0.0
    %540 = vadd.xlane.f32.xlu0 %v539
    %v541 = vpop.xlane.xlu0 %540
    %v542 = vsel %vm335, %v538, 0.0
    %543 = vadd.xlane.f32.xlu0 %v542
    %v544 = vpop.xlane.xlu0 %543
    %v545 = vrcp.pop %v541
    %v546 = vmul.f32 %v541, %v545
    %v547 = vsub.f32 1.0, %v546
    %v548 = vmul.f32 %v545, %v547
    %v549 = vadd.f32 %v545, %v548
    %vm550 = vweird.f32 %v541
    %vm551 = vweird.f32 %v545
    %vm552 = vmor %vm550, %vm551
    %v553 = vsel %vm552, %v545, %v549
    %v554 = vand.u32 2147483647, %v541
    %vm555 = vcmp.eq.f32.partialorder %v554, 8.507059e+37
    %v556 = vand.u32 %v541, 2147483648
    %v557 = vor.u32 1.1754944e-38, %v556
    %v558 = vsel %vm555, %v557, %v553
    %v559 = vmul.f32 %v536, %v558
    %v560 = vrcp.pop %v544
    %v561 = vmul.f32 %v544, %v560
    %v562 = vsub.f32 1.0, %v561
    %v563 = vmul.f32 %v560, %v562
    %v564 = vadd.f32 %v560, %v563
    %vm565 = vweird.f32 %v544
    %vm566 = vweird.f32 %v560
    %vm567 = vmor %vm565, %vm566
    %v568 = vsel %vm567, %v560, %v564
    %v569 = vand.u32 2147483647, %v544
    %vm570 = vcmp.eq.f32.partialorder %v569, 8.507059e+37
    %v571 = vand.u32 %v544, 2147483648
    %v572 = vor.u32 1.1754944e-38, %v571
    %v573 = vsel %vm570, %v572, %v568
    %v574 = vmul.f32 %v538, %v573
    %575 = vmatpush.msra.mxu0 0.0
    %576 = vmatpush.msra.mxu0 0.0
    %577 = vmatpush.msra.mxu0 0.0
    %578 = vmatpush.msra.mxu0 0.0
    %579 = vmatpush.msra.mxu0 0.0
    %580 = vmatpush.msra.mxu0 0.0
    %581 = vmatpush.msra.mxu0 0.0
    %582 = vmatpush.msra.mxu0 0.0
    %583 = vmatpush.msra.mxu0 0.0
    %584 = vmatpush.msra.mxu0 0.0
    %585 = vmatpush.msra.mxu0 0.0
    %586 = vmatpush.msra.mxu0 0.0
    %587 = vmatpush.msra.mxu0 0.0
    %588 = vmatpush.msra.mxu0 0.0
    %589 = vmatpush.msra.mxu0 %v574
    %590 = vmatpush.msra.mxu0 %v559
    %591 = vmatmul.f32.gmra.mxu0 %v385
    %v592 = vpop.f32.mrf.mxu0
    %v593 = vadd.f32 0.0, %v592
    %594 = vdwg.mxu0
    %v596 = vsel %vm335, %v593, 0
    %598 = vmatpush.msra.mxu0 0.0
    %599 = vmatpush.msra.mxu0 0.0
    %600 = vmatpush.msra.mxu0 0.0
    %601 = vmatpush.msra.mxu0 0.0
    %602 = vmatpush.msra.mxu0 0.0
    %603 = vmatpush.msra.mxu0 0.0
    %604 = vmatpush.msra.mxu0 0.0
    %605 = vmatpush.msra.mxu0 0.0
    %606 = vmatpush.msra.mxu0 0.0
    %607 = vmatpush.msra.mxu0 0.0
    %608 = vmatpush.msra.mxu0 0.0
    %609 = vmatpush.msra.mxu0 0.0
    %610 = vmatpush.msra.mxu0 0.0
    %611 = vmatpush.msra.mxu0 0.0
    %612 = vmatpush.msra.mxu0 %v285
    %613 = vmatpush.msra.mxu0 %v283
    %614 = vmatmul.f32.gmra.mxu0 %v596
    %v615 = vpop.f32.mrf.mxu0
    %v616 = vadd.f32 0.0, %v615
    %617 = vdwg.mxu0
    %618 = vmatpush.msra.mxu0 0.0
    %619 = vmatpush.msra.mxu0 0.0
    %620 = vmatpush.msra.mxu0 0.0
    %621 = vmatpush.msra.mxu0 0.0
    %622 = vmatpush.msra.mxu0 0.0
    %623 = vmatpush.msra.mxu0 0.0
    %624 = vmatpush.msra.mxu0 0.0
    %625 = vmatpush.msra.mxu0 0.0
    %626 = vmatpush.msra.mxu0 0.0
    %627 = vmatpush.msra.mxu0 0.0
    %628 = vmatpush.msra.mxu0 0.0
    %629 = vmatpush.msra.mxu0 0.0
    %630 = vmatpush.msra.mxu0 0.0
    %631 = vmatpush.msra.mxu0 0.0
    %632 = vmatpush.msra.mxu0 %v286
    %633 = vmatpush.msra.mxu0 %v284
    %634 = vmatmul.f32.gmra.mxu0 %v596
    %v635 = vpop.f32.mrf.mxu0
    %v636 = vadd.f32 0.0, %v635
    %637 = vdwg.mxu0
    %v640 = vrot.slane %v636, 4
    %v641 = vsel %vm453, %v616, %v640
    %v643 = vmul.f32 %v287, %v641
    %645 = vst [vmem:[#allocation1] ss:$2 sm:$0xff] %v643
    %v646 = vld.sshfl [vmem:[#allocation1] sm:$0xff pattern:$0x75316420]
    %v647 = vld.sshfl [vmem:[#allocation1 + $0x8] sm:$0xff pattern:$0x75316420]
    %v650 = vsel %vm453, %v646, 0.0
    %v651 = vrot.slane %v650, 4
    %v652 = vadd.f32 %v650, %v651
    %v653 = vrot.slane %v652, 2
    %v654 = vadd.f32 %v652, %v653
    %v655 = vrot.slane %v654, 1
    %v656 = vadd.f32 %v654, %v655
    %v657 = vsel %vm453, %v647, 0.0
    %v658 = vrot.slane %v657, 4
    %v659 = vadd.f32 %v657, %v658
    %v660 = vrot.slane %v659, 2
    %v661 = vadd.f32 %v659, %v660
    %v662 = vrot.slane %v661, 1
    %v663 = vadd.f32 %v661, %v662
    %v666 = vrot.slane %v663, 7
    %v667 = vsel %vm480, %v656, %v666
    %s669 = scalar_lea.vmem [#allocation14], 2
    %670 = vst.msk [vmem:[%s669] sm:$0x3] %vm486, %v667
    %v672 = vsel %vm165, %v220, 0
    %v675 = vsel %vm165, %v223, 0
    %v678 = vsel %vm165, %v269, 0
    %v681 = vsel %vm165, %v272, 0
    %683 = vmatpush.xpose.msra.mxu0 0.0
    %684 = vmatpush.xpose.msra.mxu0 0.0
    %685 = vmatpush.xpose.msra.mxu0 0.0
    %686 = vmatpush.xpose.msra.mxu0 0.0
    %687 = vmatpush.xpose.msra.mxu0 0.0
    %688 = vmatpush.xpose.msra.mxu0 0.0
    %689 = vmatpush.xpose.msra.mxu0 0.0
    %690 = vmatpush.xpose.msra.mxu0 0.0
    %691 = vmatpush.xpose.msra.mxu0 0.0
    %692 = vmatpush.xpose.msra.mxu0 0.0
    %693 = vmatpush.xpose.msra.mxu0 0.0
    %694 = vmatpush.xpose.msra.mxu0 0.0
    %695 = vmatpush.xpose.msra.mxu0 0.0
    %696 = vmatpush.xpose.msra.mxu0 0.0
    %697 = vmatpush.xpose.msra.mxu0 %v681
    %698 = vmatpush.xpose.msra.mxu0 %v678
    %699 = vmatmul.f32.gmra.mxu0 %v672
    %v700 = vpop.f32.mrf.mxu0
    %v701 = vadd.f32 0.0, %v700
    %702 = vmatmul.f32.gmra.mxu0 %v675
    %v703 = vpop.f32.mrf.mxu0
    %v704 = vadd.f32 0.0, %v703
    %705 = vdwg.mxu0
    %v706 = vmul.f32 %v701, 0.17677669
    %v707 = vmul.f32 %v704, 0.17677669
    %v708 = vadd.f32 %v706, %v288
    %v709 = vadd.f32 %v707, %v289
    %v710 = vsel %vm335, %v708, -inf
    %711 = vmax.xlane.f32.xlu0 %v710
    %v712 = vpop.xlane.xlu0 %711
    %v713 = vsel %vm335, %v709, -inf
    %714 = vmax.xlane.f32.xlu0 %v713
    %v715 = vpop.xlane.xlu0 %714
    %v716 = vsub.f32 %v708, %v712
    %v717 = vsub.f32 %v709, %v715
    %v718 = vmul.f32 %v716, 1.442695
    %v719 = vpow.pop %v718
    %v720 = vmul.f32 %v717, 1.442695
    %v721 = vpow.pop %v720
    %v722 = vsel %vm335, %v719, 0.0
    %723 = vadd.xlane.f32.xlu0 %v722
    %v724 = vpop.xlane.xlu0 %723
    %v725 = vsel %vm335, %v721, 0.0
    %726 = vadd.xlane.f32.xlu0 %v725
    %v727 = vpop.xlane.xlu0 %726
    %v728 = vrcp.pop %v724
    %v729 = vmul.f32 %v724, %v728
    %v730 = vsub.f32 1.0, %v729
    %v731 = vmul.f32 %v728, %v730
    %v732 = vadd.f32 %v728, %v731
    %vm733 = vweird.f32 %v724
    %vm734 = vweird.f32 %v728
    %vm735 = vmor %vm733, %vm734
    %v736 = vsel %vm735, %v728, %v732
    %v737 = vand.u32 2147483647, %v724
    %vm738 = vcmp.eq.f32.partialorder %v737, 8.507059e+37
    %v739 = vand.u32 %v724, 2147483648
    %v740 = vor.u32 1.1754944e-38, %v739
    %v741 = vsel %vm738, %v740, %v736
    %v742 = vmul.f32 %v719, %v741
    %v743 = vrcp.pop %v727
    %v744 = vmul.f32 %v727, %v743
    %v745 = vsub.f32 1.0, %v744
    %v746 = vmul.f32 %v743, %v745
    %v747 = vadd.f32 %v743, %v746
    %vm748 = vweird.f32 %v727
    %vm749 = vweird.f32 %v743
    %vm750 = vmor %vm748, %vm749
    %v751 = vsel %vm750, %v743, %v747
    %v752 = vand.u32 2147483647, %v727
    %vm753 = vcmp.eq.f32.partialorder %v752, 8.507059e+37
    %v754 = vand.u32 %v727, 2147483648
    %v755 = vor.u32 1.1754944e-38, %v754
    %v756 = vsel %vm753, %v755, %v751
    %v757 = vmul.f32 %v721, %v756
    %v759 = vsel %vm335, %v290, 0
    %761 = vmatpush.msra.mxu0 0.0
    %762 = vmatpush.msra.mxu0 0.0
    %763 = vmatpush.msra.mxu0 0.0
    %764 = vmatpush.msra.mxu0 0.0
    %765 = vmatpush.msra.mxu0 0.0
    %766 = vmatpush.msra.mxu0 0.0
    %767 = vmatpush.msra.mxu0 0.0
    %768 = vmatpush.msra.mxu0 0.0
    %769 = vmatpush.msra.mxu0 0.0
    %770 = vmatpush.msra.mxu0 0.0
    %771 = vmatpush.msra.mxu0 0.0
    %772 = vmatpush.msra.mxu0 0.0
    %773 = vmatpush.msra.mxu0 0.0
    %774 = vmatpush.msra.mxu0 0.0
    %775 = vmatpush.msra.mxu0 %v757
    %776 = vmatpush.msra.mxu0 %v742
    %777 = vmatmul.f32.gmra.mxu0 %v759
    %v778 = vpop.f32.mrf.mxu0
    %v779 = vadd.f32 0.0, %v778
    %780 = vdwg.mxu0
    %v782 = vsel %vm335, %v779, 0
    %784 = vmatpush.msra.mxu0 0.0
    %785 = vmatpush.msra.mxu0 0.0
    %786 = vmatpush.msra.mxu0 0.0
    %787 = vmatpush.msra.mxu0 0.0
    %788 = vmatpush.msra.mxu0 0.0
    %789 = vmatpush.msra.mxu0 0.0
    %790 = vmatpush.msra.mxu0 0.0
    %791 = vmatpush.msra.mxu0 0.0
    %792 = vmatpush.msra.mxu0 0.0
    %793 = vmatpush.msra.mxu0 0.0
    %794 = vmatpush.msra.mxu0 0.0
    %795 = vmatpush.msra.mxu0 0.0
    %796 = vmatpush.msra.mxu0 0.0
    %797 = vmatpush.msra.mxu0 0.0
    %798 = vmatpush.msra.mxu0 %v293
    %799 = vmatpush.msra.mxu0 %v291
    %800 = vmatmul.f32.gmra.mxu0 %v782
    %v801 = vpop.f32.mrf.mxu0
    %v802 = vadd.f32 0.0, %v801
    %803 = vdwg.mxu0
    %804 = vmatpush.msra.mxu0 0.0
    %805 = vmatpush.msra.mxu0 0.0
    %806 = vmatpush.msra.mxu0 0.0
    %807 = vmatpush.msra.mxu0 0.0
    %808 = vmatpush.msra.mxu0 0.0
    %809 = vmatpush.msra.mxu0 0.0
    %810 = vmatpush.msra.mxu0 0.0
    %811 = vmatpush.msra.mxu0 0.0
    %812 = vmatpush.msra.mxu0 0.0
    %813 = vmatpush.msra.mxu0 0.0
    %814 = vmatpush.msra.mxu0 0.0
    %815 = vmatpush.msra.mxu0 0.0
    %816 = vmatpush.msra.mxu0 0.0
    %817 = vmatpush.msra.mxu0 0.0
    %818 = vmatpush.msra.mxu0 %v294
    %819 = vmatpush.msra.mxu0 %v292
    %820 = vmatmul.f32.gmra.mxu0 %v782
    %v821 = vpop.f32.mrf.mxu0
    %v822 = vadd.f32 0.0, %v821
    %823 = vdwg.mxu0
    %v826 = vrot.slane %v822, 4
    %v827 = vsel %vm453, %v802, %v826
    %v829 = vmul.f32 %v295, %v827
    %831 = vst [vmem:[#allocation1] ss:$2 sm:$0xff] %v829
    %v832 = vld.sshfl [vmem:[#allocation1] sm:$0xff pattern:$0x75316420]
    %v833 = vld.sshfl [vmem:[#allocation1 + $0x8] sm:$0xff pattern:$0x75316420]
    %v836 = vsel %vm453, %v832, 0.0
    %v837 = vrot.slane %v836, 4
    %v838 = vadd.f32 %v836, %v837
    %v839 = vrot.slane %v838, 2
    %v840 = vadd.f32 %v838, %v839
    %v841 = vrot.slane %v840, 1
    %v842 = vadd.f32 %v840, %v841
    %v843 = vsel %vm453, %v833, 0.0
    %v844 = vrot.slane %v843, 4
    %v845 = vadd.f32 %v843, %v844
    %v846 = vrot.slane %v845, 2
    %v847 = vadd.f32 %v845, %v846
    %v848 = vrot.slane %v847, 1
    %v849 = vadd.f32 %v847, %v848
    %v852 = vrot.slane %v849, 7
    %v853 = vsel %vm480, %v842, %v852
    %855 = vst.msk [vmem:[#allocation15] sm:$0x3] %vm486, %v853
    %v857 = vsel %vm165, %v226, 0
    %v860 = vsel %vm165, %v229, 0
    %v863 = vsel %vm165, %v275, 0
    %v866 = vsel %vm165, %v278, 0
    %868 = vmatpush.xpose.msra.mxu0 0.0
    %869 = vmatpush.xpose.msra.mxu0 0.0
    %870 = vmatpush.xpose.msra.mxu0 0.0
    %871 = vmatpush.xpose.msra.mxu0 0.0
    %872 = vmatpush.xpose.msra.mxu0 0.0
    %873 = vmatpush.xpose.msra.mxu0 0.0
    %874 = vmatpush.xpose.msra.mxu0 0.0
    %875 = vmatpush.xpose.msra.mxu0 0.0
    %876 = vmatpush.xpose.msra.mxu0 0.0
    %877 = vmatpush.xpose.msra.mxu0 0.0
    %878 = vmatpush.xpose.msra.mxu0 0.0
    %879 = vmatpush.xpose.msra.mxu0 0.0
    %880 = vmatpush.xpose.msra.mxu0 0.0
    %881 = vmatpush.xpose.msra.mxu0 0.0
    %882 = vmatpush.xpose.msra.mxu0 %v866
    %883 = vmatpush.xpose.msra.mxu0 %v863
    %884 = vmatmul.f32.gmra.mxu0 %v857
    %v885 = vpop.f32.mrf.mxu0
    %v886 = vadd.f32 0.0, %v885
    %887 = vmatmul.f32.gmra.mxu0 %v860
    %v888 = vpop.f32.mrf.mxu0
    %v889 = vadd.f32 0.0, %v888
    %890 = vdwg.mxu0
    %v891 = vmul.f32 %v886, 0.17677669
    %v892 = vmul.f32 %v889, 0.17677669
    %v893 = vadd.f32 %v891, %v288
    %v894 = vadd.f32 %v892, %v289
    %v895 = vsel %vm335, %v893, -inf
    %896 = vmax.xlane.f32.xlu0 %v895
    %v897 = vpop.xlane.xlu0 %896
    %v898 = vsel %vm335, %v894, -inf
    %899 = vmax.xlane.f32.xlu0 %v898
    %v900 = vpop.xlane.xlu0 %899
    %v901 = vsub.f32 %v893, %v897
    %v902 = vsub.f32 %v894, %v900
    %v903 = vmul.f32 %v901, 1.442695
    %v904 = vpow.pop %v903
    %v905 = vmul.f32 %v902, 1.442695
    %v906 = vpow.pop %v905
    %v907 = vsel %vm335, %v904, 0.0
    %908 = vadd.xlane.f32.xlu0 %v907
    %v909 = vpop.xlane.xlu0 %908
    %v910 = vsel %vm335, %v906, 0.0
    %911 = vadd.xlane.f32.xlu0 %v910
    %v912 = vpop.xlane.xlu0 %911
    %v913 = vrcp.pop %v909
    %v914 = vmul.f32 %v909, %v913
    %v915 = vsub.f32 1.0, %v914
    %v916 = vmul.f32 %v913, %v915
    %v917 = vadd.f32 %v913, %v916
    %vm918 = vweird.f32 %v909
    %vm919 = vweird.f32 %v913
    %vm920 = vmor %vm918, %vm919
    %v921 = vsel %vm920, %v913, %v917
    %v922 = vand.u32 2147483647, %v909
    %vm923 = vcmp.eq.f32.partialorder %v922, 8.507059e+37
    %v924 = vand.u32 %v909, 2147483648
    %v925 = vor.u32 1.1754944e-38, %v924
    %v926 = vsel %vm923, %v925, %v921
    %v927 = vmul.f32 %v904, %v926
    %v928 = vrcp.pop %v912
    %v929 = vmul.f32 %v912, %v928
    %v930 = vsub.f32 1.0, %v929
    %v931 = vmul.f32 %v928, %v930
    %v932 = vadd.f32 %v928, %v931
    %vm933 = vweird.f32 %v912
    %vm934 = vweird.f32 %v928
    %vm935 = vmor %vm933, %vm934
    %v936 = vsel %vm935, %v928, %v932
    %v937 = vand.u32 2147483647, %v912
    %vm938 = vcmp.eq.f32.partialorder %v937, 8.507059e+37
    %v939 = vand.u32 %v912, 2147483648
    %v940 = vor.u32 1.1754944e-38, %v939
    %v941 = vsel %vm938, %v940, %v936
    %v942 = vmul.f32 %v906, %v941
    %943 = vmatpush.msra.mxu0 0.0
    %944 = vmatpush.msra.mxu0 0.0
    %945 = vmatpush.msra.mxu0 0.0
    %946 = vmatpush.msra.mxu0 0.0
    %947 = vmatpush.msra.mxu0 0.0
    %948 = vmatpush.msra.mxu0 0.0
    %949 = vmatpush.msra.mxu0 0.0
    %950 = vmatpush.msra.mxu0 0.0
    %951 = vmatpush.msra.mxu0 0.0
    %952 = vmatpush.msra.mxu0 0.0
    %953 = vmatpush.msra.mxu0 0.0
    %954 = vmatpush.msra.mxu0 0.0
    %955 = vmatpush.msra.mxu0 0.0
    %956 = vmatpush.msra.mxu0 0.0
    %957 = vmatpush.msra.mxu0 %v942
    %958 = vmatpush.msra.mxu0 %v927
    %959 = vmatmul.f32.gmra.mxu0 %v759
    %v960 = vpop.f32.mrf.mxu0
    %v961 = vadd.f32 0.0, %v960
    %962 = vdwg.mxu0
    %v964 = vsel %vm335, %v961, 0
    %966 = vmatpush.msra.mxu0 0.0
    %967 = vmatpush.msra.mxu0 0.0
    %968 = vmatpush.msra.mxu0 0.0
    %969 = vmatpush.msra.mxu0 0.0
    %970 = vmatpush.msra.mxu0 0.0
    %971 = vmatpush.msra.mxu0 0.0
    %972 = vmatpush.msra.mxu0 0.0
    %973 = vmatpush.msra.mxu0 0.0
    %974 = vmatpush.msra.mxu0 0.0
    %975 = vmatpush.msra.mxu0 0.0
    %976 = vmatpush.msra.mxu0 0.0
    %977 = vmatpush.msra.mxu0 0.0
    %978 = vmatpush.msra.mxu0 0.0
    %979 = vmatpush.msra.mxu0 0.0
    %980 = vmatpush.msra.mxu0 %v293
    %981 = vmatpush.msra.mxu0 %v291
    %982 = vmatmul.f32.gmra.mxu0 %v964
    %v983 = vpop.f32.mrf.mxu0
    %v984 = vadd.f32 0.0, %v983
    %985 = vdwg.mxu0
    %986 = vmatpush.msra.mxu0 0.0
    %987 = vmatpush.msra.mxu0 0.0
    %988 = vmatpush.msra.mxu0 0.0
    %989 = vmatpush.msra.mxu0 0.0
    %990 = vmatpush.msra.mxu0 0.0
    %991 = vmatpush.msra.mxu0 0.0
    %992 = vmatpush.msra.mxu0 0.0
    %993 = vmatpush.msra.mxu0 0.0
    %994 = vmatpush.msra.mxu0 0.0
    %995 = vmatpush.msra.mxu0 0.0
    %996 = vmatpush.msra.mxu0 0.0
    %997 = vmatpush.msra.mxu0 0.0
    %998 = vmatpush.msra.mxu0 0.0
    %999 = vmatpush.msra.mxu0 0.0
    %1000 = vmatpush.msra.mxu0 %v294
    %1001 = vmatpush.msra.mxu0 %v292
    %1002 = vmatmul.f32.gmra.mxu0 %v964
    %v1003 = vpop.f32.mrf.mxu0
    %v1004 = vadd.f32 0.0, %v1003
    %1005 = vdwg.mxu0
    %v1008 = vrot.slane %v1004, 4
    %v1009 = vsel %vm453, %v984, %v1008
    %v1011 = vmul.f32 %v295, %v1009
    %1013 = vst [vmem:[#allocation1] ss:$2 sm:$0xff] %v1011
    %v1014 = vld.sshfl [vmem:[#allocation1] sm:$0xff pattern:$0x75316420]
    %v1015 = vld.sshfl [vmem:[#allocation1 + $0x8] sm:$0xff pattern:$0x75316420]
    %v1018 = vsel %vm453, %v1014, 0.0
    %v1019 = vrot.slane %v1018, 4
    %v1020 = vadd.f32 %v1018, %v1019
    %v1021 = vrot.slane %v1020, 2
    %v1022 = vadd.f32 %v1020, %v1021
    %v1023 = vrot.slane %v1022, 1
    %v1024 = vadd.f32 %v1022, %v1023
    %v1025 = vsel %vm453, %v1015, 0.0
    %v1026 = vrot.slane %v1025, 4
    %v1027 = vadd.f32 %v1025, %v1026
    %v1028 = vrot.slane %v1027, 2
    %v1029 = vadd.f32 %v1027, %v1028
    %v1030 = vrot.slane %v1029, 1
    %v1031 = vadd.f32 %v1029, %v1030
    %v1034 = vrot.slane %v1031, 7
    %v1035 = vsel %vm480, %v1024, %v1034
    %s1037 = scalar_lea.vmem [#allocation15], 2
    %1038 = vst.msk [vmem:[%s1037] sm:$0x3] %vm486, %v1035
    %1039 = vrot.lane.b32.xlu0 %v208, 96
    %v1040 = vpop.permute.xlu0 %1039
    %1041 = vrot.lane.b32.xlu0 %v211, 96
    %v1042 = vpop.permute.xlu0 %1041
    %1043 = vrot.lane.b32.xlu0 %v257, 96
    %v1044 = vpop.permute.xlu0 %1043
    %1045 = vrot.lane.b32.xlu0 %v260, 96
    %v1046 = vpop.permute.xlu0 %1045
    %v1047 = vsel %vm165, %v1040, 0
    %v1049 = vsel %vm165, %v1042, 0
    %v1051 = vsel %vm165, %v1044, 0
    %v1053 = vsel %vm165, %v1046, 0
    %1055 = vmatpush.xpose.msra.mxu0 0.0
    %1056 = vmatpush.xpose.msra.mxu0 0.0
    %1057 = vmatpush.xpose.msra.mxu0 0.0
    %1058 = vmatpush.xpose.msra.mxu0 0.0
    %1059 = vmatpush.xpose.msra.mxu0 0.0
    %1060 = vmatpush.xpose.msra.mxu0 0.0
    %1061 = vmatpush.xpose.msra.mxu0 0.0
    %1062 = vmatpush.xpose.msra.mxu0 0.0
    %1063 = vmatpush.xpose.msra.mxu0 0.0
    %1064 = vmatpush.xpose.msra.mxu0 0.0
    %1065 = vmatpush.xpose.msra.mxu0 0.0
    %1066 = vmatpush.xpose.msra.mxu0 0.0
    %1067 = vmatpush.xpose.msra.mxu0 0.0
    %1068 = vmatpush.xpose.msra.mxu0 0.0
    %1069 = vmatpush.xpose.msra.mxu0 %v1053
    %1070 = vmatpush.xpose.msra.mxu0 %v1051
    %1071 = vmatmul.f32.gmra.mxu0 %v1047
    %v1072 = vpop.f32.mrf.mxu0
    %v1073 = vadd.f32 0.0, %v1072
    %1074 = vmatmul.f32.gmra.mxu0 %v1049
    %v1075 = vpop.f32.mrf.mxu0
    %v1076 = vadd.f32 0.0, %v1075
    %1077 = vdwg.mxu0
    %v1078 = vmul.f32 %v1073, 0.17677669
    %v1079 = vmul.f32 %v1076, 0.17677669
    %v1080 = vadd.f32 %v1078, %v280
    %v1081 = vadd.f32 %v1079, %v281
    %v1082 = vsel %vm335, %v1080, -inf
    %1083 = vmax.xlane.f32.xlu0 %v1082
    %v1084 = vpop.xlane.xlu0 %1083
    %v1085 = vsel %vm335, %v1081, -inf
    %1086 = vmax.xlane.f32.xlu0 %v1085
    %v1087 = vpop.xlane.xlu0 %1086
    %v1088 = vsub.f32 %v1080, %v1084
    %v1089 = vsub.f32 %v1081, %v1087
    %v1090 = vmul.f32 %v1088, 1.442695
    %v1091 = vpow.pop %v1090
    %v1092 = vmul.f32 %v1089, 1.442695
    %v1093 = vpow.pop %v1092
    %v1094 = vsel %vm335, %v1091, 0.0
    %1095 = vadd.xlane.f32.xlu0 %v1094
    %v1096 = vpop.xlane.xlu0 %1095
    %v1097 = vsel %vm335, %v1093, 0.0
    %1098 = vadd.xlane.f32.xlu0 %v1097
    %v1099 = vpop.xlane.xlu0 %1098
    %v1100 = vrcp.pop %v1096
    %v1101 = vmul.f32 %v1096, %v1100
    %v1102 = vsub.f32 1.0, %v1101
    %v1103 = vmul.f32 %v1100, %v1102
    %v1104 = vadd.f32 %v1100, %v1103
    %vm1105 = vweird.f32 %v1096
    %vm1106 = vweird.f32 %v1100
    %vm1107 = vmor %vm1105, %vm1106
    %v1108 = vsel %vm1107, %v1100, %v1104
    %v1109 = vand.u32 2147483647, %v1096
    %vm1110 = vcmp.eq.f32.partialorder %v1109, 8.507059e+37
    %v1111 = vand.u32 %v1096, 2147483648
    %v1112 = vor.u32 1.1754944e-38, %v1111
    %v1113 = vsel %vm1110, %v1112, %v1108
    %v1114 = vmul.f32 %v1091, %v1113
    %v1115 = vrcp.pop %v1099
    %v1116 = vmul.f32 %v1099, %v1115
    %v1117 = vsub.f32 1.0, %v1116
    %v1118 = vmul.f32 %v1115, %v1117
    %v1119 = vadd.f32 %v1115, %v1118
    %vm1120 = vweird.f32 %v1099
    %vm1121 = vweird.f32 %v1115
    %vm1122 = vmor %vm1120, %vm1121
    %v1123 = vsel %vm1122, %v1115, %v1119
    %v1124 = vand.u32 2147483647, %v1099
    %vm1125 = vcmp.eq.f32.partialorder %v1124, 8.507059e+37
    %v1126 = vand.u32 %v1099, 2147483648
    %v1127 = vor.u32 1.1754944e-38, %v1126
    %v1128 = vsel %vm1125, %v1127, %v1123
    %v1129 = vmul.f32 %v1093, %v1128
    %1130 = vmatpush.msra.mxu0 0.0
    %1131 = vmatpush.msra.mxu0 0.0
    %1132 = vmatpush.msra.mxu0 0.0
    %1133 = vmatpush.msra.mxu0 0.0
    %1134 = vmatpush.msra.mxu0 0.0
    %1135 = vmatpush.msra.mxu0 0.0
    %1136 = vmatpush.msra.mxu0 0.0
    %1137 = vmatpush.msra.mxu0 0.0
    %1138 = vmatpush.msra.mxu0 0.0
    %1139 = vmatpush.msra.mxu0 0.0
    %1140 = vmatpush.msra.mxu0 0.0
    %1141 = vmatpush.msra.mxu0 0.0
    %1142 = vmatpush.msra.mxu0 0.0
    %1143 = vmatpush.msra.mxu0 0.0
    %1144 = vmatpush.msra.mxu0 %v1129
    %1145 = vmatpush.msra.mxu0 %v1114
    %1146 = vmatmul.f32.gmra.mxu0 %v385
    %v1147 = vpop.f32.mrf.mxu0
    %v1148 = vadd.f32 0.0, %v1147
    %1149 = vdwg.mxu0
    %v1151 = vsel %vm335, %v1148, 0
    %1153 = vmatpush.msra.mxu0 0.0
    %1154 = vmatpush.msra.mxu0 0.0
    %1155 = vmatpush.msra.mxu0 0.0
    %1156 = vmatpush.msra.mxu0 0.0
    %1157 = vmatpush.msra.mxu0 0.0
    %1158 = vmatpush.msra.mxu0 0.0
    %1159 = vmatpush.msra.mxu0 0.0
    %1160 = vmatpush.msra.mxu0 0.0
    %1161 = vmatpush.msra.mxu0 0.0
    %1162 = vmatpush.msra.mxu0 0.0
    %1163 = vmatpush.msra.mxu0 0.0
    %1164 = vmatpush.msra.mxu0 0.0
    %1165 = vmatpush.msra.mxu0 0.0
    %1166 = vmatpush.msra.mxu0 0.0
    %1167 = vmatpush.msra.mxu0 %v285
    %1168 = vmatpush.msra.mxu0 %v283
    %1169 = vmatmul.f32.gmra.mxu0 %v1151
    %v1170 = vpop.f32.mrf.mxu0
    %v1171 = vadd.f32 0.0, %v1170
    %1172 = vdwg.mxu0
    %1173 = vmatpush.msra.mxu0 0.0
    %1174 = vmatpush.msra.mxu0 0.0
    %1175 = vmatpush.msra.mxu0 0.0
    %1176 = vmatpush.msra.mxu0 0.0
    %1177 = vmatpush.msra.mxu0 0.0
    %1178 = vmatpush.msra.mxu0 0.0
    %1179 = vmatpush.msra.mxu0 0.0
    %1180 = vmatpush.msra.mxu0 0.0
    %1181 = vmatpush.msra.mxu0 0.0
    %1182 = vmatpush.msra.mxu0 0.0
    %1183 = vmatpush.msra.mxu0 0.0
    %1184 = vmatpush.msra.mxu0 0.0
    %1185 = vmatpush.msra.mxu0 0.0
    %1186 = vmatpush.msra.mxu0 0.0
    %1187 = vmatpush.msra.mxu0 %v286
    %1188 = vmatpush.msra.mxu0 %v284
    %1189 = vmatmul.f32.gmra.mxu0 %v1151
    %v1190 = vpop.f32.mrf.mxu0
    %v1191 = vadd.f32 0.0, %v1190
    %1192 = vdwg.mxu0
    %v1195 = vrot.slane %v1191, 4
    %v1196 = vsel %vm453, %v1171, %v1195
    %v1198 = vmul.f32 %v287, %v1196
    %1200 = vst [vmem:[#allocation1] ss:$2 sm:$0xff] %v1198
    %v1201 = vld.sshfl [vmem:[#allocation1] sm:$0xff pattern:$0x75316420]
    %v1202 = vld.sshfl [vmem:[#allocation1 + $0x8] sm:$0xff pattern:$0x75316420]
    %v1205 = vsel %vm453, %v1201, 0.0
    %v1206 = vrot.slane %v1205, 4
    %v1207 = vadd.f32 %v1205, %v1206
    %v1208 = vrot.slane %v1207, 2
    %v1209 = vadd.f32 %v1207, %v1208
    %v1210 = vrot.slane %v1209, 1
    %v1211 = vadd.f32 %v1209, %v1210
    %v1212 = vsel %vm453, %v1202, 0.0
    %v1213 = vrot.slane %v1212, 4
    %v1214 = vadd.f32 %v1212, %v1213
    %v1215 = vrot.slane %v1214, 2
    %v1216 = vadd.f32 %v1214, %v1215
    %v1217 = vrot.slane %v1216, 1
    %v1218 = vadd.f32 %v1216, %v1217
    %v1221 = vrot.slane %v1218, 7
    %v1222 = vsel %vm480, %v1211, %v1221
    %s1224 = scalar_lea.vmem [#allocation14], 4
    %1225 = vst.msk [vmem:[%s1224] sm:$0x3] %vm486, %v1222
    %1226 = vrot.lane.b32.xlu0 %v214, 96
    %v1227 = vpop.permute.xlu0 %1226
    %1228 = vrot.lane.b32.xlu0 %v217, 96
    %v1229 = vpop.permute.xlu0 %1228
    %1230 = vrot.lane.b32.xlu0 %v263, 96
    %v1231 = vpop.permute.xlu0 %1230
    %1232 = vrot.lane.b32.xlu0 %v266, 96
    %v1233 = vpop.permute.xlu0 %1232
    %v1234 = vsel %vm165, %v1227, 0
    %v1236 = vsel %vm165, %v1229, 0
    %v1238 = vsel %vm165, %v1231, 0
    %v1240 = vsel %vm165, %v1233, 0
    %1242 = vmatpush.xpose.msra.mxu0 0.0
    %1243 = vmatpush.xpose.msra.mxu0 0.0
    %1244 = vmatpush.xpose.msra.mxu0 0.0
    %1245 = vmatpush.xpose.msra.mxu0 0.0
    %1246 = vmatpush.xpose.msra.mxu0 0.0
    %1247 = vmatpush.xpose.msra.mxu0 0.0
    %1248 = vmatpush.xpose.msra.mxu0 0.0
    %1249 = vmatpush.xpose.msra.mxu0 0.0
    %1250 = vmatpush.xpose.msra.mxu0 0.0
    %1251 = vmatpush.xpose.msra.mxu0 0.0
    %1252 = vmatpush.xpose.msra.mxu0 0.0
    %1253 = vmatpush.xpose.msra.mxu0 0.0
    %1254 = vmatpush.xpose.msra.mxu0 0.0
    %1255 = vmatpush.xpose.msra.mxu0 0.0
    %1256 = vmatpush.xpose.msra.mxu0 %v1240
    %1257 = vmatpush.xpose.msra.mxu0 %v1238
    %1258 = vmatmul.f32.gmra.mxu0 %v1234
    %v1259 = vpop.f32.mrf.mxu0
    %v1260 = vadd.f32 0.0, %v1259
    %1261 = vmatmul.f32.gmra.mxu0 %v1236
    %v1262 = vpop.f32.mrf.mxu0
    %v1263 = vadd.f32 0.0, %v1262
    %1264 = vdwg.mxu0
    %v1265 = vmul.f32 %v1260, 0.17677669
    %v1266 = vmul.f32 %v1263, 0.17677669
    %v1267 = vadd.f32 %v1265, %v280
    %v1268 = vadd.f32 %v1266, %v281
    %v1269 = vsel %vm335, %v1267, -inf
    %1270 = vmax.xlane.f32.xlu0 %v1269
    %v1271 = vpop.xlane.xlu0 %1270
    %v1272 = vsel %vm335, %v1268, -inf
    %1273 = vmax.xlane.f32.xlu0 %v1272
    %v1274 = vpop.xlane.xlu0 %1273
    %v1275 = vsub.f32 %v1267, %v1271
    %v1276 = vsub.f32 %v1268, %v1274
    %v1277 = vmul.f32 %v1275, 1.442695
    %v1278 = vpow.pop %v1277
    %v1279 = vmul.f32 %v1276, 1.442695
    %v1280 = vpow.pop %v1279
    %v1281 = vsel %vm335, %v1278, 0.0
    %1282 = vadd.xlane.f32.xlu0 %v1281
    %v1283 = vpop.xlane.xlu0 %1282
    %v1284 = vsel %vm335, %v1280, 0.0
    %1285 = vadd.xlane.f32.xlu0 %v1284
    %v1286 = vpop.xlane.xlu0 %1285
    %v1287 = vrcp.pop %v1283
    %v1288 = vmul.f32 %v1283, %v1287
    %v1289 = vsub.f32 1.0, %v1288
    %v1290 = vmul.f32 %v1287, %v1289
    %v1291 = vadd.f32 %v1287, %v1290
    %vm1292 = vweird.f32 %v1283
    %vm1293 = vweird.f32 %v1287
    %vm1294 = vmor %vm1292, %vm1293
    %v1295 = vsel %vm1294, %v1287, %v1291
    %v1296 = vand.u32 2147483647, %v1283
    %vm1297 = vcmp.eq.f32.partialorder %v1296, 8.507059e+37
    %v1298 = vand.u32 %v1283, 2147483648
    %v1299 = vor.u32 1.1754944e-38, %v1298
    %v1300 = vsel %vm1297, %v1299, %v1295
    %v1301 = vmul.f32 %v1278, %v1300
    %v1302 = vrcp.pop %v1286
    %v1303 = vmul.f32 %v1286, %v1302
    %v1304 = vsub.f32 1.0, %v1303
    %v1305 = vmul.f32 %v1302, %v1304
    %v1306 = vadd.f32 %v1302, %v1305
    %vm1307 = vweird.f32 %v1286
    %vm1308 = vweird.f32 %v1302
    %vm1309 = vmor %vm1307, %vm1308
    %v1310 = vsel %vm1309, %v1302, %v1306
    %v1311 = vand.u32 2147483647, %v1286
    %vm1312 = vcmp.eq.f32.partialorder %v1311, 8.507059e+37
    %v1313 = vand.u32 %v1286, 2147483648
    %v1314 = vor.u32 1.1754944e-38, %v1313
    %v1315 = vsel %vm1312, %v1314, %v1310
    %v1316 = vmul.f32 %v1280, %v1315
    %1317 = vmatpush.msra.mxu0 0.0
    %1318 = vmatpush.msra.mxu0 0.0
    %1319 = vmatpush.msra.mxu0 0.0
    %1320 = vmatpush.msra.mxu0 0.0
    %1321 = vmatpush.msra.mxu0 0.0
    %1322 = vmatpush.msra.mxu0 0.0
    %1323 = vmatpush.msra.mxu0 0.0
    %1324 = vmatpush.msra.mxu0 0.0
    %1325 = vmatpush.msra.mxu0 0.0
    %1326 = vmatpush.msra.mxu0 0.0
    %1327 = vmatpush.msra.mxu0 0.0
    %1328 = vmatpush.msra.mxu0 0.0
    %1329 = vmatpush.msra.mxu0 0.0
    %1330 = vmatpush.msra.mxu0 0.0
    %1331 = vmatpush.msra.mxu0 %v1316
    %1332 = vmatpush.msra.mxu0 %v1301
    %1333 = vmatmul.f32.gmra.mxu0 %v385
    %v1334 = vpop.f32.mrf.mxu0
    %v1335 = vadd.f32 0.0, %v1334
    %1336 = vdwg.mxu0
    %v1338 = vsel %vm335, %v1335, 0
    %1340 = vmatpush.msra.mxu0 0.0
    %1341 = vmatpush.msra.mxu0 0.0
    %1342 = vmatpush.msra.mxu0 0.0
    %1343 = vmatpush.msra.mxu0 0.0
    %1344 = vmatpush.msra.mxu0 0.0
    %1345 = vmatpush.msra.mxu0 0.0
    %1346 = vmatpush.msra.mxu0 0.0
    %1347 = vmatpush.msra.mxu0 0.0
    %1348 = vmatpush.msra.mxu0 0.0
    %1349 = vmatpush.msra.mxu0 0.0
    %1350 = vmatpush.msra.mxu0 0.0
    %1351 = vmatpush.msra.mxu0 0.0
    %1352 = vmatpush.msra.mxu0 0.0
    %1353 = vmatpush.msra.mxu0 0.0
    %1354 = vmatpush.msra.mxu0 %v285
    %1355 = vmatpush.msra.mxu0 %v283
    %1356 = vmatmul.f32.gmra.mxu0 %v1338
    %v1357 = vpop.f32.mrf.mxu0
    %v1358 = vadd.f32 0.0, %v1357
    %1359 = vdwg.mxu0
    %1360 = vmatpush.msra.mxu0 0.0
    %1361 = vmatpush.msra.mxu0 0.0
    %1362 = vmatpush.msra.mxu0 0.0
    %1363 = vmatpush.msra.mxu0 0.0
    %1364 = vmatpush.msra.mxu0 0.0
    %1365 = vmatpush.msra.mxu0 0.0
    %1366 = vmatpush.msra.mxu0 0.0
    %1367 = vmatpush.msra.mxu0 0.0
    %1368 = vmatpush.msra.mxu0 0.0
    %1369 = vmatpush.msra.mxu0 0.0
    %1370 = vmatpush.msra.mxu0 0.0
    %1371 = vmatpush.msra.mxu0 0.0
    %1372 = vmatpush.msra.mxu0 0.0
    %1373 = vmatpush.msra.mxu0 0.0
    %1374 = vmatpush.msra.mxu0 %v286
    %1375 = vmatpush.msra.mxu0 %v284
    %1376 = vmatmul.f32.gmra.mxu0 %v1338
    %v1377 = vpop.f32.mrf.mxu0
    %v1378 = vadd.f32 0.0, %v1377
    %1379 = vdwg.mxu0
    %v1382 = vrot.slane %v1378, 4
    %v1383 = vsel %vm453, %v1358, %v1382
    %v1385 = vmul.f32 %v287, %v1383
    %1387 = vst [vmem:[#allocation1] ss:$2 sm:$0xff] %v1385
    %v1388 = vld.sshfl [vmem:[#allocation1] sm:$0xff pattern:$0x75316420]
    %v1389 = vld.sshfl [vmem:[#allocation1 + $0x8] sm:$0xff pattern:$0x75316420]
    %v1392 = vsel %vm453, %v1388, 0.0
    %v1393 = vrot.slane %v1392, 4
    %v1394 = vadd.f32 %v1392, %v1393
    %v1395 = vrot.slane %v1394, 2
    %v1396 = vadd.f32 %v1394, %v1395
    %v1397 = vrot.slane %v1396, 1
    %v1398 = vadd.f32 %v1396, %v1397
    %v1399 = vsel %vm453, %v1389, 0.0
    %v1400 = vrot.slane %v1399, 4
    %v1401 = vadd.f32 %v1399, %v1400
    %v1402 = vrot.slane %v1401, 2
    %v1403 = vadd.f32 %v1401, %v1402
    %v1404 = vrot.slane %v1403, 1
    %v1405 = vadd.f32 %v1403, %v1404
    %v1408 = vrot.slane %v1405, 7
    %v1409 = vsel %vm480, %v1398, %v1408
    %s1411 = scalar_lea.vmem [#allocation14], 6
    %1412 = vst.msk [vmem:[%s1411] sm:$0x3] %vm486, %v1409
    %1413 = vrot.lane.b32.xlu0 %v220, 96
    %v1414 = vpop.permute.xlu0 %1413
    %1415 = vrot.lane.b32.xlu0 %v223, 96
    %v1416 = vpop.permute.xlu0 %1415
    %1417 = vrot.lane.b32.xlu0 %v269, 96
    %v1418 = vpop.permute.xlu0 %1417
    %1419 = vrot.lane.b32.xlu0 %v272, 96
    %v1420 = vpop.permute.xlu0 %1419
    %v1421 = vsel %vm165, %v1414, 0
    %v1423 = vsel %vm165, %v1416, 0
    %v1425 = vsel %vm165, %v1418, 0
    %v1427 = vsel %vm165, %v1420, 0
    %1429 = vmatpush.xpose.msra.mxu0 0.0
    %1430 = vmatpush.xpose.msra.mxu0 0.0
    %1431 = vmatpush.xpose.msra.mxu0 0.0
    %1432 = vmatpush.xpose.msra.mxu0 0.0
    %1433 = vmatpush.xpose.msra.mxu0 0.0
    %1434 = vmatpush.xpose.msra.mxu0 0.0
    %1435 = vmatpush.xpose.msra.mxu0 0.0
    %1436 = vmatpush.xpose.msra.mxu0 0.0
    %1437 = vmatpush.xpose.msra.mxu0 0.0
    %1438 = vmatpush.xpose.msra.mxu0 0.0
    %1439 = vmatpush.xpose.msra.mxu0 0.0
    %1440 = vmatpush.xpose.msra.mxu0 0.0
    %1441 = vmatpush.xpose.msra.mxu0 0.0
    %1442 = vmatpush.xpose.msra.mxu0 0.0
    %1443 = vmatpush.xpose.msra.mxu0 %v1427
    %1444 = vmatpush.xpose.msra.mxu0 %v1425
    %1445 = vmatmul.f32.gmra.mxu0 %v1421
    %v1446 = vpop.f32.mrf.mxu0
    %v1447 = vadd.f32 0.0, %v1446
    %1448 = vmatmul.f32.gmra.mxu0 %v1423
    %v1449 = vpop.f32.mrf.mxu0
    %v1450 = vadd.f32 0.0, %v1449
    %1451 = vdwg.mxu0
    %v1452 = vmul.f32 %v1447, 0.17677669
    %v1453 = vmul.f32 %v1450, 0.17677669
    %v1454 = vadd.f32 %v1452, %v288
    %v1455 = vadd.f32 %v1453, %v289
    %v1456 = vsel %vm335, %v1454, -inf
    %1457 = vmax.xlane.f32.xlu0 %v1456
    %v1458 = vpop.xlane.xlu0 %1457
    %v1459 = vsel %vm335, %v1455, -inf
    %1460 = vmax.xlane.f32.xlu0 %v1459
    %v1461 = vpop.xlane.xlu0 %1460
    %v1462 = vsub.f32 %v1454, %v1458
    %v1463 = vsub.f32 %v1455, %v1461
    %v1464 = vmul.f32 %v1462, 1.442695
    %v1465 = vpow.pop %v1464
    %v1466 = vmul.f32 %v1463, 1.442695
    %v1467 = vpow.pop %v1466
    %v1468 = vsel %vm335, %v1465, 0.0
    %1469 = vadd.xlane.f32.xlu0 %v1468
    %v1470 = vpop.xlane.xlu0 %1469
    %v1471 = vsel %vm335, %v1467, 0.0
    %1472 = vadd.xlane.f32.xlu0 %v1471
    %v1473 = vpop.xlane.xlu0 %1472
    %v1474 = vrcp.pop %v1470
    %v1475 = vmul.f32 %v1470, %v1474
    %v1476 = vsub.f32 1.0, %v1475
    %v1477 = vmul.f32 %v1474, %v1476
    %v1478 = vadd.f32 %v1474, %v1477
    %vm1479 = vweird.f32 %v1470
    %vm1480 = vweird.f32 %v1474
    %vm1481 = vmor %vm1479, %vm1480
    %v1482 = vsel %vm1481, %v1474, %v1478
    %v1483 = vand.u32 2147483647, %v1470
    %vm1484 = vcmp.eq.f32.partialorder %v1483, 8.507059e+37
    %v1485 = vand.u32 %v1470, 2147483648
    %v1486 = vor.u32 1.1754944e-38, %v1485
    %v1487 = vsel %vm1484, %v1486, %v1482
    %v1488 = vmul.f32 %v1465, %v1487
    %v1489 = vrcp.pop %v1473
    %v1490 = vmul.f32 %v1473, %v1489
    %v1491 = vsub.f32 1.0, %v1490
    %v1492 = vmul.f32 %v1489, %v1491
    %v1493 = vadd.f32 %v1489, %v1492
    %vm1494 = vweird.f32 %v1473
    %vm1495 = vweird.f32 %v1489
    %vm1496 = vmor %vm1494, %vm1495
    %v1497 = vsel %vm1496, %v1489, %v1493
    %v1498 = vand.u32 2147483647, %v1473
    %vm1499 = vcmp.eq.f32.partialorder %v1498, 8.507059e+37
    %v1500 = vand.u32 %v1473, 2147483648
    %v1501 = vor.u32 1.1754944e-38, %v1500
    %v1502 = vsel %vm1499, %v1501, %v1497
    %v1503 = vmul.f32 %v1467, %v1502
    %1504 = vmatpush.msra.mxu0 0.0
    %1505 = vmatpush.msra.mxu0 0.0
    %1506 = vmatpush.msra.mxu0 0.0
    %1507 = vmatpush.msra.mxu0 0.0
    %1508 = vmatpush.msra.mxu0 0.0
    %1509 = vmatpush.msra.mxu0 0.0
    %1510 = vmatpush.msra.mxu0 0.0
    %1511 = vmatpush.msra.mxu0 0.0
    %1512 = vmatpush.msra.mxu0 0.0
    %1513 = vmatpush.msra.mxu0 0.0
    %1514 = vmatpush.msra.mxu0 0.0
    %1515 = vmatpush.msra.mxu0 0.0
    %1516 = vmatpush.msra.mxu0 0.0
    %1517 = vmatpush.msra.mxu0 0.0
    %1518 = vmatpush.msra.mxu0 %v1503
    %1519 = vmatpush.msra.mxu0 %v1488
    %1520 = vmatmul.f32.gmra.mxu0 %v759
    %v1521 = vpop.f32.mrf.mxu0
    %v1522 = vadd.f32 0.0, %v1521
    %1523 = vdwg.mxu0
    %v1525 = vsel %vm335, %v1522, 0
    %1527 = vmatpush.msra.mxu0 0.0
    %1528 = vmatpush.msra.mxu0 0.0
    %1529 = vmatpush.msra.mxu0 0.0
    %1530 = vmatpush.msra.mxu0 0.0
    %1531 = vmatpush.msra.mxu0 0.0
    %1532 = vmatpush.msra.mxu0 0.0
    %1533 = vmatpush.msra.mxu0 0.0
    %1534 = vmatpush.msra.mxu0 0.0
    %1535 = vmatpush.msra.mxu0 0.0
    %1536 = vmatpush.msra.mxu0 0.0
    %1537 = vmatpush.msra.mxu0 0.0
    %1538 = vmatpush.msra.mxu0 0.0
    %1539 = vmatpush.msra.mxu0 0.0
    %1540 = vmatpush.msra.mxu0 0.0
    %1541 = vmatpush.msra.mxu0 %v293
    %1542 = vmatpush.msra.mxu0 %v291
    %1543 = vmatmul.f32.gmra.mxu0 %v1525
    %v1544 = vpop.f32.mrf.mxu0
    %v1545 = vadd.f32 0.0, %v1544
    %1546 = vdwg.mxu0
    %1547 = vmatpush.msra.mxu0 0.0
    %1548 = vmatpush.msra.mxu0 0.0
    %1549 = vmatpush.msra.mxu0 0.0
    %1550 = vmatpush.msra.mxu0 0.0
    %1551 = vmatpush.msra.mxu0 0.0
    %1552 = vmatpush.msra.mxu0 0.0
    %1553 = vmatpush.msra.mxu0 0.0
    %1554 = vmatpush.msra.mxu0 0.0
    %1555 = vmatpush.msra.mxu0 0.0
    %1556 = vmatpush.msra.mxu0 0.0
    %1557 = vmatpush.msra.mxu0 0.0
    %1558 = vmatpush.msra.mxu0 0.0
    %1559 = vmatpush.msra.mxu0 0.0
    %1560 = vmatpush.msra.mxu0 0.0
    %1561 = vmatpush.msra.mxu0 %v294
    %1562 = vmatpush.msra.mxu0 %v292
    %1563 = vmatmul.f32.gmra.mxu0 %v1525
    %v1564 = vpop.f32.mrf.mxu0
    %v1565 = vadd.f32 0.0, %v1564
    %1566 = vdwg.mxu0
    %v1569 = vrot.slane %v1565, 4
    %v1570 = vsel %vm453, %v1545, %v1569
    %v1572 = vmul.f32 %v295, %v1570
    %1574 = vst [vmem:[#allocation1] ss:$2 sm:$0xff] %v1572
    %v1575 = vld.sshfl [vmem:[#allocation1] sm:$0xff pattern:$0x75316420]
    %v1576 = vld.sshfl [vmem:[#allocation1 + $0x8] sm:$0xff pattern:$0x75316420]
    %v1579 = vsel %vm453, %v1575, 0.0
    %v1580 = vrot.slane %v1579, 4
    %v1581 = vadd.f32 %v1579, %v1580
    %v1582 = vrot.slane %v1581, 2
    %v1583 = vadd.f32 %v1581, %v1582
    %v1584 = vrot.slane %v1583, 1
    %v1585 = vadd.f32 %v1583, %v1584
    %v1586 = vsel %vm453, %v1576, 0.0
    %v1587 = vrot.slane %v1586, 4
    %v1588 = vadd.f32 %v1586, %v1587
    %v1589 = vrot.slane %v1588, 2
    %v1590 = vadd.f32 %v1588, %v1589
    %v1591 = vrot.slane %v1590, 1
    %v1592 = vadd.f32 %v1590, %v1591
    %v1595 = vrot.slane %v1592, 7
    %v1596 = vsel %vm480, %v1585, %v1595
    %s1598 = scalar_lea.vmem [#allocation15], 4
    %1599 = vst.msk [vmem:[%s1598] sm:$0x3] %vm486, %v1596
    %1600 = vrot.lane.b32.xlu0 %v226, 96
    %v1601 = vpop.permute.xlu0 %1600
    %1602 = vrot.lane.b32.xlu0 %v229, 96
    %v1603 = vpop.permute.xlu0 %1602
    %1604 = vrot.lane.b32.xlu0 %v275, 96
    %v1605 = vpop.permute.xlu0 %1604
    %1606 = vrot.lane.b32.xlu0 %v278, 96
    %v1607 = vpop.permute.xlu0 %1606
    %v1608 = vsel %vm165, %v1601, 0
    %v1610 = vsel %vm165, %v1603, 0
    %v1612 = vsel %vm165, %v1605, 0
    %v1614 = vsel %vm165, %v1607, 0
    %1616 = vmatpush.xpose.msra.mxu0 0.0
    %1617 = vmatpush.xpose.msra.mxu0 0.0
    %1618 = vmatpush.xpose.msra.mxu0 0.0
    %1619 = vmatpush.xpose.msra.mxu0 0.0
    %1620 = vmatpush.xpose.msra.mxu0 0.0
    %1621 = vmatpush.xpose.msra.mxu0 0.0
    %1622 = vmatpush.xpose.msra.mxu0 0.0
    %1623 = vmatpush.xpose.msra.mxu0 0.0
    %1624 = vmatpush.xpose.msra.mxu0 0.0
    %1625 = vmatpush.xpose.msra.mxu0 0.0
    %1626 = vmatpush.xpose.msra.mxu0 0.0
    %1627 = vmatpush.xpose.msra.mxu0 0.0
    %1628 = vmatpush.xpose.msra.mxu0 0.0
    %1629 = vmatpush.xpose.msra.mxu0 0.0
    %1630 = vmatpush.xpose.msra.mxu0 %v1614
    %1631 = vmatpush.xpose.msra.mxu0 %v1612
    %1632 = vmatmul.f32.gmra.mxu0 %v1608
    %v1633 = vpop.f32.mrf.mxu0
    %v1634 = vadd.f32 0.0, %v1633
    %1635 = vmatmul.f32.gmra.mxu0 %v1610
    %v1636 = vpop.f32.mrf.mxu0
    %v1637 = vadd.f32 0.0, %v1636
    %1638 = vdwg.mxu0
    %v1639 = vmul.f32 %v1634, 0.17677669
    %v1640 = vmul.f32 %v1637, 0.17677669
    %v1641 = vadd.f32 %v1639, %v288
    %v1642 = vadd.f32 %v1640, %v289
    %v1643 = vsel %vm335, %v1641, -inf
    %1644 = vmax.xlane.f32.xlu0 %v1643
    %v1645 = vpop.xlane.xlu0 %1644
    %v1646 = vsel %vm335, %v1642, -inf
    %1647 = vmax.xlane.f32.xlu0 %v1646
    %v1648 = vpop.xlane.xlu0 %1647
    %v1649 = vsub.f32 %v1641, %v1645
    %v1650 = vsub.f32 %v1642, %v1648
    %v1651 = vmul.f32 %v1649, 1.442695
    %v1652 = vpow.pop %v1651
    %v1653 = vmul.f32 %v1650, 1.442695
    %v1654 = vpow.pop %v1653
    %v1655 = vsel %vm335, %v1652, 0.0
    %1656 = vadd.xlane.f32.xlu0 %v1655
    %v1657 = vpop.xlane.xlu0 %1656
    %v1658 = vsel %vm335, %v1654, 0.0
    %1659 = vadd.xlane.f32.xlu0 %v1658
    %v1660 = vpop.xlane.xlu0 %1659
    %v1661 = vrcp.pop %v1657
    %v1662 = vmul.f32 %v1657, %v1661
    %v1663 = vsub.f32 1.0, %v1662
    %v1664 = vmul.f32 %v1661, %v1663
    %v1665 = vadd.f32 %v1661, %v1664
    %vm1666 = vweird.f32 %v1657
    %vm1667 = vweird.f32 %v1661
    %vm1668 = vmor %vm1666, %vm1667
    %v1669 = vsel %vm1668, %v1661, %v1665
    %v1670 = vand.u32 2147483647, %v1657
    %vm1671 = vcmp.eq.f32.partialorder %v1670, 8.507059e+37
    %v1672 = vand.u32 %v1657, 2147483648
    %v1673 = vor.u32 1.1754944e-38, %v1672
    %v1674 = vsel %vm1671, %v1673, %v1669
    %v1675 = vmul.f32 %v1652, %v1674
    %v1676 = vrcp.pop %v1660
    %v1677 = vmul.f32 %v1660, %v1676
    %v1678 = vsub.f32 1.0, %v1677
    %v1679 = vmul.f32 %v1676, %v1678
    %v1680 = vadd.f32 %v1676, %v1679
    %vm1681 = vweird.f32 %v1660
    %vm1682 = vweird.f32 %v1676
    %vm1683 = vmor %vm1681, %vm1682
    %v1684 = vsel %vm1683, %v1676, %v1680
    %v1685 = vand.u32 2147483647, %v1660
    %vm1686 = vcmp.eq.f32.partialorder %v1685, 8.507059e+37
    %v1687 = vand.u32 %v1660, 2147483648
    %v1688 = vor.u32 1.1754944e-38, %v1687
    %v1689 = vsel %vm1686, %v1688, %v1684
    %v1690 = vmul.f32 %v1654, %v1689
    %1691 = vmatpush.msra.mxu0 0.0
    %1692 = vmatpush.msra.mxu0 0.0
    %1693 = vmatpush.msra.mxu0 0.0
    %1694 = vmatpush.msra.mxu0 0.0
    %1695 = vmatpush.msra.mxu0 0.0
    %1696 = vmatpush.msra.mxu0 0.0
    %1697 = vmatpush.msra.mxu0 0.0
    %1698 = vmatpush.msra.mxu0 0.0
    %1699 = vmatpush.msra.mxu0 0.0
    %1700 = vmatpush.msra.mxu0 0.0
    %1701 = vmatpush.msra.mxu0 0.0
    %1702 = vmatpush.msra.mxu0 0.0
    %1703 = vmatpush.msra.mxu0 0.0
    %1704 = vmatpush.msra.mxu0 0.0
    %1705 = vmatpush.msra.mxu0 %v1690
    %1706 = vmatpush.msra.mxu0 %v1675
    %1707 = vmatmul.f32.gmra.mxu0 %v759
    %v1708 = vpop.f32.mrf.mxu0
    %v1709 = vadd.f32 0.0, %v1708
    %1710 = vdwg.mxu0
    %v1712 = vsel %vm335, %v1709, 0
    %1714 = vmatpush.msra.mxu0 0.0
    %1715 = vmatpush.msra.mxu0 0.0
    %1716 = vmatpush.msra.mxu0 0.0
    %1717 = vmatpush.msra.mxu0 0.0
    %1718 = vmatpush.msra.mxu0 0.0
    %1719 = vmatpush.msra.mxu0 0.0
    %1720 = vmatpush.msra.mxu0 0.0
    %1721 = vmatpush.msra.mxu0 0.0
    %1722 = vmatpush.msra.mxu0 0.0
    %1723 = vmatpush.msra.mxu0 0.0
    %1724 = vmatpush.msra.mxu0 0.0
    %1725 = vmatpush.msra.mxu0 0.0
    %1726 = vmatpush.msra.mxu0 0.0
    %1727 = vmatpush.msra.mxu0 0.0
    %1728 = vmatpush.msra.mxu0 %v293
    %1729 = vmatpush.msra.mxu0 %v291
    %1730 = vmatmul.f32.gmra.mxu0 %v1712
    %v1731 = vpop.f32.mrf.mxu0
    %v1732 = vadd.f32 0.0, %v1731
    %1733 = vdwg.mxu0
    %1734 = vmatpush.msra.mxu0 0.0
    %1735 = vmatpush.msra.mxu0 0.0
    %1736 = vmatpush.msra.mxu0 0.0
    %1737 = vmatpush.msra.mxu0 0.0
    %1738 = vmatpush.msra.mxu0 0.0
    %1739 = vmatpush.msra.mxu0 0.0
    %1740 = vmatpush.msra.mxu0 0.0
    %1741 = vmatpush.msra.mxu0 0.0
    %1742 = vmatpush.msra.mxu0 0.0
    %1743 = vmatpush.msra.mxu0 0.0
    %1744 = vmatpush.msra.mxu0 0.0
    %1745 = vmatpush.msra.mxu0 0.0
    %1746 = vmatpush.msra.mxu0 0.0
    %1747 = vmatpush.msra.mxu0 0.0
    %1748 = vmatpush.msra.mxu0 %v294
    %1749 = vmatpush.msra.mxu0 %v292
    %1750 = vmatmul.f32.gmra.mxu0 %v1712
    %v1751 = vpop.f32.mrf.mxu0
    %v1752 = vadd.f32 0.0, %v1751
    %1753 = vdwg.mxu0
    %v1756 = vrot.slane %v1752, 4
    %v1757 = vsel %vm453, %v1732, %v1756
    %v1759 = vmul.f32 %v295, %v1757
    %1761 = vst [vmem:[#allocation1] ss:$2 sm:$0xff] %v1759
    %v1762 = vld.sshfl [vmem:[#allocation1] sm:$0xff pattern:$0x75316420]
    %v1763 = vld.sshfl [vmem:[#allocation1 + $0x8] sm:$0xff pattern:$0x75316420]
    %v1766 = vsel %vm453, %v1762, 0.0
    %v1767 = vrot.slane %v1766, 4
    %v1768 = vadd.f32 %v1766, %v1767
    %v1769 = vrot.slane %v1768, 2
    %v1770 = vadd.f32 %v1768, %v1769
    %v1771 = vrot.slane %v1770, 1
    %v1772 = vadd.f32 %v1770, %v1771
    %v1773 = vsel %vm453, %v1763, 0.0
    %v1774 = vrot.slane %v1773, 4
    %v1775 = vadd.f32 %v1773, %v1774
    %v1776 = vrot.slane %v1775, 2
    %v1777 = vadd.f32 %v1775, %v1776
    %v1778 = vrot.slane %v1777, 1
    %v1779 = vadd.f32 %v1777, %v1778
    %v1782 = vrot.slane %v1779, 7
    %v1783 = vsel %vm480, %v1772, %v1782
    %s1785 = scalar_lea.vmem [#allocation15], 6
    %1786 = vst.msk [vmem:[%s1785] sm:$0x3] %vm486, %v1783
    %1787 = vrot.lane.b32.xlu0 %v208, 64
    %v1788 = vpop.permute.xlu0 %1787
    %1789 = vrot.lane.b32.xlu0 %v211, 64
    %v1790 = vpop.permute.xlu0 %1789
    %1791 = vrot.lane.b32.xlu0 %v257, 64
    %v1792 = vpop.permute.xlu0 %1791
    %1793 = vrot.lane.b32.xlu0 %v260, 64
    %v1794 = vpop.permute.xlu0 %1793
    %v1795 = vsel %vm165, %v1788, 0
    %v1797 = vsel %vm165, %v1790, 0
    %v1799 = vsel %vm165, %v1792, 0
    %v1801 = vsel %vm165, %v1794, 0
    %1803 = vmatpush.xpose.msra.mxu0 0.0
    %1804 = vmatpush.xpose.msra.mxu0 0.0
    %1805 = vmatpush.xpose.msra.mxu0 0.0
    %1806 = vmatpush.xpose.msra.mxu0 0.0
    %1807 = vmatpush.xpose.msra.mxu0 0.0
    %1808 = vmatpush.xpose.msra.mxu0 0.0
    %1809 = vmatpush.xpose.msra.mxu0 0.0
    %1810 = vmatpush.xpose.msra.mxu0 0.0
    %1811 = vmatpush.xpose.msra.mxu0 0.0
    %1812 = vmatpush.xpose.msra.mxu0 0.0
    %1813 = vmatpush.xpose.msra.mxu0 0.0
    %1814 = vmatpush.xpose.msra.mxu0 0.0
    %1815 = vmatpush.xpose.msra.mxu0 0.0
    %1816 = vmatpush.xpose.msra.mxu0 0.0
    %1817 = vmatpush.xpose.msra.mxu0 %v1801
    %1818 = vmatpush.xpose.msra.mxu0 %v1799
    %1819 = vmatmul.f32.gmra.mxu0 %v1795
    %v1820 = vpop.f32.mrf.mxu0
    %v1821 = vadd.f32 0.0, %v1820
    %1822 = vmatmul.f32.gmra.mxu0 %v1797
    %v1823 = vpop.f32.mrf.mxu0
    %v1824 = vadd.f32 0.0, %v1823
    %1825 = vdwg.mxu0
    %v1826 = vmul.f32 %v1821, 0.17677669
    %v1827 = vmul.f32 %v1824, 0.17677669
    %v1828 = vadd.f32 %v1826, %v280
    %v1829 = vadd.f32 %v1827, %v281
    %v1830 = vsel %vm335, %v1828, -inf
    %1831 = vmax.xlane.f32.xlu0 %v1830
    %v1832 = vpop.xlane.xlu0 %1831
    %v1833 = vsel %vm335, %v1829, -inf
    %1834 = vmax.xlane.f32.xlu0 %v1833
    %v1835 = vpop.xlane.xlu0 %1834
    %v1836 = vsub.f32 %v1828, %v1832
    %v1837 = vsub.f32 %v1829, %v1835
    %v1838 = vmul.f32 %v1836, 1.442695
    %v1839 = vpow.pop %v1838
    %v1840 = vmul.f32 %v1837, 1.442695
    %v1841 = vpow.pop %v1840
    %v1842 = vsel %vm335, %v1839, 0.0
    %1843 = vadd.xlane.f32.xlu0 %v1842
    %v1844 = vpop.xlane.xlu0 %1843
    %v1845 = vsel %vm335, %v1841, 0.0
    %1846 = vadd.xlane.f32.xlu0 %v1845
    %v1847 = vpop.xlane.xlu0 %1846
    %v1848 = vrcp.pop %v1844
    %v1849 = vmul.f32 %v1844, %v1848
    %v1850 = vsub.f32 1.0, %v1849
    %v1851 = vmul.f32 %v1848, %v1850
    %v1852 = vadd.f32 %v1848, %v1851
    %vm1853 = vweird.f32 %v1844
    %vm1854 = vweird.f32 %v1848
    %vm1855 = vmor %vm1853, %vm1854
    %v1856 = vsel %vm1855, %v1848, %v1852
    %v1857 = vand.u32 2147483647, %v1844
    %vm1858 = vcmp.eq.f32.partialorder %v1857, 8.507059e+37
    %v1859 = vand.u32 %v1844, 2147483648
    %v1860 = vor.u32 1.1754944e-38, %v1859
    %v1861 = vsel %vm1858, %v1860, %v1856
    %v1862 = vmul.f32 %v1839, %v1861
    %v1863 = vrcp.pop %v1847
    %v1864 = vmul.f32 %v1847, %v1863
    %v1865 = vsub.f32 1.0, %v1864
    %v1866 = vmul.f32 %v1863, %v1865
    %v1867 = vadd.f32 %v1863, %v1866
    %vm1868 = vweird.f32 %v1847
    %vm1869 = vweird.f32 %v1863
    %vm1870 = vmor %vm1868, %vm1869
    %v1871 = vsel %vm1870, %v1863, %v1867
    %v1872 = vand.u32 2147483647, %v1847
    %vm1873 = vcmp.eq.f32.partialorder %v1872, 8.507059e+37
    %v1874 = vand.u32 %v1847, 2147483648
    %v1875 = vor.u32 1.1754944e-38, %v1874
    %v1876 = vsel %vm1873, %v1875, %v1871
    %v1877 = vmul.f32 %v1841, %v1876
    %1878 = vmatpush.msra.mxu0 0.0
    %1879 = vmatpush.msra.mxu0 0.0
    %1880 = vmatpush.msra.mxu0 0.0
    %1881 = vmatpush.msra.mxu0 0.0
    %1882 = vmatpush.msra.mxu0 0.0
    %1883 = vmatpush.msra.mxu0 0.0
    %1884 = vmatpush.msra.mxu0 0.0
    %1885 = vmatpush.msra.mxu0 0.0
    %1886 = vmatpush.msra.mxu0 0.0
    %1887 = vmatpush.msra.mxu0 0.0
    %1888 = vmatpush.msra.mxu0 0.0
    %1889 = vmatpush.msra.mxu0 0.0
    %1890 = vmatpush.msra.mxu0 0.0
    %1891 = vmatpush.msra.mxu0 0.0
    %1892 = vmatpush.msra.mxu0 %v1877
    %1893 = vmatpush.msra.mxu0 %v1862
    %1894 = vmatmul.f32.gmra.mxu0 %v385
    %v1895 = vpop.f32.mrf.mxu0
    %v1896 = vadd.f32 0.0, %v1895
    %1897 = vdwg.mxu0
    %v1899 = vsel %vm335, %v1896, 0
    %1901 = vmatpush.msra.mxu0 0.0
    %1902 = vmatpush.msra.mxu0 0.0
    %1903 = vmatpush.msra.mxu0 0.0
    %1904 = vmatpush.msra.mxu0 0.0
    %1905 = vmatpush.msra.mxu0 0.0
    %1906 = vmatpush.msra.mxu0 0.0
    %1907 = vmatpush.msra.mxu0 0.0
    %1908 = vmatpush.msra.mxu0 0.0
    %1909 = vmatpush.msra.mxu0 0.0
    %1910 = vmatpush.msra.mxu0 0.0
    %1911 = vmatpush.msra.mxu0 0.0
    %1912 = vmatpush.msra.mxu0 0.0
    %1913 = vmatpush.msra.mxu0 0.0
    %1914 = vmatpush.msra.mxu0 0.0
    %1915 = vmatpush.msra.mxu0 %v285
    %1916 = vmatpush.msra.mxu0 %v283
    %1917 = vmatmul.f32.gmra.mxu0 %v1899
    %v1918 = vpop.f32.mrf.mxu0
    %v1919 = vadd.f32 0.0, %v1918
    %1920 = vdwg.mxu0
    %1921 = vmatpush.msra.mxu0 0.0
    %1922 = vmatpush.msra.mxu0 0.0
    %1923 = vmatpush.msra.mxu0 0.0
    %1924 = vmatpush.msra.mxu0 0.0
    %1925 = vmatpush.msra.mxu0 0.0
    %1926 = vmatpush.msra.mxu0 0.0
    %1927 = vmatpush.msra.mxu0 0.0
    %1928 = vmatpush.msra.mxu0 0.0
    %1929 = vmatpush.msra.mxu0 0.0
    %1930 = vmatpush.msra.mxu0 0.0
    %1931 = vmatpush.msra.mxu0 0.0
    %1932 = vmatpush.msra.mxu0 0.0
    %1933 = vmatpush.msra.mxu0 0.0
    %1934 = vmatpush.msra.mxu0 0.0
    %1935 = vmatpush.msra.mxu0 %v286
    %1936 = vmatpush.msra.mxu0 %v284
    %1937 = vmatmul.f32.gmra.mxu0 %v1899
    %v1938 = vpop.f32.mrf.mxu0
    %v1939 = vadd.f32 0.0, %v1938
    %1940 = vdwg.mxu0
    %v1943 = vrot.slane %v1939, 4
    %v1944 = vsel %vm453, %v1919, %v1943
    %v1946 = vmul.f32 %v287, %v1944
    %1948 = vst [vmem:[#allocation1] ss:$2 sm:$0xff] %v1946
    %v1949 = vld.sshfl [vmem:[#allocation1] sm:$0xff pattern:$0x75316420]
    %v1950 = vld.sshfl [vmem:[#allocation1 + $0x8] sm:$0xff pattern:$0x75316420]
    %v1953 = vsel %vm453, %v1949, 0.0
    %v1954 = vrot.slane %v1953, 4
    %v1955 = vadd.f32 %v1953, %v1954
    %v1956 = vrot.slane %v1955, 2
    %v1957 = vadd.f32 %v1955, %v1956
    %v1958 = vrot.slane %v1957, 1
    %v1959 = vadd.f32 %v1957, %v1958
    %v1960 = vsel %vm453, %v1950, 0.0
    %v1961 = vrot.slane %v1960, 4
    %v1962 = vadd.f32 %v1960, %v1961
    %v1963 = vrot.slane %v1962, 2
    %v1964 = vadd.f32 %v1962, %v1963
    %v1965 = vrot.slane %v1964, 1
    %v1966 = vadd.f32 %v1964, %v1965
    %v1969 = vrot.slane %v1966, 7
    %v1970 = vsel %vm480, %v1959, %v1969
    %s1972 = scalar_lea.vmem [#allocation14], 8
    %1973 = vst.msk [vmem:[%s1972] sm:$0x3] %vm486, %v1970
    %1974 = vrot.lane.b32.xlu0 %v214, 64
    %v1975 = vpop.permute.xlu0 %1974
    %1976 = vrot.lane.b32.xlu0 %v217, 64
    %v1977 = vpop.permute.xlu0 %1976
    %1978 = vrot.lane.b32.xlu0 %v263, 64
    %v1979 = vpop.permute.xlu0 %1978
    %1980 = vrot.lane.b32.xlu0 %v266, 64
    %v1981 = vpop.permute.xlu0 %1980
    %v1982 = vsel %vm165, %v1975, 0
    %v1984 = vsel %vm165, %v1977, 0
    %v1986 = vsel %vm165, %v1979, 0
    %v1988 = vsel %vm165, %v1981, 0
    %1990 = vmatpush.xpose.msra.mxu0 0.0
    %1991 = vmatpush.xpose.msra.mxu0 0.0
    %1992 = vmatpush.xpose.msra.mxu0 0.0
    %1993 = vmatpush.xpose.msra.mxu0 0.0
    %1994 = vmatpush.xpose.msra.mxu0 0.0
    %1995 = vmatpush.xpose.msra.mxu0 0.0
    %1996 = vmatpush.xpose.msra.mxu0 0.0
    %1997 = vmatpush.xpose.msra.mxu0 0.0
    %1998 = vmatpush.xpose.msra.mxu0 0.0
    %1999 = vmatpush.xpose.msra.mxu0 0.0
    %2000 = vmatpush.xpose.msra.mxu0 0.0
    %2001 = vmatpush.xpose.msra.mxu0 0.0
    %2002 = vmatpush.xpose.msra.mxu0 0.0
    %2003 = vmatpush.xpose.msra.mxu0 0.0
    %2004 = vmatpush.xpose.msra.mxu0 %v1988
    %2005 = vmatpush.xpose.msra.mxu0 %v1986
    %2006 = vmatmul.f32.gmra.mxu0 %v1982
    %v2007 = vpop.f32.mrf.mxu0
    %v2008 = vadd.f32 0.0, %v2007
    %2009 = vmatmul.f32.gmra.mxu0 %v1984
    %v2010 = vpop.f32.mrf.mxu0
    %v2011 = vadd.f32 0.0, %v2010
    %2012 = vdwg.mxu0
    %v2013 = vmul.f32 %v2008, 0.17677669
    %v2014 = vmul.f32 %v2011, 0.17677669
    %v2015 = vadd.f32 %v2013, %v280
    %v2016 = vadd.f32 %v2014, %v281
    %v2017 = vsel %vm335, %v2015, -inf
    %2018 = vmax.xlane.f32.xlu0 %v2017
    %v2019 = vpop.xlane.xlu0 %2018
    %v2020 = vsel %vm335, %v2016, -inf
    %2021 = vmax.xlane.f32.xlu0 %v2020
    %v2022 = vpop.xlane.xlu0 %2021
    %v2023 = vsub.f32 %v2015, %v2019
    %v2024 = vsub.f32 %v2016, %v2022
    %v2025 = vmul.f32 %v2023, 1.442695
    %v2026 = vpow.pop %v2025
    %v2027 = vmul.f32 %v2024, 1.442695
    %v2028 = vpow.pop %v2027
    %v2029 = vsel %vm335, %v2026, 0.0
    %2030 = vadd.xlane.f32.xlu0 %v2029
    %v2031 = vpop.xlane.xlu0 %2030
    %v2032 = vsel %vm335, %v2028, 0.0
    %2033 = vadd.xlane.f32.xlu0 %v2032
    %v2034 = vpop.xlane.xlu0 %2033
    %v2035 = vrcp.pop %v2031
    %v2036 = vmul.f32 %v2031, %v2035
    %v2037 = vsub.f32 1.0, %v2036
    %v2038 = vmul.f32 %v2035, %v2037
    %v2039 = vadd.f32 %v2035, %v2038
    %vm2040 = vweird.f32 %v2031
    %vm2041 = vweird.f32 %v2035
    %vm2042 = vmor %vm2040, %vm2041
    %v2043 = vsel %vm2042, %v2035, %v2039
    %v2044 = vand.u32 2147483647, %v2031
    %vm2045 = vcmp.eq.f32.partialorder %v2044, 8.507059e+37
    %v2046 = vand.u32 %v2031, 2147483648
    %v2047 = vor.u32 1.1754944e-38, %v2046
    %v2048 = vsel %vm2045, %v2047, %v2043
    %v2049 = vmul.f32 %v2026, %v2048
    %v2050 = vrcp.pop %v2034
    %v2051 = vmul.f32 %v2034, %v2050
    %v2052 = vsub.f32 1.0, %v2051
    %v2053 = vmul.f32 %v2050, %v2052
    %v2054 = vadd.f32 %v2050, %v2053
    %vm2055 = vweird.f32 %v2034
    %vm2056 = vweird.f32 %v2050
    %vm2057 = vmor %vm2055, %vm2056
    %v2058 = vsel %vm2057, %v2050, %v2054
    %v2059 = vand.u32 2147483647, %v2034
    %vm2060 = vcmp.eq.f32.partialorder %v2059, 8.507059e+37
    %v2061 = vand.u32 %v2034, 2147483648
    %v2062 = vor.u32 1.1754944e-38, %v2061
    %v2063 = vsel %vm2060, %v2062, %v2058
    %v2064 = vmul.f32 %v2028, %v2063
    %2065 = vmatpush.msra.mxu0 0.0
    %2066 = vmatpush.msra.mxu0 0.0
    %2067 = vmatpush.msra.mxu0 0.0
    %2068 = vmatpush.msra.mxu0 0.0
    %2069 = vmatpush.msra.mxu0 0.0
    %2070 = vmatpush.msra.mxu0 0.0
    %2071 = vmatpush.msra.mxu0 0.0
    %2072 = vmatpush.msra.mxu0 0.0
    %2073 = vmatpush.msra.mxu0 0.0
    %2074 = vmatpush.msra.mxu0 0.0
    %2075 = vmatpush.msra.mxu0 0.0
    %2076 = vmatpush.msra.mxu0 0.0
    %2077 = vmatpush.msra.mxu0 0.0
    %2078 = vmatpush.msra.mxu0 0.0
    %2079 = vmatpush.msra.mxu0 %v2064
    %2080 = vmatpush.msra.mxu0 %v2049
    %2081 = vmatmul.f32.gmra.mxu0 %v385
    %v2082 = vpop.f32.mrf.mxu0
    %v2083 = vadd.f32 0.0, %v2082
    %2084 = vdwg.mxu0
    %v2086 = vsel %vm335, %v2083, 0
    %2088 = vmatpush.msra.mxu0 0.0
    %2089 = vmatpush.msra.mxu0 0.0
    %2090 = vmatpush.msra.mxu0 0.0
    %2091 = vmatpush.msra.mxu0 0.0
    %2092 = vmatpush.msra.mxu0 0.0
    %2093 = vmatpush.msra.mxu0 0.0
    %2094 = vmatpush.msra.mxu0 0.0
    %2095 = vmatpush.msra.mxu0 0.0
    %2096 = vmatpush.msra.mxu0 0.0
    %2097 = vmatpush.msra.mxu0 0.0
    %2098 = vmatpush.msra.mxu0 0.0
    %2099 = vmatpush.msra.mxu0 0.0
    %2100 = vmatpush.msra.mxu0 0.0
    %2101 = vmatpush.msra.mxu0 0.0
    %2102 = vmatpush.msra.mxu0 %v285
    %2103 = vmatpush.msra.mxu0 %v283
    %2104 = vmatmul.f32.gmra.mxu0 %v2086
    %v2105 = vpop.f32.mrf.mxu0
    %v2106 = vadd.f32 0.0, %v2105
    %2107 = vdwg.mxu0
    %2108 = vmatpush.msra.mxu0 0.0
    %2109 = vmatpush.msra.mxu0 0.0
    %2110 = vmatpush.msra.mxu0 0.0
    %2111 = vmatpush.msra.mxu0 0.0
    %2112 = vmatpush.msra.mxu0 0.0
    %2113 = vmatpush.msra.mxu0 0.0
    %2114 = vmatpush.msra.mxu0 0.0
    %2115 = vmatpush.msra.mxu0 0.0
    %2116 = vmatpush.msra.mxu0 0.0
    %2117 = vmatpush.msra.mxu0 0.0
    %2118 = vmatpush.msra.mxu0 0.0
    %2119 = vmatpush.msra.mxu0 0.0
    %2120 = vmatpush.msra.mxu0 0.0
    %2121 = vmatpush.msra.mxu0 0.0
    %2122 = vmatpush.msra.mxu0 %v286
    %2123 = vmatpush.msra.mxu0 %v284
    %2124 = vmatmul.f32.gmra.mxu0 %v2086
    %v2125 = vpop.f32.mrf.mxu0
    %v2126 = vadd.f32 0.0, %v2125
    %2127 = vdwg.mxu0
    %v2130 = vrot.slane %v2126, 4
    %v2131 = vsel %vm453, %v2106, %v2130
    %v2133 = vmul.f32 %v287, %v2131
    %2135 = vst [vmem:[#allocation1] ss:$2 sm:$0xff] %v2133
    %v2136 = vld.sshfl [vmem:[#allocation1] sm:$0xff pattern:$0x75316420]
    %v2137 = vld.sshfl [vmem:[#allocation1 + $0x8] sm:$0xff pattern:$0x75316420]
    %v2140 = vsel %vm453, %v2136, 0.0
    %v2141 = vrot.slane %v2140, 4
    %v2142 = vadd.f32 %v2140, %v2141
    %v2143 = vrot.slane %v2142, 2
    %v2144 = vadd.f32 %v2142, %v2143
    %v2145 = vrot.slane %v2144, 1
    %v2146 = vadd.f32 %v2144, %v2145
    %v2147 = vsel %vm453, %v2137, 0.0
    %v2148 = vrot.slane %v2147, 4
    %v2149 = vadd.f32 %v2147, %v2148
    %v2150 = vrot.slane %v2149, 2
    %v2151 = vadd.f32 %v2149, %v2150
    %v2152 = vrot.slane %v2151, 1
    %v2153 = vadd.f32 %v2151, %v2152
    %v2156 = vrot.slane %v2153, 7
    %v2157 = vsel %vm480, %v2146, %v2156
    %s2159 = scalar_lea.vmem [#allocation14], 10
    %2160 = vst.msk [vmem:[%s2159] sm:$0x3] %vm486, %v2157
    %2161 = vrot.lane.b32.xlu0 %v220, 64
    %v2162 = vpop.permute.xlu0 %2161
    %2163 = vrot.lane.b32.xlu0 %v223, 64
    %v2164 = vpop.permute.xlu0 %2163
    %2165 = vrot.lane.b32.xlu0 %v269, 64
    %v2166 = vpop.permute.xlu0 %2165
    %2167 = vrot.lane.b32.xlu0 %v272, 64
    %v2168 = vpop.permute.xlu0 %2167
    %v2169 = vsel %vm165, %v2162, 0
    %v2171 = vsel %vm165, %v2164, 0
    %v2173 = vsel %vm165, %v2166, 0
    %v2175 = vsel %vm165, %v2168, 0
    %2177 = vmatpush.xpose.msra.mxu0 0.0
    %2178 = vmatpush.xpose.msra.mxu0 0.0
    %2179 = vmatpush.xpose.msra.mxu0 0.0
    %2180 = vmatpush.xpose.msra.mxu0 0.0
    %2181 = vmatpush.xpose.msra.mxu0 0.0
    %2182 = vmatpush.xpose.msra.mxu0 0.0
    %2183 = vmatpush.xpose.msra.mxu0 0.0
    %2184 = vmatpush.xpose.msra.mxu0 0.0
    %2185 = vmatpush.xpose.msra.mxu0 0.0
    %2186 = vmatpush.xpose.msra.mxu0 0.0
    %2187 = vmatpush.xpose.msra.mxu0 0.0
    %2188 = vmatpush.xpose.msra.mxu0 0.0
    %2189 = vmatpush.xpose.msra.mxu0 0.0
    %2190 = vmatpush.xpose.msra.mxu0 0.0
    %2191 = vmatpush.xpose.msra.mxu0 %v2175
    %2192 = vmatpush.xpose.msra.mxu0 %v2173
    %2193 = vmatmul.f32.gmra.mxu0 %v2169
    %v2194 = vpop.f32.mrf.mxu0
    %v2195 = vadd.f32 0.0, %v2194
    %2196 = vmatmul.f32.gmra.mxu0 %v2171
    %v2197 = vpop.f32.mrf.mxu0
    %v2198 = vadd.f32 0.0, %v2197
    %2199 = vdwg.mxu0
    %v2200 = vmul.f32 %v2195, 0.17677669
    %v2201 = vmul.f32 %v2198, 0.17677669
    %v2202 = vadd.f32 %v2200, %v288
    %v2203 = vadd.f32 %v2201, %v289
    %v2204 = vsel %vm335, %v2202, -inf
    %2205 = vmax.xlane.f32.xlu0 %v2204
    %v2206 = vpop.xlane.xlu0 %2205
    %v2207 = vsel %vm335, %v2203, -inf
    %2208 = vmax.xlane.f32.xlu0 %v2207
    %v2209 = vpop.xlane.xlu0 %2208
    %v2210 = vsub.f32 %v2202, %v2206
    %v2211 = vsub.f32 %v2203, %v2209
    %v2212 = vmul.f32 %v2210, 1.442695
    %v2213 = vpow.pop %v2212
    %v2214 = vmul.f32 %v2211, 1.442695
    %v2215 = vpow.pop %v2214
    %v2216 = vsel %vm335, %v2213, 0.0
    %2217 = vadd.xlane.f32.xlu0 %v2216
    %v2218 = vpop.xlane.xlu0 %2217
    %v2219 = vsel %vm335, %v2215, 0.0
    %2220 = vadd.xlane.f32.xlu0 %v2219
    %v2221 = vpop.xlane.xlu0 %2220
    %v2222 = vrcp.pop %v2218
    %v2223 = vmul.f32 %v2218, %v2222
    %v2224 = vsub.f32 1.0, %v2223
    %v2225 = vmul.f32 %v2222, %v2224
    %v2226 = vadd.f32 %v2222, %v2225
    %vm2227 = vweird.f32 %v2218
    %vm2228 = vweird.f32 %v2222
    %vm2229 = vmor %vm2227, %vm2228
    %v2230 = vsel %vm2229, %v2222, %v2226
    %v2231 = vand.u32 2147483647, %v2218
    %vm2232 = vcmp.eq.f32.partialorder %v2231, 8.507059e+37
    %v2233 = vand.u32 %v2218, 2147483648
    %v2234 = vor.u32 1.1754944e-38, %v2233
    %v2235 = vsel %vm2232, %v2234, %v2230
    %v2236 = vmul.f32 %v2213, %v2235
    %v2237 = vrcp.pop %v2221
    %v2238 = vmul.f32 %v2221, %v2237
    %v2239 = vsub.f32 1.0, %v2238
    %v2240 = vmul.f32 %v2237, %v2239
    %v2241 = vadd.f32 %v2237, %v2240
    %vm2242 = vweird.f32 %v2221
    %vm2243 = vweird.f32 %v2237
    %vm2244 = vmor %vm2242, %vm2243
    %v2245 = vsel %vm2244, %v2237, %v2241
    %v2246 = vand.u32 2147483647, %v2221
    %vm2247 = vcmp.eq.f32.partialorder %v2246, 8.507059e+37
    %v2248 = vand.u32 %v2221, 2147483648
    %v2249 = vor.u32 1.1754944e-38, %v2248
    %v2250 = vsel %vm2247, %v2249, %v2245
    %v2251 = vmul.f32 %v2215, %v2250
    %2252 = vmatpush.msra.mxu0 0.0
    %2253 = vmatpush.msra.mxu0 0.0
    %2254 = vmatpush.msra.mxu0 0.0
    %2255 = vmatpush.msra.mxu0 0.0
    %2256 = vmatpush.msra.mxu0 0.0
    %2257 = vmatpush.msra.mxu0 0.0
    %2258 = vmatpush.msra.mxu0 0.0
    %2259 = vmatpush.msra.mxu0 0.0
    %2260 = vmatpush.msra.mxu0 0.0
    %2261 = vmatpush.msra.mxu0 0.0
    %2262 = vmatpush.msra.mxu0 0.0
    %2263 = vmatpush.msra.mxu0 0.0
    %2264 = vmatpush.msra.mxu0 0.0
    %2265 = vmatpush.msra.mxu0 0.0
    %2266 = vmatpush.msra.mxu0 %v2251
    %2267 = vmatpush.msra.mxu0 %v2236
    %2268 = vmatmul.f32.gmra.mxu0 %v759
    %v2269 = vpop.f32.mrf.mxu0
    %v2270 = vadd.f32 0.0, %v2269
    %2271 = vdwg.mxu0
    %v2273 = vsel %vm335, %v2270, 0
    %2275 = vmatpush.msra.mxu0 0.0
    %2276 = vmatpush.msra.mxu0 0.0
    %2277 = vmatpush.msra.mxu0 0.0
    %2278 = vmatpush.msra.mxu0 0.0
    %2279 = vmatpush.msra.mxu0 0.0
    %2280 = vmatpush.msra.mxu0 0.0
    %2281 = vmatpush.msra.mxu0 0.0
    %2282 = vmatpush.msra.mxu0 0.0
    %2283 = vmatpush.msra.mxu0 0.0
    %2284 = vmatpush.msra.mxu0 0.0
    %2285 = vmatpush.msra.mxu0 0.0
    %2286 = vmatpush.msra.mxu0 0.0
    %2287 = vmatpush.msra.mxu0 0.0
    %2288 = vmatpush.msra.mxu0 0.0
    %2289 = vmatpush.msra.mxu0 %v293
    %2290 = vmatpush.msra.mxu0 %v291
    %2291 = vmatmul.f32.gmra.mxu0 %v2273
    %v2292 = vpop.f32.mrf.mxu0
    %v2293 = vadd.f32 0.0, %v2292
    %2294 = vdwg.mxu0
    %2295 = vmatpush.msra.mxu0 0.0
    %2296 = vmatpush.msra.mxu0 0.0
    %2297 = vmatpush.msra.mxu0 0.0
    %2298 = vmatpush.msra.mxu0 0.0
    %2299 = vmatpush.msra.mxu0 0.0
    %2300 = vmatpush.msra.mxu0 0.0
    %2301 = vmatpush.msra.mxu0 0.0
    %2302 = vmatpush.msra.mxu0 0.0
    %2303 = vmatpush.msra.mxu0 0.0
    %2304 = vmatpush.msra.mxu0 0.0
    %2305 = vmatpush.msra.mxu0 0.0
    %2306 = vmatpush.msra.mxu0 0.0
    %2307 = vmatpush.msra.mxu0 0.0
    %2308 = vmatpush.msra.mxu0 0.0
    %2309 = vmatpush.msra.mxu0 %v294
    %2310 = vmatpush.msra.mxu0 %v292
    %2311 = vmatmul.f32.gmra.mxu0 %v2273
    %v2312 = vpop.f32.mrf.mxu0
    %v2313 = vadd.f32 0.0, %v2312
    %2314 = vdwg.mxu0
    %v2317 = vrot.slane %v2313, 4
    %v2318 = vsel %vm453, %v2293, %v2317
    %v2320 = vmul.f32 %v295, %v2318
    %2322 = vst [vmem:[#allocation1] ss:$2 sm:$0xff] %v2320
    %v2323 = vld.sshfl [vmem:[#allocation1] sm:$0xff pattern:$0x75316420]
    %v2324 = vld.sshfl [vmem:[#allocation1 + $0x8] sm:$0xff pattern:$0x75316420]
    %v2327 = vsel %vm453, %v2323, 0.0
    %v2328 = vrot.slane %v2327, 4
    %v2329 = vadd.f32 %v2327, %v2328
    %v2330 = vrot.slane %v2329, 2
    %v2331 = vadd.f32 %v2329, %v2330
    %v2332 = vrot.slane %v2331, 1
    %v2333 = vadd.f32 %v2331, %v2332
    %v2334 = vsel %vm453, %v2324, 0.0
    %v2335 = vrot.slane %v2334, 4
    %v2336 = vadd.f32 %v2334, %v2335
    %v2337 = vrot.slane %v2336, 2
    %v2338 = vadd.f32 %v2336, %v2337
    %v2339 = vrot.slane %v2338, 1
    %v2340 = vadd.f32 %v2338, %v2339
    %v2343 = vrot.slane %v2340, 7
    %v2344 = vsel %vm480, %v2333, %v2343
    %s2346 = scalar_lea.vmem [#allocation15], 8
    %2347 = vst.msk [vmem:[%s2346] sm:$0x3] %vm486, %v2344
    %2348 = vrot.lane.b32.xlu0 %v226, 64
    %v2349 = vpop.permute.xlu0 %2348
    %2350 = vrot.lane.b32.xlu0 %v229, 64
    %v2351 = vpop.permute.xlu0 %2350
    %2352 = vrot.lane.b32.xlu0 %v275, 64
    %v2353 = vpop.permute.xlu0 %2352
    %2354 = vrot.lane.b32.xlu0 %v278, 64
    %v2355 = vpop.permute.xlu0 %2354
    %v2356 = vsel %vm165, %v2349, 0
    %v2358 = vsel %vm165, %v2351, 0
    %v2360 = vsel %vm165, %v2353, 0
    %v2362 = vsel %vm165, %v2355, 0
    %2364 = vmatpush.xpose.msra.mxu0 0.0
    %2365 = vmatpush.xpose.msra.mxu0 0.0
    %2366 = vmatpush.xpose.msra.mxu0 0.0
    %2367 = vmatpush.xpose.msra.mxu0 0.0
    %2368 = vmatpush.xpose.msra.mxu0 0.0
    %2369 = vmatpush.xpose.msra.mxu0 0.0
    %2370 = vmatpush.xpose.msra.mxu0 0.0
    %2371 = vmatpush.xpose.msra.mxu0 0.0
    %2372 = vmatpush.xpose.msra.mxu0 0.0
    %2373 = vmatpush.xpose.msra.mxu0 0.0
    %2374 = vmatpush.xpose.msra.mxu0 0.0
    %2375 = vmatpush.xpose.msra.mxu0 0.0
    %2376 = vmatpush.xpose.msra.mxu0 0.0
    %2377 = vmatpush.xpose.msra.mxu0 0.0
    %2378 = vmatpush.xpose.msra.mxu0 %v2362
    %2379 = vmatpush.xpose.msra.mxu0 %v2360
    %2380 = vmatmul.f32.gmra.mxu0 %v2356
    %v2381 = vpop.f32.mrf.mxu0
    %v2382 = vadd.f32 0.0, %v2381
    %2383 = vmatmul.f32.gmra.mxu0 %v2358
    %v2384 = vpop.f32.mrf.mxu0
    %v2385 = vadd.f32 0.0, %v2384
    %2386 = vdwg.mxu0
    %v2387 = vmul.f32 %v2382, 0.17677669
    %v2388 = vmul.f32 %v2385, 0.17677669
    %v2389 = vadd.f32 %v2387, %v288
    %v2390 = vadd.f32 %v2388, %v289
    %v2391 = vsel %vm335, %v2389, -inf
    %2392 = vmax.xlane.f32.xlu0 %v2391
    %v2393 = vpop.xlane.xlu0 %2392
    %v2394 = vsel %vm335, %v2390, -inf
    %2395 = vmax.xlane.f32.xlu0 %v2394
    %v2396 = vpop.xlane.xlu0 %2395
    %v2397 = vsub.f32 %v2389, %v2393
    %v2398 = vsub.f32 %v2390, %v2396
    %v2399 = vmul.f32 %v2397, 1.442695
    %v2400 = vpow.pop %v2399
    %v2401 = vmul.f32 %v2398, 1.442695
    %v2402 = vpow.pop %v2401
    %v2403 = vsel %vm335, %v2400, 0.0
    %2404 = vadd.xlane.f32.xlu0 %v2403
    %v2405 = vpop.xlane.xlu0 %2404
    %v2406 = vsel %vm335, %v2402, 0.0
    %2407 = vadd.xlane.f32.xlu0 %v2406
    %v2408 = vpop.xlane.xlu0 %2407
    %v2409 = vrcp.pop %v2405
    %v2410 = vmul.f32 %v2405, %v2409
    %v2411 = vsub.f32 1.0, %v2410
    %v2412 = vmul.f32 %v2409, %v2411
    %v2413 = vadd.f32 %v2409, %v2412
    %vm2414 = vweird.f32 %v2405
    %vm2415 = vweird.f32 %v2409
    %vm2416 = vmor %vm2414, %vm2415
    %v2417 = vsel %vm2416, %v2409, %v2413
    %v2418 = vand.u32 2147483647, %v2405
    %vm2419 = vcmp.eq.f32.partialorder %v2418, 8.507059e+37
    %v2420 = vand.u32 %v2405, 2147483648
    %v2421 = vor.u32 1.1754944e-38, %v2420
    %v2422 = vsel %vm2419, %v2421, %v2417
    %v2423 = vmul.f32 %v2400, %v2422
    %v2424 = vrcp.pop %v2408
    %v2425 = vmul.f32 %v2408, %v2424
    %v2426 = vsub.f32 1.0, %v2425
    %v2427 = vmul.f32 %v2424, %v2426
    %v2428 = vadd.f32 %v2424, %v2427
    %vm2429 = vweird.f32 %v2408
    %vm2430 = vweird.f32 %v2424
    %vm2431 = vmor %vm2429, %vm2430
    %v2432 = vsel %vm2431, %v2424, %v2428
    %v2433 = vand.u32 2147483647, %v2408
    %vm2434 = vcmp.eq.f32.partialorder %v2433, 8.507059e+37
    %v2435 = vand.u32 %v2408, 2147483648
    %v2436 = vor.u32 1.1754944e-38, %v2435
    %v2437 = vsel %vm2434, %v2436, %v2432
    %v2438 = vmul.f32 %v2402, %v2437
    %2439 = vmatpush.msra.mxu0 0.0
    %2440 = vmatpush.msra.mxu0 0.0
    %2441 = vmatpush.msra.mxu0 0.0
    %2442 = vmatpush.msra.mxu0 0.0
    %2443 = vmatpush.msra.mxu0 0.0
    %2444 = vmatpush.msra.mxu0 0.0
    %2445 = vmatpush.msra.mxu0 0.0
    %2446 = vmatpush.msra.mxu0 0.0
    %2447 = vmatpush.msra.mxu0 0.0
    %2448 = vmatpush.msra.mxu0 0.0
    %2449 = vmatpush.msra.mxu0 0.0
    %2450 = vmatpush.msra.mxu0 0.0
    %2451 = vmatpush.msra.mxu0 0.0
    %2452 = vmatpush.msra.mxu0 0.0
    %2453 = vmatpush.msra.mxu0 %v2438
    %2454 = vmatpush.msra.mxu0 %v2423
    %2455 = vmatmul.f32.gmra.mxu0 %v759
    %v2456 = vpop.f32.mrf.mxu0
    %v2457 = vadd.f32 0.0, %v2456
    %2458 = vdwg.mxu0
    %v2460 = vsel %vm335, %v2457, 0
    %2462 = vmatpush.msra.mxu0 0.0
    %2463 = vmatpush.msra.mxu0 0.0
    %2464 = vmatpush.msra.mxu0 0.0
    %2465 = vmatpush.msra.mxu0 0.0
    %2466 = vmatpush.msra.mxu0 0.0
    %2467 = vmatpush.msra.mxu0 0.0
    %2468 = vmatpush.msra.mxu0 0.0
    %2469 = vmatpush.msra.mxu0 0.0
    %2470 = vmatpush.msra.mxu0 0.0
    %2471 = vmatpush.msra.mxu0 0.0
    %2472 = vmatpush.msra.mxu0 0.0
    %2473 = vmatpush.msra.mxu0 0.0
    %2474 = vmatpush.msra.mxu0 0.0
    %2475 = vmatpush.msra.mxu0 0.0
    %2476 = vmatpush.msra.mxu0 %v293
    %2477 = vmatpush.msra.mxu0 %v291
    %2478 = vmatmul.f32.gmra.mxu0 %v2460
    %v2479 = vpop.f32.mrf.mxu0
    %v2480 = vadd.f32 0.0, %v2479
    %2481 = vdwg.mxu0
    %2482 = vmatpush.msra.mxu0 0.0
    %2483 = vmatpush.msra.mxu0 0.0
    %2484 = vmatpush.msra.mxu0 0.0
    %2485 = vmatpush.msra.mxu0 0.0
    %2486 = vmatpush.msra.mxu0 0.0
    %2487 = vmatpush.msra.mxu0 0.0
    %2488 = vmatpush.msra.mxu0 0.0
    %2489 = vmatpush.msra.mxu0 0.0
    %2490 = vmatpush.msra.mxu0 0.0
    %2491 = vmatpush.msra.mxu0 0.0
    %2492 = vmatpush.msra.mxu0 0.0
    %2493 = vmatpush.msra.mxu0 0.0
    %2494 = vmatpush.msra.mxu0 0.0
    %2495 = vmatpush.msra.mxu0 0.0
    %2496 = vmatpush.msra.mxu0 %v294
    %2497 = vmatpush.msra.mxu0 %v292
    %2498 = vmatmul.f32.gmra.mxu0 %v2460
    %v2499 = vpop.f32.mrf.mxu0
    %v2500 = vadd.f32 0.0, %v2499
    %2501 = vdwg.mxu0
    %v2504 = vrot.slane %v2500, 4
    %v2505 = vsel %vm453, %v2480, %v2504
    %v2507 = vmul.f32 %v295, %v2505
    %2509 = vst [vmem:[#allocation1] ss:$2 sm:$0xff] %v2507
    %v2510 = vld.sshfl [vmem:[#allocation1] sm:$0xff pattern:$0x75316420]
    %v2511 = vld.sshfl [vmem:[#allocation1 + $0x8] sm:$0xff pattern:$0x75316420]
    %v2514 = vsel %vm453, %v2510, 0.0
    %v2515 = vrot.slane %v2514, 4
    %v2516 = vadd.f32 %v2514, %v2515
    %v2517 = vrot.slane %v2516, 2
    %v2518 = vadd.f32 %v2516, %v2517
    %v2519 = vrot.slane %v2518, 1
    %v2520 = vadd.f32 %v2518, %v2519
    %v2521 = vsel %vm453, %v2511, 0.0
    %v2522 = vrot.slane %v2521, 4
    %v2523 = vadd.f32 %v2521, %v2522
    %v2524 = vrot.slane %v2523, 2
    %v2525 = vadd.f32 %v2523, %v2524
    %v2526 = vrot.slane %v2525, 1
    %v2527 = vadd.f32 %v2525, %v2526
    %v2530 = vrot.slane %v2527, 7
    %v2531 = vsel %vm480, %v2520, %v2530
    %s2533 = scalar_lea.vmem [#allocation15], 10
    %2534 = vst.msk [vmem:[%s2533] sm:$0x3] %vm486, %v2531
    // Predicated region
    $region82: #{tpu_custom_call.1} parent=1 // pred_check
      _
    $region83: #{tpu_custom_call.1} parent=1 // pred_check_branch
      %2536 = sbr.rel (0) target = $region85
    $region84: #{tpu_custom_call.1} parent=1 // pred_region
      %2538 = vsyncadd [#allocation4], 0
      %s2539 = sshll.u32 [#allocation14], 4
      %s2540 = int_to_ptr.vmem [resolvable:$true] %s2539
      %s2541 = sshll.u32 %s13, 4
      %s2542 = int_to_ptr.hbm [resolvable:$true] %s2541
      %2547 = dma.vmem_to_hbm [thread:$0]  %s2540, 192, %s2542, [#allocation4], 32, 32, 2
    $region85: #{tpu_custom_call.1} parent=1 // pred_fallthru
      _
    // Predicated region
    $region86: #{tpu_custom_call.1} parent=1 // pred_check
      _
    $region87: #{tpu_custom_call.1} parent=1 // pred_check_branch
      %2549 = sbr.rel (0) target = $region89
    $region88: #{tpu_custom_call.1} parent=1 // pred_region
      %2551 = vsyncadd [#allocation16], 0
      %s2552 = sshll.u32 [#allocation15], 4
      %s2553 = int_to_ptr.vmem [resolvable:$true] %s2552
      %s2554 = sshll.u32 %s14, 4
      %s2555 = int_to_ptr.hbm [resolvable:$true] %s2554
      %2560 = dma.vmem_to_hbm [thread:$0]  %s2553, 192, %s2555, [#allocation16], 32, 32, 2
    $region89: #{tpu_custom_call.1} parent=1 // pred_fallthru
      _
    // Predicated region
    $region90: #{tpu_custom_call.1} parent=1 // pred_check
      _
    $region91: #{tpu_custom_call.1} parent=1 // pred_check_branch
      %2562 = sbr.rel (0) target = $region93
    $region92: #{tpu_custom_call.1} parent=1 // pred_region
      %2564 = dma.done [#allocation4], 192
    $region93: #{tpu_custom_call.1} parent=1 // pred_fallthru
      _
    // Predicated region
    $region94: #{tpu_custom_call.1} parent=1 // pred_check
      _
    $region95: #{tpu_custom_call.1} parent=1 // pred_check_branch
      %2566 = sbr.rel (0) target = $region97
    $region96: #{tpu_custom_call.1} parent=1 // pred_region
      %2568 = dma.done [#allocation16], 192
    $region97: #{tpu_custom_call.1} parent=1 // pred_fallthru
      _
    %2569 = vsyncpa [#allocation3], 1
    %2570 = vsyncpa [#allocation6], 1
    %2571 = vsyncpa [#allocation9], 1
    %2572 = vsyncpa [#allocation12], 1
    %2573 = vsyncpa [#allocation4], 1
    %2574 = vsyncpa [#allocation16], 1

</llo_original>
